<compile_context>
chip_gen: v7x
topology: tpu7x:2x2x1
jax: 0.10.0
libtpu: 0.0.40
codegen_flags: <defaults>
</compile_context>

<pallas_src>
import functools
import math

import jax
import jax.numpy as jnp
from jax.experimental import pallas as pl
from jax.experimental.pallas import tpu as pltpu

_NEG_INF = -1e30
_LN_EPS = 1e-6


def _layernorm(x, gamma, beta, eps=_LN_EPS):
    mean = jnp.mean(x, axis=-1, keepdims=True)
    var = jnp.mean((x - mean) ** 2, axis=-1, keepdims=True)
    return (x - mean) * jax.lax.rsqrt(var + eps) * gamma + beta


def _largest_divisor_leq(n, cap):
    for t in range(min(cap, n), 0, -1):
        if n % t == 0:
            return t
    return 1


def _choose_tile(dim, cap, mult):
    # Largest divisor of `dim` that is <= cap and a multiple of `mult` (or the full dim).
    for t in range(min(cap, dim), 0, -1):
        if dim % t == 0 and (t % mult == 0 or t == dim):
            return t
    return dim


def _vmem_limit_bytes():
    cap = 64 * 1024 * 1024  # conservative fallback (v7x-sized)
    try:
        info = pltpu.get_tpu_info()
        cap = int(getattr(info, "vmem_capacity_bytes", cap))
    except Exception:
        pass
    return int(min(max(cap - 8 * 1024 * 1024, 32 * 1024 * 1024), 100 * 1024 * 1024))


# --------------------- Kernel A: LN1 + QKV projection (head-major) ---------------------
def ln_qkv_kernel(x_ref, g_ref, b_ref, wq_ref, wk_ref, wv_ref,
                  bq_ref, bk_ref, bv_ref, q_ref, k_ref, v_ref, nrm_ref):
    @pl.when(pl.program_id(2) == 0)
    def _():
        nrm_ref[...] = _layernorm(x_ref[0], g_ref[...], b_ref[...]).astype(nrm_ref.dtype)

    n = nrm_ref[...]                                   # (TQ, H) bf16, reused across head tiles
    th = wq_ref.shape[0]
    for h in range(th):                                # static unroll: plain 2-D MXU matmuls
        q_ref[0, h] = (jnp.dot(n, wq_ref[h], preferred_element_type=jnp.float32)
                       + bq_ref[h]).astype(q_ref.dtype)
        k_ref[0, h] = (jnp.dot(n, wk_ref[h], preferred_element_type=jnp.float32)
                       + bk_ref[h]).astype(k_ref.dtype)
        v_ref[0, h] = (jnp.dot(n, wv_ref[h], preferred_element_type=jnp.float32)
                       + bv_ref[h]).astype(v_ref.dtype)


# ------------------ Kernel B: flash attention + out-proj + residual -------------------
def flash_attn_kernel(q_ref, k_ref, v_ref, x_ref, wo_ref, bo_ref, o_ref,
                      m_ref, l_ref, acc_ref, *, tq, tk):
    qi = pl.program_id(1)
    ki = pl.program_id(2)

    @pl.when(ki == 0)
    def _():
        m_ref[...] = jnp.full_like(m_ref, _NEG_INF)
        l_ref[...] = jnp.zeros_like(l_ref)
        acc_ref[...] = jnp.zeros_like(acc_ref)

    def scores():
        # softmax scale already folded into the Q projection weights
        return jnp.einsum('hqd,hkd->hqk', q_ref[0], k_ref[0],
                          preferred_element_type=jnp.float32)

    def online_update(s):
        m_prev = m_ref[...]
        m_new = jnp.maximum(m_prev, jnp.max(s, axis=-1, keepdims=True))
        alpha = jnp.exp(m_prev - m_new)
        p = jnp.exp(s - m_new)
        l_ref[...] = alpha * l_ref[...] + jnp.sum(p, axis=-1, keepdims=True)
        acc_ref[...] = alpha * acc_ref[...] + jnp.einsum(
            'hqk,hkd->hqd', p.astype(jnp.bfloat16), v_ref[0],
            preferred_element_type=jnp.float32)
        m_ref[...] = m_new

    @pl.when(ki < qi)            # fully-visible KV block: no masking work at all
    def _():
        online_update(scores())

    @pl.when(ki == qi)           # diagonal block: apply the causal mask (TK == TQ)
    def _():
        rows = jax.lax.broadcasted_iota(jnp.int32, (tq, tk), 0)
        cols = jax.lax.broadcasted_iota(jnp.int32, (tq, tk), 1)
        s = jnp.where((cols > rows)[None, :, :], _NEG_INF, scores())
        online_update(s)

    # Blocks with ki > qi are skipped entirely (and their K/V DMA is elided via the
    # clamped index_map in the wrapper).

    @pl.when(ki == pl.num_programs(2) - 1)
    def _():
        nh = acc_ref.shape[0]
        ctx = acc_ref[...] * pl.reciprocal(l_ref[...], approx=True)    # (nh, TQ, hd) f32
        attn = bo_ref[...].astype(jnp.float32)                         # (1, H)
        # Accumulate the output projection head by head: no (nh, TQ, H) intermediate,
        # each step is a plain (TQ, hd) @ (hd, H) MXU matmul.
        for h in range(nh):
            attn = attn + jnp.dot(ctx[h].astype(jnp.bfloat16), wo_ref[h],
                                  preferred_element_type=jnp.float32)
        o_ref[0] = (x_ref[0] + attn).astype(o_ref.dtype)


# ------------ Kernel C: LN2 + MLP (tiled over 4H) + residual (+ final LN) --------------
def mlp_kernel(x_ref, g2_ref, b2_ref, w1_ref, bm1_ref, w2_ref, bm2_ref,
               gf_ref, bf_ref, o_ref, nrm_ref, acc_ref, *, apply_final_norm):
    n = pl.program_id(1)

    @pl.when(n == 0)
    def _():
        nrm_ref[...] = _layernorm(x_ref[...], g2_ref[...], b2_ref[...]).astype(nrm_ref.dtype)
        acc_ref[...] = jnp.zeros_like(acc_ref)

    h = jnp.dot(nrm_ref[...], w1_ref[...],
                preferred_element_type=jnp.float32) + bm1_ref[...]        # (TM, TN) f32
    h = 0.5 * h * (1.0 + jax.lax.erf(h * (1.0 / math.sqrt(2.0))))         # exact GELU
    acc_ref[...] += jnp.dot(h.astype(jnp.bfloat16), w2_ref[...],
                            preferred_element_type=jnp.float32)           # (TM, H) f32

    @pl.when(n == pl.num_programs(1) - 1)
    def _():
        out = x_ref[...] + acc_ref[...] + bm2_ref[...]
        if apply_final_norm:
            out = _layernorm(out, gf_ref[...], bf_ref[...])
        o_ref[...] = out.astype(o_ref.dtype)


# ------------------------------------ wrappers ------------------------------------
def _prepare_layer_params(p, num_heads):
    g1, b1, wqkv, bqkv, wo, bo, g2, b2, w1, bm1, w2, bm2 = p
    H = g1.shape[0]
    hd = H // num_heads
    scale = 1.0 / math.sqrt(hd)
    row = lambda a: a.reshape(1, -1).astype(jnp.float32)
    # (H, 3H) -> per-part, head-major (nh, H, hd); fold the softmax scale into Q.
    wq = wqkv[:, :H].reshape(H, num_heads, hd).transpose(1, 0, 2) * scale
    wk = wqkv[:, H:2 * H].reshape(H, num_heads, hd).transpose(1, 0, 2)
    wv = wqkv[:, 2 * H:].reshape(H, num_heads, hd).transpose(1, 0, 2)
    bq = (bqkv[:H] * scale).reshape(num_heads, 1, hd)
    bk = bqkv[H:2 * H].reshape(num_heads, 1, hd)
    bv = bqkv[2 * H:].reshape(num_heads, 1, hd)
    return dict(
        g1=row(g1), b1=row(b1),
        wq=wq.astype(jnp.bfloat16), wk=wk.astype(jnp.bfloat16), wv=wv.astype(jnp.bfloat16),
        bq=bq.astype(jnp.float32), bk=bk.astype(jnp.float32), bv=bv.astype(jnp.float32),
        wo_r=wo.reshape(num_heads, hd, H).astype(jnp.bfloat16), bo=row(bo),
        g2=row(g2), b2=row(b2),
        w1=w1.astype(jnp.bfloat16), bm1=row(bm1),
        w2=w2.astype(jnp.bfloat16), bm2=row(bm2),
    )


def transformer_layer(x, p, num_heads, fg, fb, *, apply_final_norm, vmem_limit):
    B, S, H = x.shape
    nh = num_heads
    hd = H // nh
    small_vmem = vmem_limit <= 64 * 1024 * 1024

    TQ = _choose_tile(S, 256, 8)
    # v7x has 2 TensorCores: make sure the parallel grid axes expose >= 2 blocks.
    while (B * (S // TQ) < 2 and TQ >= 16 and (TQ // 2) % 8 == 0
           and S % (TQ // 2) == 0):
        TQ //= 2
    TK = TQ

    # Head tile for kernel A: bound resident weight bytes and keep the unroll small.
    th_cap = max(1, min(8, (8 * 1024 * 1024) // max(1, 3 * H * hd * 2)))
    TH = _largest_divisor_leq(nh, th_cap)

    # ---- A: LN1 + QKV projection (head-major outputs) ----
    q, k, v = pl.pallas_call(
        ln_qkv_kernel,
        out_shape=tuple(jax.ShapeDtypeStruct((B, nh, S, hd), jnp.bfloat16)
                        for _ in range(3)),
        grid=(B, S // TQ, nh // TH),
        in_specs=[
            pl.BlockSpec((1, TQ, H), lambda b, i, h: (b, i, 0)),
            pl.BlockSpec((1, H), lambda b, i, h: (0, 0)),
            pl.BlockSpec((1, H), lambda b, i, h: (0, 0)),
            pl.BlockSpec((TH, H, hd), lambda b, i, h: (h, 0, 0)),
            pl.BlockSpec((TH, H, hd), lambda b, i, h: (h, 0, 0)),
            pl.BlockSpec((TH, H, hd), lambda b, i, h: (h, 0, 0)),
            pl.BlockSpec((TH, 1, hd), lambda b, i, h: (h, 0, 0)),
            pl.BlockSpec((TH, 1, hd), lambda b, i, h: (h, 0, 0)),
            pl.BlockSpec((TH, 1, hd), lambda b, i, h: (h, 0, 0)),
        ],
        out_specs=tuple(pl.BlockSpec((1, TH, TQ, hd), lambda b, i, h: (b, h, i, 0))
                        for _ in range(3)),
        scratch_shapes=[pltpu.VMEM((TQ, H), jnp.bfloat16)],
        compiler_params=pltpu.CompilerParams(
            dimension_semantics=("parallel", "parallel", "arbitrary"),
            vmem_limit_bytes=vmem_limit),
    )(x, p['g1'], p['b1'], p['wq'], p['wk'], p['wv'], p['bq'], p['bk'], p['bv'])

    # ---- B: flash attention + output projection + residual ----
    flash = functools.partial(flash_attn_kernel, tq=TQ, tk=TK)
    x1 = pl.pallas_call(
        flash,
        out_shape=jax.ShapeDtypeStruct((B, S, H), x.dtype),
        grid=(B, S // TQ, S // TK),
        in_specs=[
            pl.BlockSpec((1, nh, TQ, hd), lambda b, i, j: (b, 0, i, 0)),
            # Causal clamp: fully-masked KV blocks (j > i) reuse block i -> no DMA.
            pl.BlockSpec((1, nh, TK, hd), lambda b, i, j: (b, 0, jnp.minimum(i, j), 0)),
            pl.BlockSpec((1, nh, TK, hd), lambda b, i, j: (b, 0, jnp.minimum(i, j), 0)),
            pl.BlockSpec((1, TQ, H), lambda b, i, j: (b, i, 0)),
            pl.BlockSpec((nh, hd, H), lambda b, i, j: (0, 0, 0)),
            pl.BlockSpec((1, H), lambda b, i, j: (0, 0)),
        ],
        out_specs=pl.BlockSpec((1, TQ, H), lambda b, i, j: (b, i, 0)),
        scratch_shapes=[pltpu.VMEM((nh, TQ, 1), jnp.float32),
                        pltpu.VMEM((nh, TQ, 1), jnp.float32),
                        pltpu.VMEM((nh, TQ, hd), jnp.float32)],
        compiler_params=pltpu.CompilerParams(
            dimension_semantics=("parallel", "parallel", "arbitrary"),
            vmem_limit_bytes=vmem_limit),
    )(q, k, v, x, p['wo_r'], p['bo'])

    # ---- C: LN2 + MLP + residual (+ fused final LayerNorm on the last layer) ----
    M = B * S                                    # flatten (B,S): amortizes w1/w2 streaming
    TM = _choose_tile(M, 256 if small_vmem else 512, 8)
    TN = _choose_tile(4 * H, 512 if small_vmem else 1024, 128)
    x1f = x1.reshape(M, H)                       # free reshape (leading-dim merge)
    mlp = functools.partial(mlp_kernel, apply_final_norm=apply_final_norm)
    out = pl.pallas_call(
        mlp,
        out_shape=jax.ShapeDtypeStruct((M, H), x.dtype),
        grid=(M // TM, (4 * H) // TN),
        in_specs=[
            pl.BlockSpec((TM, H), lambda i, n: (i, 0)),
            pl.BlockSpec((1, H), lambda i, n: (0, 0)),
            pl.BlockSpec((1, H), lambda i, n: (0, 0)),
            pl.BlockSpec((H, TN), lambda i, n: (0, n)),
            pl.BlockSpec((1, TN), lambda i, n: (0, n)),
            pl.BlockSpec((TN, H), lambda i, n: (n, 0)),
            pl.BlockSpec((1, H), lambda i, n: (0, 0)),
            pl.BlockSpec((1, H), lambda i, n: (0, 0)),
            pl.BlockSpec((1, H), lambda i, n: (0, 0)),
        ],
        out_specs=pl.BlockSpec((TM, H), lambda i, n: (i, 0)),
        scratch_shapes=[pltpu.VMEM((TM, H), jnp.bfloat16),
                        pltpu.VMEM((TM, H), jnp.float32)],
        compiler_params=pltpu.CompilerParams(
            dimension_semantics=("parallel", "arbitrary"),
            vmem_limit_bytes=vmem_limit),
    )(x1f, p['g2'], p['b2'], p['w1'], p['bm1'], p['w2'], p['bm2'], fg, fb)
    return out.reshape(B, S, H)


def global_latent_transformer(x, layer_params, final_gamma, final_beta, num_heads):
    prepped = [_prepare_layer_params(p, num_heads) for p in layer_params]
    fg = final_gamma.reshape(1, -1).astype(jnp.float32)
    fb = final_beta.reshape(1, -1).astype(jnp.float32)
    vmem_limit = _vmem_limit_bytes()
    n_layers = len(prepped)
    for i, p in enumerate(prepped):
        x = transformer_layer(x, p, num_heads, fg, fb,
                              apply_final_norm=(i == n_layers - 1),
                              vmem_limit=vmem_limit)
    return x


# ----------------------- pure-JAX reference (bf16-matmul mirror) -----------------------
def ref_forward(x, layer_params, final_gamma, final_beta, num_heads):
    bf, f32 = jnp.bfloat16, jnp.float32

    def ln(y, g, b):
        m = y.mean(-1, keepdims=True)
        v = ((y - m) ** 2).mean(-1, keepdims=True)
        return (y - m) * jax.lax.rsqrt(v + _LN_EPS) * g + b

    B, S, H = x.shape
    hd = H // num_heads
    causal = jnp.triu(jnp.ones((S, S), bool), 1)
    for (g1, b1, wqkv, bqkv, wo, bo, g2, b2, w1, bm1, w2, bm2) in layer_params:
        n = ln(x, g1, b1)
        qkv = (jnp.dot(n.astype(bf), wqkv.astype(bf),
                       preferred_element_type=f32) + bqkv).astype(bf)
        q, k, v = jnp.split(qkv, 3, axis=-1)
        q = q.reshape(B, S, num_heads, hd).transpose(0, 2, 1, 3)
        k = k.reshape(B, S, num_heads, hd).transpose(0, 2, 1, 3)
        v = v.reshape(B, S, num_heads, hd).transpose(0, 2, 1, 3)
        s = jnp.einsum('bhqd,bhkd->bhqk', q, k,
                       preferred_element_type=f32) / math.sqrt(hd)
        s = jnp.where(causal, _NEG_INF, s)
        p = jax.nn.softmax(s, axis=-1)
        ctx = jnp.einsum('bhqk,bhkd->bhqd', p.astype(bf), v,
                         preferred_element_type=f32)
        ctx = ctx.transpose(0, 2, 1, 3).reshape(B, S, H)
        attn = jnp.dot(ctx.astype(bf), wo.astype(bf), preferred_element_type=f32) + bo
        x = x + attn
        n2 = ln(x, g2, b2)
        h = jnp.dot(n2.astype(bf), w1.astype(bf), preferred_element_type=f32) + bm1
        h = 0.5 * h * (1.0 + jax.lax.erf(h / math.sqrt(2.0)))
        x = x + jnp.dot(h.astype(bf), w2.astype(bf), preferred_element_type=f32) + bm2
    return ln(x, final_gamma, final_beta)


# ----------------------------------- main -----------------------------------
def make_params(key, num_layers, H):
    layer_params = []
    for _ in range(num_layers):
        key, *ks = jax.random.split(key, 13)
        g1 = 1.0 + 0.1 * jax.random.normal(ks[0], (H,), jnp.float32)
        b1 = 0.05 * jax.random.normal(ks[1], (H,), jnp.float32)
        wqkv = 0.05 * jax.random.normal(ks[2], (H, 3 * H), jnp.float32)
        bqkv = 0.02 * jax.random.normal(ks[3], (3 * H,), jnp.float32)
        wo = 0.05 * jax.random.normal(ks[4], (H, H), jnp.float32)
        bo = 0.02 * jax.random.normal(ks[5], (H,), jnp.float32)
        g2 = 1.0 + 0.1 * jax.random.normal(ks[6], (H,), jnp.float32)
        b2 = 0.05 * jax.random.normal(ks[7], (H,), jnp.float32)
        w1 = 0.05 * jax.random.normal(ks[8], (H, 4 * H), jnp.float32)
        bm1 = 0.02 * jax.random.normal(ks[9], (4 * H,), jnp.float32)
        w2 = 0.05 * jax.random.normal(ks[10], (4 * H, H), jnp.float32)
        bm2 = 0.02 * jax.random.normal(ks[11], (H,), jnp.float32)
        layer_params.append((g1, b1, wqkv, bqkv, wo, bo, g2, b2, w1, bm1, w2, bm2))
    key, k1, k2 = jax.random.split(key, 3)
    final_gamma = 1.0 + 0.1 * jax.random.normal(k1, (H,), jnp.float32)
    final_beta = 0.05 * jax.random.normal(k2, (H,), jnp.float32)
    return layer_params, final_gamma, final_beta, key


if __name__ == "__main__":
    B, S, H = 2, 8, 32          # batch, seq, hidden (small test shapes)
    num_heads = 4
    num_layers = 2

    key = jax.random.PRNGKey(0)
    layer_params, final_gamma, final_beta, key = make_params(key, num_layers, H)
    key, kx = jax.random.split(key)
    x = jax.random.normal(kx, (B, S, H), jnp.float32)

    fwd = jax.jit(functools.partial(global_latent_transformer, num_heads=num_heads))
    out = jax.block_until_ready(fwd(x, layer_params, final_gamma, final_beta))

    ref = ref_forward(x, layer_params, final_gamma, final_beta, num_heads)
    assert out.shape == (B, S, H)
    assert jnp.allclose(out, ref, atol=2e-2, rtol=2e-2), "mismatch vs pure-JAX reference"
    print("KERNEL_OK")
</pallas_src>

<mosaic_0001>
module attributes {stable_mosaic.version = 11 : i64} {
  func.func @ln_qkv_kernel(%arg0: i32, %arg1: i32, %arg2: i32, %arg3: memref<1x8x32xf32, #tpu.memory_space<vmem>>, %arg4: memref<1x32xf32, #tpu.memory_space<vmem>>, %arg5: memref<1x32xf32, #tpu.memory_space<vmem>>, %arg6: memref<4x32x8xbf16, #tpu.memory_space<vmem>>, %arg7: memref<4x32x8xbf16, #tpu.memory_space<vmem>>, %arg8: memref<4x32x8xbf16, #tpu.memory_space<vmem>>, %arg9: memref<4x1x8xf32, #tpu.memory_space<vmem>>, %arg10: memref<4x1x8xf32, #tpu.memory_space<vmem>>, %arg11: memref<4x1x8xf32, #tpu.memory_space<vmem>>, %arg12: memref<1x4x8x8xbf16, #tpu.memory_space<vmem>>, %arg13: memref<1x4x8x8xbf16, #tpu.memory_space<vmem>>, %arg14: memref<1x4x8x8xbf16, #tpu.memory_space<vmem>>, %arg15: memref<8x32xbf16, #tpu.memory_space<vmem>>) attributes {dimension_semantics = [#tpu.dimension_semantics<parallel>, #tpu.dimension_semantics<parallel>, #tpu.dimension_semantics<arbitrary>], iteration_bounds = array<i64: 2, 1, 1>, scalar_prefetch = 0 : i64, scratch_operands = 1 : i64, tpu.core_type = #tpu.core_type<tc>, window_params = [{transform_indices = @transform_0, window_bounds = array<i64: 1, 8, 32>}, {pipeline_mode = #tpu.pipeline_mode<synchronous>, transform_indices = @transform_1, window_bounds = array<i64: 1, 32>}, {pipeline_mode = #tpu.pipeline_mode<synchronous>, transform_indices = @transform_2, window_bounds = array<i64: 1, 32>}, {transform_indices = @transform_3, window_bounds = array<i64: 4, 32, 8>}, {transform_indices = @transform_4, window_bounds = array<i64: 4, 32, 8>}, {transform_indices = @transform_5, window_bounds = array<i64: 4, 32, 8>}, {transform_indices = @transform_6, window_bounds = array<i64: 4, 1, 8>}, {transform_indices = @transform_7, window_bounds = array<i64: 4, 1, 8>}, {transform_indices = @transform_8, window_bounds = array<i64: 4, 1, 8>}, {transform_indices = @transform_9, window_bounds = array<i64: 1, 4, 8, 8>}, {transform_indices = @transform_10, window_bounds = array<i64: 1, 4, 8, 8>}, {transform_indices = @transform_11, window_bounds = array<i64: 1, 4, 8, 8>}]} {
    %c0_i32 = arith.constant 0 : i32
    %0 = arith.cmpi eq, %arg2, %c0_i32 : i32
    %1 = arith.extui %0 : i1 to i32
    %c0_i32_0 = arith.constant 0 : i32
    %2 = arith.cmpi ne, %1, %c0_i32_0 : i32
    scf.if %2 {
      %c0_130 = arith.constant 0 : index
      %c0_131 = arith.constant 0 : index
      %c0_132 = arith.constant 0 : index
      %136 = vector.load %arg3[%c0_130, %c0_131, %c0_132] : memref<1x8x32xf32, #tpu.memory_space<vmem>>, vector<1x8x32xf32>
      %137 = vector.shape_cast %136 : vector<1x8x32xf32> to vector<8x32xf32>
      %c0_133 = arith.constant 0 : index
      %c0_134 = arith.constant 0 : index
      %138 = vector.load %arg4[%c0_133, %c0_134] : memref<1x32xf32, #tpu.memory_space<vmem>>, vector<1x32xf32>
      %c0_135 = arith.constant 0 : index
      %c0_136 = arith.constant 0 : index
      %139 = vector.load %arg5[%c0_135, %c0_136] : memref<1x32xf32, #tpu.memory_space<vmem>>, vector<1x32xf32>
      %cst_137 = arith.constant dense<0.000000e+00> : vector<8xf32>
      %140 = vector.multi_reduction <add>, %137, %cst_137 [1] : vector<8x32xf32> to vector<8xf32>
      %141 = vector.shape_cast %140 : vector<8xf32> to vector<8x1xf32>
      %cst_138 = arith.constant 3.200000e+01 : f32
      %142 = vector.broadcast %cst_138 : f32 to vector<8x1xf32>
      %143 = arith.divf %141, %142 : vector<8x1xf32>
      %144 = vector.broadcast %143 : vector<8x1xf32> to vector<8x32xf32>
      %145 = arith.subf %137, %144 : vector<8x32xf32>
      %146 = arith.mulf %145, %145 : vector<8x32xf32>
      %cst_139 = arith.constant dense<0.000000e+00> : vector<8xf32>
      %147 = vector.multi_reduction <add>, %146, %cst_139 [1] : vector<8x32xf32> to vector<8xf32>
      %148 = vector.shape_cast %147 : vector<8xf32> to vector<8x1xf32>
      %cst_140 = arith.constant 3.200000e+01 : f32
      %149 = vector.broadcast %cst_140 : f32 to vector<8x1xf32>
      %150 = arith.divf %148, %149 : vector<8x1xf32>
      %151 = vector.broadcast %143 : vector<8x1xf32> to vector<8x32xf32>
      %152 = arith.subf %137, %151 : vector<8x32xf32>
      %cst_141 = arith.constant 9.99999997E-7 : f32
      %153 = vector.broadcast %cst_141 : f32 to vector<8x1xf32>
      %154 = arith.addf %150, %153 : vector<8x1xf32>
      %155 = math.rsqrt %154 : vector<8x1xf32>
      %156 = vector.broadcast %155 : vector<8x1xf32> to vector<8x32xf32>
      %157 = arith.mulf %152, %156 : vector<8x32xf32>
      %158 = vector.broadcast %138 : vector<1x32xf32> to vector<8x32xf32>
      %159 = arith.mulf %157, %158 : vector<8x32xf32>
      %160 = vector.broadcast %139 : vector<1x32xf32> to vector<8x32xf32>
      %161 = arith.addf %159, %160 : vector<8x32xf32>
      %162 = arith.truncf %161 : vector<8x32xf32> to vector<8x32xbf16>
      %c0_142 = arith.constant 0 : index
      %c0_143 = arith.constant 0 : index
      %163 = vector.load %arg15[%c0_142, %c0_143] : memref<8x32xbf16, #tpu.memory_space<vmem>>, vector<8x32xbf16>
      tpu.vector_store %arg15[%c0_142, %c0_143], %162 {strides = array<i32>} : memref<8x32xbf16, #tpu.memory_space<vmem>>, vector<8x32xbf16>,
    } else {
    }
    %c0 = arith.constant 0 : index
    %c0_1 = arith.constant 0 : index
    %3 = vector.load %arg15[%c0, %c0_1] : memref<8x32xbf16, #tpu.memory_space<vmem>>, vector<8x32xbf16>
    %c0_2 = arith.constant 0 : index
    %c0_3 = arith.constant 0 : index
    %c0_4 = arith.constant 0 : index
    %4 = vector.load %arg6[%c0_2, %c0_3, %c0_4] : memref<4x32x8xbf16, #tpu.memory_space<vmem>>, vector<1x32x8xbf16>
    %5 = vector.shape_cast %4 : vector<1x32x8xbf16> to vector<32x8xbf16>
    %cst = arith.constant dense<0.000000e+00> : vector<8x8xf32>
    %6 = tpu.matmul %3, %5, %cst {dimension_numbers = #tpu.dot_dimension_numbers<[1], [0], [0], [1], [0, 0, 1, 1], [], []>} : vector<8x32xbf16>, vector<32x8xbf16>, vector<8x8xf32> -> vector<8x8xf32>
    %c0_5 = arith.constant 0 : index
    %c0_6 = arith.constant 0 : index
    %c0_7 = arith.constant 0 : index
    %7 = vector.load %arg9[%c0_5, %c0_6, %c0_7] : memref<4x1x8xf32, #tpu.memory_space<vmem>>, vector<1x1x8xf32>
    %8 = vector.shape_cast %7 : vector<1x1x8xf32> to vector<1x8xf32>
    %9 = vector.broadcast %8 : vector<1x8xf32> to vector<8x8xf32>
    %10 = arith.addf %6, %9 : vector<8x8xf32>
    %11 = arith.truncf %10 : vector<8x8xf32> to vector<8x8xbf16>
    %c0_8 = arith.constant 0 : index
    %c0_9 = arith.constant 0 : index
    %c0_10 = arith.constant 0 : index
    %c0_11 = arith.constant 0 : index
    %12 = vector.load %arg12[%c0_8, %c0_9, %c0_10, %c0_11] : memref<1x4x8x8xbf16, #tpu.memory_space<vmem>>, vector<1x1x8x8xbf16>
    %13 = vector.shape_cast %12 : vector<1x1x8x8xbf16> to vector<8x8xbf16>
    %14 = vector.shape_cast %11 : vector<8x8xbf16> to vector<1x1x8x8xbf16>
    tpu.vector_store %arg12[%c0_8, %c0_9, %c0_10, %c0_11], %14 {strides = array<i32>} : memref<1x4x8x8xbf16, #tpu.memory_space<vmem>>, vector<1x1x8x8xbf16>,
    %c0_12 = arith.constant 0 : index
    %c0_13 = arith.constant 0 : index
    %c0_14 = arith.constant 0 : index
    %15 = vector.load %arg7[%c0_12, %c0_13, %c0_14] : memref<4x32x8xbf16, #tpu.memory_space<vmem>>, vector<1x32x8xbf16>
    %16 = vector.shape_cast %15 : vector<1x32x8xbf16> to vector<32x8xbf16>
    %cst_15 = arith.constant dense<0.000000e+00> : vector<8x8xf32>
    %17 = tpu.matmul %3, %16, %cst_15 {dimension_numbers = #tpu.dot_dimension_numbers<[1], [0], [0], [1], [0, 0, 1, 1], [], []>} : vector<8x32xbf16>, vector<32x8xbf16>, vector<8x8xf32> -> vector<8x8xf32>
    %c0_16 = arith.constant 0 : index
    %c0_17 = arith.constant 0 : index
    %c0_18 = arith.constant 0 : index
    %18 = vector.load %arg10[%c0_16, %c0_17, %c0_18] : memref<4x1x8xf32, #tpu.memory_space<vmem>>, vector<1x1x8xf32>
    %19 = vector.shape_cast %18 : vector<1x1x8xf32> to vector<1x8xf32>
    %20 = vector.broadcast %19 : vector<1x8xf32> to vector<8x8xf32>
    %21 = arith.addf %17, %20 : vector<8x8xf32>
    %22 = arith.truncf %21 : vector<8x8xf32> to vector<8x8xbf16>
    %c0_19 = arith.constant 0 : index
    %c0_20 = arith.constant 0 : index
    %c0_21 = arith.constant 0 : index
    %c0_22 = arith.constant 0 : index
    %23 = vector.load %arg13[%c0_19, %c0_20, %c0_21, %c0_22] : memref<1x4x8x8xbf16, #tpu.memory_space<vmem>>, vector<1x1x8x8xbf16>
    %24 = vector.shape_cast %23 : vector<1x1x8x8xbf16> to vector<8x8xbf16>
    %25 = vector.shape_cast %22 : vector<8x8xbf16> to vector<1x1x8x8xbf16>
    tpu.vector_store %arg13[%c0_19, %c0_20, %c0_21, %c0_22], %25 {strides = array<i32>} : memref<1x4x8x8xbf16, #tpu.memory_space<vmem>>, vector<1x1x8x8xbf16>,
    %c0_23 = arith.constant 0 : index
    %c0_24 = arith.constant 0 : index
    %c0_25 = arith.constant 0 : index
    %26 = vector.load %arg8[%c0_23, %c0_24, %c0_25] : memref<4x32x8xbf16, #tpu.memory_space<vmem>>, vector<1x32x8xbf16>
    %27 = vector.shape_cast %26 : vector<1x32x8xbf16> to vector<32x8xbf16>
    %cst_26 = arith.constant dense<0.000000e+00> : vector<8x8xf32>
    %28 = tpu.matmul %3, %27, %cst_26 {dimension_numbers = #tpu.dot_dimension_numbers<[1], [0], [0], [1], [0, 0, 1, 1], [], []>} : vector<8x32xbf16>, vector<32x8xbf16>, vector<8x8xf32> -> vector<8x8xf32>
    %c0_27 = arith.constant 0 : index
    %c0_28 = arith.constant 0 : index
    %c0_29 = arith.constant 0 : index
    %29 = vector.load %arg11[%c0_27, %c0_28, %c0_29] : memref<4x1x8xf32, #tpu.memory_space<vmem>>, vector<1x1x8xf32>
    %30 = vector.shape_cast %29 : vector<1x1x8xf32> to vector<1x8xf32>
    %31 = vector.broadcast %30 : vector<1x8xf32> to vector<8x8xf32>
    %32 = arith.addf %28, %31 : vector<8x8xf32>
    %33 = arith.truncf %32 : vector<8x8xf32> to vector<8x8xbf16>
    %c0_30 = arith.constant 0 : index
    %c0_31 = arith.constant 0 : index
    %c0_32 = arith.constant 0 : index
    %c0_33 = arith.constant 0 : index
    %34 = vector.load %arg14[%c0_30, %c0_31, %c0_32, %c0_33] : memref<1x4x8x8xbf16, #tpu.memory_space<vmem>>, vector<1x1x8x8xbf16>
    %35 = vector.shape_cast %34 : vector<1x1x8x8xbf16> to vector<8x8xbf16>
    %36 = vector.shape_cast %33 : vector<8x8xbf16> to vector<1x1x8x8xbf16>
    tpu.vector_store %arg14[%c0_30, %c0_31, %c0_32, %c0_33], %36 {strides = array<i32>} : memref<1x4x8x8xbf16, #tpu.memory_space<vmem>>, vector<1x1x8x8xbf16>,
    %c1 = arith.constant 1 : index
    %c0_34 = arith.constant 0 : index
    %c0_35 = arith.constant 0 : index
    %37 = vector.load %arg6[%c1, %c0_34, %c0_35] : memref<4x32x8xbf16, #tpu.memory_space<vmem>>, vector<1x32x8xbf16>
    %38 = vector.shape_cast %37 : vector<1x32x8xbf16> to vector<32x8xbf16>
    %cst_36 = arith.constant dense<0.000000e+00> : vector<8x8xf32>
    %39 = tpu.matmul %3, %38, %cst_36 {dimension_numbers = #tpu.dot_dimension_numbers<[1], [0], [0], [1], [0, 0, 1, 1], [], []>} : vector<8x32xbf16>, vector<32x8xbf16>, vector<8x8xf32> -> vector<8x8xf32>
    %c1_37 = arith.constant 1 : index
    %c0_38 = arith.constant 0 : index
    %c0_39 = arith.constant 0 : index
    %40 = vector.load %arg9[%c1_37, %c0_38, %c0_39] : memref<4x1x8xf32, #tpu.memory_space<vmem>>, vector<1x1x8xf32>
    %41 = vector.shape_cast %40 : vector<1x1x8xf32> to vector<1x8xf32>
    %42 = vector.broadcast %41 : vector<1x8xf32> to vector<8x8xf32>
    %43 = arith.addf %39, %42 : vector<8x8xf32>
    %44 = arith.truncf %43 : vector<8x8xf32> to vector<8x8xbf16>
    %c0_40 = arith.constant 0 : index
    %c1_41 = arith.constant 1 : index
    %c0_42 = arith.constant 0 : index
    %c0_43 = arith.constant 0 : index
    %45 = vector.load %arg12[%c0_40, %c1_41, %c0_42, %c0_43] : memref<1x4x8x8xbf16, #tpu.memory_space<vmem>>, vector<1x1x8x8xbf16>
    %46 = vector.shape_cast %45 : vector<1x1x8x8xbf16> to vector<8x8xbf16>
    %47 = vector.shape_cast %44 : vector<8x8xbf16> to vector<1x1x8x8xbf16>
    tpu.vector_store %arg12[%c0_40, %c1_41, %c0_42, %c0_43], %47 {strides = array<i32>} : memref<1x4x8x8xbf16, #tpu.memory_space<vmem>>, vector<1x1x8x8xbf16>,
    %c1_44 = arith.constant 1 : index
    %c0_45 = arith.constant 0 : index
    %c0_46 = arith.constant 0 : index
    %48 = vector.load %arg7[%c1_44, %c0_45, %c0_46] : memref<4x32x8xbf16, #tpu.memory_space<vmem>>, vector<1x32x8xbf16>
    %49 = vector.shape_cast %48 : vector<1x32x8xbf16> to vector<32x8xbf16>
    %cst_47 = arith.constant dense<0.000000e+00> : vector<8x8xf32>
    %50 = tpu.matmul %3, %49, %cst_47 {dimension_numbers = #tpu.dot_dimension_numbers<[1], [0], [0], [1], [0, 0, 1, 1], [], []>} : vector<8x32xbf16>, vector<32x8xbf16>, vector<8x8xf32> -> vector<8x8xf32>
    %c1_48 = arith.constant 1 : index
    %c0_49 = arith.constant 0 : index
    %c0_50 = arith.constant 0 : index
    %51 = vector.load %arg10[%c1_48, %c0_49, %c0_50] : memref<4x1x8xf32, #tpu.memory_space<vmem>>, vector<1x1x8xf32>
    %52 = vector.shape_cast %51 : vector<1x1x8xf32> to vector<1x8xf32>
    %53 = vector.broadcast %52 : vector<1x8xf32> to vector<8x8xf32>
    %54 = arith.addf %50, %53 : vector<8x8xf32>
    %55 = arith.truncf %54 : vector<8x8xf32> to vector<8x8xbf16>
    %c0_51 = arith.constant 0 : index
    %c1_52 = arith.constant 1 : index
    %c0_53 = arith.constant 0 : index
    %c0_54 = arith.constant 0 : index
    %56 = vector.load %arg13[%c0_51, %c1_52, %c0_53, %c0_54] : memref<1x4x8x8xbf16, #tpu.memory_space<vmem>>, vector<1x1x8x8xbf16>
    %57 = vector.shape_cast %56 : vector<1x1x8x8xbf16> to vector<8x8xbf16>
    %58 = vector.shape_cast %55 : vector<8x8xbf16> to vector<1x1x8x8xbf16>
    tpu.vector_store %arg13[%c0_51, %c1_52, %c0_53, %c0_54], %58 {strides = array<i32>} : memref<1x4x8x8xbf16, #tpu.memory_space<vmem>>, vector<1x1x8x8xbf16>,
    %c1_55 = arith.constant 1 : index
    %c0_56 = arith.constant 0 : index
    %c0_57 = arith.constant 0 : index
    %59 = vector.load %arg8[%c1_55, %c0_56, %c0_57] : memref<4x32x8xbf16, #tpu.memory_space<vmem>>, vector<1x32x8xbf16>
    %60 = vector.shape_cast %59 : vector<1x32x8xbf16> to vector<32x8xbf16>
    %cst_58 = arith.constant dense<0.000000e+00> : vector<8x8xf32>
    %61 = tpu.matmul %3, %60, %cst_58 {dimension_numbers = #tpu.dot_dimension_numbers<[1], [0], [0], [1], [0, 0, 1, 1], [], []>} : vector<8x32xbf16>, vector<32x8xbf16>, vector<8x8xf32> -> vector<8x8xf32>
    %c1_59 = arith.constant 1 : index
    %c0_60 = arith.constant 0 : index
    %c0_61 = arith.constant 0 : index
    %62 = vector.load %arg11[%c1_59, %c0_60, %c0_61] : memref<4x1x8xf32, #tpu.memory_space<vmem>>, vector<1x1x8xf32>
    %63 = vector.shape_cast %62 : vector<1x1x8xf32> to vector<1x8xf32>
    %64 = vector.broadcast %63 : vector<1x8xf32> to vector<8x8xf32>
    %65 = arith.addf %61, %64 : vector<8x8xf32>
    %66 = arith.truncf %65 : vector<8x8xf32> to vector<8x8xbf16>
    %c0_62 = arith.constant 0 : index
    %c1_63 = arith.constant 1 : index
    %c0_64 = arith.constant 0 : index
    %c0_65 = arith.constant 0 : index
    %67 = vector.load %arg14[%c0_62, %c1_63, %c0_64, %c0_65] : memref<1x4x8x8xbf16, #tpu.memory_space<vmem>>, vector<1x1x8x8xbf16>
    %68 = vector.shape_cast %67 : vector<1x1x8x8xbf16> to vector<8x8xbf16>
    %69 = vector.shape_cast %66 : vector<8x8xbf16> to vector<1x1x8x8xbf16>
    tpu.vector_store %arg14[%c0_62, %c1_63, %c0_64, %c0_65], %69 {strides = array<i32>} : memref<1x4x8x8xbf16, #tpu.memory_space<vmem>>, vector<1x1x8x8xbf16>,
    %c2 = arith.constant 2 : index
    %c0_66 = arith.constant 0 : index
    %c0_67 = arith.constant 0 : index
    %70 = vector.load %arg6[%c2, %c0_66, %c0_67] : memref<4x32x8xbf16, #tpu.memory_space<vmem>>, vector<1x32x8xbf16>
    %71 = vector.shape_cast %70 : vector<1x32x8xbf16> to vector<32x8xbf16>
    %cst_68 = arith.constant dense<0.000000e+00> : vector<8x8xf32>
    %72 = tpu.matmul %3, %71, %cst_68 {dimension_numbers = #tpu.dot_dimension_numbers<[1], [0], [0], [1], [0, 0, 1, 1], [], []>} : vector<8x32xbf16>, vector<32x8xbf16>, vector<8x8xf32> -> vector<8x8xf32>
    %c2_69 = arith.constant 2 : index
    %c0_70 = arith.constant 0 : index
    %c0_71 = arith.constant 0 : index
    %73 = vector.load %arg9[%c2_69, %c0_70, %c0_71] : memref<4x1x8xf32, #tpu.memory_space<vmem>>, vector<1x1x8xf32>
    %74 = vector.shape_cast %73 : vector<1x1x8xf32> to vector<1x8xf32>
    %75 = vector.broadcast %74 : vector<1x8xf32> to vector<8x8xf32>
    %76 = arith.addf %72, %75 : vector<8x8xf32>
    %77 = arith.truncf %76 : vector<8x8xf32> to vector<8x8xbf16>
    %c0_72 = arith.constant 0 : index
    %c2_73 = arith.constant 2 : index
    %c0_74 = arith.constant 0 : index
    %c0_75 = arith.constant 0 : index
    %78 = vector.load %arg12[%c0_72, %c2_73, %c0_74, %c0_75] : memref<1x4x8x8xbf16, #tpu.memory_space<vmem>>, vector<1x1x8x8xbf16>
    %79 = vector.shape_cast %78 : vector<1x1x8x8xbf16> to vector<8x8xbf16>
    %80 = vector.shape_cast %77 : vector<8x8xbf16> to vector<1x1x8x8xbf16>
    tpu.vector_store %arg12[%c0_72, %c2_73, %c0_74, %c0_75], %80 {strides = array<i32>} : memref<1x4x8x8xbf16, #tpu.memory_space<vmem>>, vector<1x1x8x8xbf16>,
    %c2_76 = arith.constant 2 : index
    %c0_77 = arith.constant 0 : index
    %c0_78 = arith.constant 0 : index
    %81 = vector.load %arg7[%c2_76, %c0_77, %c0_78] : memref<4x32x8xbf16, #tpu.memory_space<vmem>>, vector<1x32x8xbf16>
    %82 = vector.shape_cast %81 : vector<1x32x8xbf16> to vector<32x8xbf16>
    %cst_79 = arith.constant dense<0.000000e+00> : vector<8x8xf32>
    %83 = tpu.matmul %3, %82, %cst_79 {dimension_numbers = #tpu.dot_dimension_numbers<[1], [0], [0], [1], [0, 0, 1, 1], [], []>} : vector<8x32xbf16>, vector<32x8xbf16>, vector<8x8xf32> -> vector<8x8xf32>
    %c2_80 = arith.constant 2 : index
    %c0_81 = arith.constant 0 : index
    %c0_82 = arith.constant 0 : index
    %84 = vector.load %arg10[%c2_80, %c0_81, %c0_82] : memref<4x1x8xf32, #tpu.memory_space<vmem>>, vector<1x1x8xf32>
    %85 = vector.shape_cast %84 : vector<1x1x8xf32> to vector<1x8xf32>
    %86 = vector.broadcast %85 : vector<1x8xf32> to vector<8x8xf32>
    %87 = arith.addf %83, %86 : vector<8x8xf32>
    %88 = arith.truncf %87 : vector<8x8xf32> to vector<8x8xbf16>
    %c0_83 = arith.constant 0 : index
    %c2_84 = arith.constant 2 : index
    %c0_85 = arith.constant 0 : index
    %c0_86 = arith.constant 0 : index
    %89 = vector.load %arg13[%c0_83, %c2_84, %c0_85, %c0_86] : memref<1x4x8x8xbf16, #tpu.memory_space<vmem>>, vector<1x1x8x8xbf16>
    %90 = vector.shape_cast %89 : vector<1x1x8x8xbf16> to vector<8x8xbf16>
    %91 = vector.shape_cast %88 : vector<8x8xbf16> to vector<1x1x8x8xbf16>
    tpu.vector_store %arg13[%c0_83, %c2_84, %c0_85, %c0_86], %91 {strides = array<i32>} : memref<1x4x8x8xbf16, #tpu.memory_space<vmem>>, vector<1x1x8x8xbf16>,
    %c2_87 = arith.constant 2 : index
    %c0_88 = arith.constant 0 : index
    %c0_89 = arith.constant 0 : index
    %92 = vector.load %arg8[%c2_87, %c0_88, %c0_89] : memref<4x32x8xbf16, #tpu.memory_space<vmem>>, vector<1x32x8xbf16>
    %93 = vector.shape_cast %92 : vector<1x32x8xbf16> to vector<32x8xbf16>
    %cst_90 = arith.constant dense<0.000000e+00> : vector<8x8xf32>
    %94 = tpu.matmul %3, %93, %cst_90 {dimension_numbers = #tpu.dot_dimension_numbers<[1], [0], [0], [1], [0, 0, 1, 1], [], []>} : vector<8x32xbf16>, vector<32x8xbf16>, vector<8x8xf32> -> vector<8x8xf32>
    %c2_91 = arith.constant 2 : index
    %c0_92 = arith.constant 0 : index
    %c0_93 = arith.constant 0 : index
    %95 = vector.load %arg11[%c2_91, %c0_92, %c0_93] : memref<4x1x8xf32, #tpu.memory_space<vmem>>, vector<1x1x8xf32>
    %96 = vector.shape_cast %95 : vector<1x1x8xf32> to vector<1x8xf32>
    %97 = vector.broadcast %96 : vector<1x8xf32> to vector<8x8xf32>
    %98 = arith.addf %94, %97 : vector<8x8xf32>
    %99 = arith.truncf %98 : vector<8x8xf32> to vector<8x8xbf16>
    %c0_94 = arith.constant 0 : index
    %c2_95 = arith.constant 2 : index
    %c0_96 = arith.constant 0 : index
    %c0_97 = arith.constant 0 : index
    %100 = vector.load %arg14[%c0_94, %c2_95, %c0_96, %c0_97] : memref<1x4x8x8xbf16, #tpu.memory_space<vmem>>, vector<1x1x8x8xbf16>
    %101 = vector.shape_cast %100 : vector<1x1x8x8xbf16> to vector<8x8xbf16>
    %102 = vector.shape_cast %99 : vector<8x8xbf16> to vector<1x1x8x8xbf16>
    tpu.vector_store %arg14[%c0_94, %c2_95, %c0_96, %c0_97], %102 {strides = array<i32>} : memref<1x4x8x8xbf16, #tpu.memory_space<vmem>>, vector<1x1x8x8xbf16>,
    %c3 = arith.constant 3 : index
    %c0_98 = arith.constant 0 : index
    %c0_99 = arith.constant 0 : index
    %103 = vector.load %arg6[%c3, %c0_98, %c0_99] : memref<4x32x8xbf16, #tpu.memory_space<vmem>>, vector<1x32x8xbf16>
    %104 = vector.shape_cast %103 : vector<1x32x8xbf16> to vector<32x8xbf16>
    %cst_100 = arith.constant dense<0.000000e+00> : vector<8x8xf32>
    %105 = tpu.matmul %3, %104, %cst_100 {dimension_numbers = #tpu.dot_dimension_numbers<[1], [0], [0], [1], [0, 0, 1, 1], [], []>} : vector<8x32xbf16>, vector<32x8xbf16>, vector<8x8xf32> -> vector<8x8xf32>
    %c3_101 = arith.constant 3 : index
    %c0_102 = arith.constant 0 : index
    %c0_103 = arith.constant 0 : index
    %106 = vector.load %arg9[%c3_101, %c0_102, %c0_103] : memref<4x1x8xf32, #tpu.memory_space<vmem>>, vector<1x1x8xf32>
    %107 = vector.shape_cast %106 : vector<1x1x8xf32> to vector<1x8xf32>
    %108 = vector.broadcast %107 : vector<1x8xf32> to vector<8x8xf32>
    %109 = arith.addf %105, %108 : vector<8x8xf32>
    %110 = arith.truncf %109 : vector<8x8xf32> to vector<8x8xbf16>
    %c0_104 = arith.constant 0 : index
    %c3_105 = arith.constant 3 : index
    %c0_106 = arith.constant 0 : index
    %c0_107 = arith.constant 0 : index
    %111 = vector.load %arg12[%c0_104, %c3_105, %c0_106, %c0_107] : memref<1x4x8x8xbf16, #tpu.memory_space<vmem>>, vector<1x1x8x8xbf16>
    %112 = vector.shape_cast %111 : vector<1x1x8x8xbf16> to vector<8x8xbf16>
    %113 = vector.shape_cast %110 : vector<8x8xbf16> to vector<1x1x8x8xbf16>
    tpu.vector_store %arg12[%c0_104, %c3_105, %c0_106, %c0_107], %113 {strides = array<i32>} : memref<1x4x8x8xbf16, #tpu.memory_space<vmem>>, vector<1x1x8x8xbf16>,
    %c3_108 = arith.constant 3 : index
    %c0_109 = arith.constant 0 : index
    %c0_110 = arith.constant 0 : index
    %114 = vector.load %arg7[%c3_108, %c0_109, %c0_110] : memref<4x32x8xbf16, #tpu.memory_space<vmem>>, vector<1x32x8xbf16>
    %115 = vector.shape_cast %114 : vector<1x32x8xbf16> to vector<32x8xbf16>
    %cst_111 = arith.constant dense<0.000000e+00> : vector<8x8xf32>
    %116 = tpu.matmul %3, %115, %cst_111 {dimension_numbers = #tpu.dot_dimension_numbers<[1], [0], [0], [1], [0, 0, 1, 1], [], []>} : vector<8x32xbf16>, vector<32x8xbf16>, vector<8x8xf32> -> vector<8x8xf32>
    %c3_112 = arith.constant 3 : index
    %c0_113 = arith.constant 0 : index
    %c0_114 = arith.constant 0 : index
    %117 = vector.load %arg10[%c3_112, %c0_113, %c0_114] : memref<4x1x8xf32, #tpu.memory_space<vmem>>, vector<1x1x8xf32>
    %118 = vector.shape_cast %117 : vector<1x1x8xf32> to vector<1x8xf32>
    %119 = vector.broadcast %118 : vector<1x8xf32> to vector<8x8xf32>
    %120 = arith.addf %116, %119 : vector<8x8xf32>
    %121 = arith.truncf %120 : vector<8x8xf32> to vector<8x8xbf16>
    %c0_115 = arith.constant 0 : index
    %c3_116 = arith.constant 3 : index
    %c0_117 = arith.constant 0 : index
    %c0_118 = arith.constant 0 : index
    %122 = vector.load %arg13[%c0_115, %c3_116, %c0_117, %c0_118] : memref<1x4x8x8xbf16, #tpu.memory_space<vmem>>, vector<1x1x8x8xbf16>
    %123 = vector.shape_cast %122 : vector<1x1x8x8xbf16> to vector<8x8xbf16>
    %124 = vector.shape_cast %121 : vector<8x8xbf16> to vector<1x1x8x8xbf16>
    tpu.vector_store %arg13[%c0_115, %c3_116, %c0_117, %c0_118], %124 {strides = array<i32>} : memref<1x4x8x8xbf16, #tpu.memory_space<vmem>>, vector<1x1x8x8xbf16>,
    %c3_119 = arith.constant 3 : index
    %c0_120 = arith.constant 0 : index
    %c0_121 = arith.constant 0 : index
    %125 = vector.load %arg8[%c3_119, %c0_120, %c0_121] : memref<4x32x8xbf16, #tpu.memory_space<vmem>>, vector<1x32x8xbf16>
    %126 = vector.shape_cast %125 : vector<1x32x8xbf16> to vector<32x8xbf16>
    %cst_122 = arith.constant dense<0.000000e+00> : vector<8x8xf32>
    %127 = tpu.matmul %3, %126, %cst_122 {dimension_numbers = #tpu.dot_dimension_numbers<[1], [0], [0], [1], [0, 0, 1, 1], [], []>} : vector<8x32xbf16>, vector<32x8xbf16>, vector<8x8xf32> -> vector<8x8xf32>
    %c3_123 = arith.constant 3 : index
    %c0_124 = arith.constant 0 : index
    %c0_125 = arith.constant 0 : index
    %128 = vector.load %arg11[%c3_123, %c0_124, %c0_125] : memref<4x1x8xf32, #tpu.memory_space<vmem>>, vector<1x1x8xf32>
    %129 = vector.shape_cast %128 : vector<1x1x8xf32> to vector<1x8xf32>
    %130 = vector.broadcast %129 : vector<1x8xf32> to vector<8x8xf32>
    %131 = arith.addf %127, %130 : vector<8x8xf32>
    %132 = arith.truncf %131 : vector<8x8xf32> to vector<8x8xbf16>
    %c0_126 = arith.constant 0 : index
    %c3_127 = arith.constant 3 : index
    %c0_128 = arith.constant 0 : index
    %c0_129 = arith.constant 0 : index
    %133 = vector.load %arg14[%c0_126, %c3_127, %c0_128, %c0_129] : memref<1x4x8x8xbf16, #tpu.memory_space<vmem>>, vector<1x1x8x8xbf16>
    %134 = vector.shape_cast %133 : vector<1x1x8x8xbf16> to vector<8x8xbf16>
    %135 = vector.shape_cast %132 : vector<8x8xbf16> to vector<1x1x8x8xbf16>
    tpu.vector_store %arg14[%c0_126, %c3_127, %c0_128, %c0_129], %135 {strides = array<i32>} : memref<1x4x8x8xbf16, #tpu.memory_space<vmem>>, vector<1x1x8x8xbf16>,
    return
  }
  func.func @transform_0(%arg0: i32, %arg1: i32, %arg2: i32) -> (i32, i32, i32) {
    %c0_i32 = arith.constant 0 : i32
    %c0_i32_0 = arith.constant 0 : i32
    return %arg0, %arg1, %c0_i32 : i32, i32, i32
  }
  func.func @transform_1(%arg0: i32, %arg1: i32, %arg2: i32) -> (i32, i32) {
    %c0_i32 = arith.constant 0 : i32
    %c0_i32_0 = arith.constant 0 : i32
    %c0_i32_1 = arith.constant 0 : i32
    return %c0_i32, %c0_i32_0 : i32, i32
  }
  func.func @transform_2(%arg0: i32, %arg1: i32, %arg2: i32) -> (i32, i32) {
    %c0_i32 = arith.constant 0 : i32
    %c0_i32_0 = arith.constant 0 : i32
    %c0_i32_1 = arith.constant 0 : i32
    return %c0_i32, %c0_i32_0 : i32, i32
  }
  func.func @transform_3(%arg0: i32, %arg1: i32, %arg2: i32) -> (i32, i32, i32) {
    %c0_i32 = arith.constant 0 : i32
    %c0_i32_0 = arith.constant 0 : i32
    %c0_i32_1 = arith.constant 0 : i32
    return %arg2, %c0_i32, %c0_i32_0 : i32, i32, i32
  }
  func.func @transform_4(%arg0: i32, %arg1: i32, %arg2: i32) -> (i32, i32, i32) {
    %c0_i32 = arith.constant 0 : i32
    %c0_i32_0 = arith.constant 0 : i32
    %c0_i32_1 = arith.constant 0 : i32
    return %arg2, %c0_i32, %c0_i32_0 : i32, i32, i32
  }
  func.func @transform_5(%arg0: i32, %arg1: i32, %arg2: i32) -> (i32, i32, i32) {
    %c0_i32 = arith.constant 0 : i32
    %c0_i32_0 = arith.constant 0 : i32
    %c0_i32_1 = arith.constant 0 : i32
    return %arg2, %c0_i32, %c0_i32_0 : i32, i32, i32
  }
  func.func @transform_6(%arg0: i32, %arg1: i32, %arg2: i32) -> (i32, i32, i32) {
    %c0_i32 = arith.constant 0 : i32
    %c0_i32_0 = arith.constant 0 : i32
    %c0_i32_1 = arith.constant 0 : i32
    return %arg2, %c0_i32, %c0_i32_0 : i32, i32, i32
  }
  func.func @transform_7(%arg0: i32, %arg1: i32, %arg2: i32) -> (i32, i32, i32) {
    %c0_i32 = arith.constant 0 : i32
    %c0_i32_0 = arith.constant 0 : i32
    %c0_i32_1 = arith.constant 0 : i32
    return %arg2, %c0_i32, %c0_i32_0 : i32, i32, i32
  }
  func.func @transform_8(%arg0: i32, %arg1: i32, %arg2: i32) -> (i32, i32, i32) {
    %c0_i32 = arith.constant 0 : i32
    %c0_i32_0 = arith.constant 0 : i32
    %c0_i32_1 = arith.constant 0 : i32
    return %arg2, %c0_i32, %c0_i32_0 : i32, i32, i32
  }
  func.func @transform_9(%arg0: i32, %arg1: i32, %arg2: i32) -> (i32, i32, i32, i32) {
    %c0_i32 = arith.constant 0 : i32
    %c0_i32_0 = arith.constant 0 : i32
    return %arg0, %arg2, %arg1, %c0_i32 : i32, i32, i32, i32
  }
  func.func @transform_10(%arg0: i32, %arg1: i32, %arg2: i32) -> (i32, i32, i32, i32) {
    %c0_i32 = arith.constant 0 : i32
    %c0_i32_0 = arith.constant 0 : i32
    return %arg0, %arg2, %arg1, %c0_i32 : i32, i32, i32, i32
  }
  func.func @transform_11(%arg0: i32, %arg1: i32, %arg2: i32) -> (i32, i32, i32, i32) {
    %c0_i32 = arith.constant 0 : i32
    %c0_i32_0 = arith.constant 0 : i32
    return %arg0, %arg2, %arg1, %c0_i32 : i32, i32, i32, i32
  }
}

module attributes {stable_mosaic.version = 11 : i64} {
  func.func @flash_attn_kernel(%arg0: i32, %arg1: i32, %arg2: i32, %arg3: memref<1x4x8x8xbf16, #tpu.memory_space<vmem>>, %arg4: memref<1x4x8x8xbf16, #tpu.memory_space<vmem>>, %arg5: memref<1x4x8x8xbf16, #tpu.memory_space<vmem>>, %arg6: memref<1x8x32xf32, #tpu.memory_space<vmem>>, %arg7: memref<4x8x32xbf16, #tpu.memory_space<vmem>>, %arg8: memref<1x32xf32, #tpu.memory_space<vmem>>, %arg9: memref<1x8x32xf32, #tpu.memory_space<vmem>>, %arg10: memref<4x8x1xf32, #tpu.memory_space<vmem>>, %arg11: memref<4x8x1xf32, #tpu.memory_space<vmem>>, %arg12: memref<4x8x8xf32, #tpu.memory_space<vmem>>) attributes {dimension_semantics = [#tpu.dimension_semantics<parallel>, #tpu.dimension_semantics<parallel>, #tpu.dimension_semantics<arbitrary>], iteration_bounds = array<i64: 2, 1, 1>, scalar_prefetch = 0 : i64, scratch_operands = 3 : i64, tpu.core_type = #tpu.core_type<tc>, window_params = [{transform_indices = @transform_0, window_bounds = array<i64: 1, 4, 8, 8>}, {transform_indices = @transform_1, window_bounds = array<i64: 1, 4, 8, 8>}, {transform_indices = @transform_2, window_bounds = array<i64: 1, 4, 8, 8>}, {transform_indices = @transform_3, window_bounds = array<i64: 1, 8, 32>}, {pipeline_mode = #tpu.pipeline_mode<synchronous>, transform_indices = @transform_4, window_bounds = array<i64: 4, 8, 32>}, {pipeline_mode = #tpu.pipeline_mode<synchronous>, transform_indices = @transform_5, window_bounds = array<i64: 1, 32>}, {transform_indices = @transform_6, window_bounds = array<i64: 1, 8, 32>}]} {
    %c0_i32 = arith.constant 0 : i32
    %0 = arith.cmpi eq, %arg2, %c0_i32 : i32
    %1 = arith.extui %0 : i1 to i32
    %c0_i32_0 = arith.constant 0 : i32
    %2 = arith.cmpi ne, %1, %c0_i32_0 : i32
    scf.if %2 {
      %cst = arith.constant -1.000000e+30 : f32
      %12 = vector.broadcast %cst : f32 to vector<4x8x1xf32>
      %c0 = arith.constant 0 : index
      %c0_5 = arith.constant 0 : index
      %c0_6 = arith.constant 0 : index
      %13 = vector.load %arg10[%c0, %c0_5, %c0_6] : memref<4x8x1xf32, #tpu.memory_space<vmem>>, vector<4x8x1xf32>
      tpu.vector_store %arg10[%c0, %c0_5, %c0_6], %12 {strides = array<i32>} : memref<4x8x1xf32, #tpu.memory_space<vmem>>, vector<4x8x1xf32>,
      %cst_7 = arith.constant 0.000000e+00 : f32
      %14 = vector.broadcast %cst_7 : f32 to vector<4x8x1xf32>
      %c0_8 = arith.constant 0 : index
      %c0_9 = arith.constant 0 : index
      %c0_10 = arith.constant 0 : index
      %15 = vector.load %arg11[%c0_8, %c0_9, %c0_10] : memref<4x8x1xf32, #tpu.memory_space<vmem>>, vector<4x8x1xf32>
      tpu.vector_store %arg11[%c0_8, %c0_9, %c0_10], %14 {strides = array<i32>} : memref<4x8x1xf32, #tpu.memory_space<vmem>>, vector<4x8x1xf32>,
      %cst_11 = arith.constant 0.000000e+00 : f32
      %16 = vector.broadcast %cst_11 : f32 to vector<4x8x8xf32>
      %c0_12 = arith.constant 0 : index
      %c0_13 = arith.constant 0 : index
      %c0_14 = arith.constant 0 : index
      %17 = vector.load %arg12[%c0_12, %c0_13, %c0_14] : memref<4x8x8xf32, #tpu.memory_space<vmem>>, vector<4x8x8xf32>
      tpu.vector_store %arg12[%c0_12, %c0_13, %c0_14], %16 {strides = array<i32>} : memref<4x8x8xf32, #tpu.memory_space<vmem>>, vector<4x8x8xf32>,
    } else {
    }
    %3 = arith.cmpi slt, %arg2, %arg1 : i32
    %4 = arith.extui %3 : i1 to i32
    %c0_i32_1 = arith.constant 0 : i32
    %5 = arith.cmpi ne, %4, %c0_i32_1 : i32
    scf.if %5 {
      %c0 = arith.constant 0 : index
      %c0_5 = arith.constant 0 : index
      %c0_6 = arith.constant 0 : index
      %c0_7 = arith.constant 0 : index
      %12 = vector.load %arg3[%c0, %c0_5, %c0_6, %c0_7] : memref<1x4x8x8xbf16, #tpu.memory_space<vmem>>, vector<1x4x8x8xbf16>
      %13 = vector.shape_cast %12 : vector<1x4x8x8xbf16> to vector<4x8x8xbf16>
      %c0_8 = arith.constant 0 : index
      %c0_9 = arith.constant 0 : index
      %c0_10 = arith.constant 0 : index
      %c0_11 = arith.constant 0 : index
      %14 = vector.load %arg4[%c0_8, %c0_9, %c0_10, %c0_11] : memref<1x4x8x8xbf16, #tpu.memory_space<vmem>>, vector<1x4x8x8xbf16>
      %15 = vector.shape_cast %14 : vector<1x4x8x8xbf16> to vector<4x8x8xbf16>
      "tpu.trace_start"() <{level = 10 : i32, message = "hqd,hkd->hqk"}> : () -> ()
      %cst = arith.constant dense<0.000000e+00> : vector<4x8x8xf32>
      %16 = tpu.matmul %13, %15, %cst {dimension_numbers = #tpu.dot_dimension_numbers<[2], [2], [1], [1], [0, 0, 0, 1, 1, 1], [0], [0]>} : vector<4x8x8xbf16>, vector<4x8x8xbf16>, vector<4x8x8xf32> -> vector<4x8x8xf32>
      "tpu.trace_stop"() : () -> ()
      %c0_12 = arith.constant 0 : index
      %c0_13 = arith.constant 0 : index
      %c0_14 = arith.constant 0 : index
      %17 = vector.load %arg10[%c0_12, %c0_13, %c0_14] : memref<4x8x1xf32, #tpu.memory_space<vmem>>, vector<4x8x1xf32>
      %cst_15 = arith.constant dense<0xFF800000> : vector<4x8xf32>
      %18 = vector.multi_reduction <maximumf>, %16, %cst_15 [2] : vector<4x8x8xf32> to vector<4x8xf32>
      %19 = vector.shape_cast %18 : vector<4x8xf32> to vector<4x8x1xf32>
      %20 = arith.maximumf %17, %19 : vector<4x8x1xf32>
      %21 = arith.subf %17, %20 : vector<4x8x1xf32>
      %22 = math.exp %21 : vector<4x8x1xf32>
      %23 = vector.broadcast %20 : vector<4x8x1xf32> to vector<4x8x8xf32>
      %24 = arith.subf %16, %23 : vector<4x8x8xf32>
      %25 = math.exp %24 : vector<4x8x8xf32>
      %c0_16 = arith.constant 0 : index
      %c0_17 = arith.constant 0 : index
      %c0_18 = arith.constant 0 : index
      %26 = vector.load %arg11[%c0_16, %c0_17, %c0_18] : memref<4x8x1xf32, #tpu.memory_space<vmem>>, vector<4x8x1xf32>
      %27 = arith.mulf %22, %26 : vector<4x8x1xf32>
      %cst_19 = arith.constant dense<0.000000e+00> : vector<4x8xf32>
      %28 = vector.multi_reduction <add>, %25, %cst_19 [2] : vector<4x8x8xf32> to vector<4x8xf32>
      %29 = vector.shape_cast %28 : vector<4x8xf32> to vector<4x8x1xf32>
      %30 = arith.addf %27, %29 : vector<4x8x1xf32>
      %c0_20 = arith.constant 0 : index
      %c0_21 = arith.constant 0 : index
      %c0_22 = arith.constant 0 : index
      %31 = vector.load %arg11[%c0_20, %c0_21, %c0_22] : memref<4x8x1xf32, #tpu.memory_space<vmem>>, vector<4x8x1xf32>
      tpu.vector_store %arg11[%c0_20, %c0_21, %c0_22], %30 {strides = array<i32>} : memref<4x8x1xf32, #tpu.memory_space<vmem>>, vector<4x8x1xf32>,
      %c0_23 = arith.constant 0 : index
      %c0_24 = arith.constant 0 : index
      %c0_25 = arith.constant 0 : index
      %32 = vector.load %arg12[%c0_23, %c0_24, %c0_25] : memref<4x8x8xf32, #tpu.memory_space<vmem>>, vector<4x8x8xf32>
      %33 = vector.broadcast %22 : vector<4x8x1xf32> to vector<4x8x8xf32>
      %34 = arith.mulf %33, %32 : vector<4x8x8xf32>
      %35 = arith.truncf %25 : vector<4x8x8xf32> to vector<4x8x8xbf16>
      %c0_26 = arith.constant 0 : index
      %c0_27 = arith.constant 0 : index
      %c0_28 = arith.constant 0 : index
      %c0_29 = arith.constant 0 : index
      %36 = vector.load %arg5[%c0_26, %c0_27, %c0_28, %c0_29] : memref<1x4x8x8xbf16, #tpu.memory_space<vmem>>, vector<1x4x8x8xbf16>
      %37 = vector.shape_cast %36 : vector<1x4x8x8xbf16> to vector<4x8x8xbf16>
      "tpu.trace_start"() <{level = 10 : i32, message = "hqk,hkd->hqd"}> : () -> ()
      %cst_30 = arith.constant dense<0.000000e+00> : vector<4x8x8xf32>
      %38 = tpu.matmul %35, %37, %cst_30 {dimension_numbers = #tpu.dot_dimension_numbers<[2], [1], [1], [2], [0, 0, 0, 1, 1, 2], [0], [0]>} : vector<4x8x8xbf16>, vector<4x8x8xbf16>, vector<4x8x8xf32> -> vector<4x8x8xf32>
      "tpu.trace_stop"() : () -> ()
      %39 = arith.addf %34, %38 : vector<4x8x8xf32>
      %c0_31 = arith.constant 0 : index
      %c0_32 = arith.constant 0 : index
      %c0_33 = arith.constant 0 : index
      %40 = vector.load %arg12[%c0_31, %c0_32, %c0_33] : memref<4x8x8xf32, #tpu.memory_space<vmem>>, vector<4x8x8xf32>
      tpu.vector_store %arg12[%c0_31, %c0_32, %c0_33], %39 {strides = array<i32>} : memref<4x8x8xf32, #tpu.memory_space<vmem>>, vector<4x8x8xf32>,
      %c0_34 = arith.constant 0 : index
      %c0_35 = arith.constant 0 : index
      %c0_36 = arith.constant 0 : index
      %41 = vector.load %arg10[%c0_34, %c0_35, %c0_36] : memref<4x8x1xf32, #tpu.memory_space<vmem>>, vector<4x8x1xf32>
      tpu.vector_store %arg10[%c0_34, %c0_35, %c0_36], %20 {strides = array<i32>} : memref<4x8x1xf32, #tpu.memory_space<vmem>>, vector<4x8x1xf32>,
    } else {
    }
    %6 = arith.cmpi eq, %arg2, %arg1 : i32
    %7 = arith.extui %6 : i1 to i32
    %c0_i32_2 = arith.constant 0 : i32
    %8 = arith.cmpi ne, %7, %c0_i32_2 : i32
    scf.if %8 {
      %12 = tpu.iota {dimensions = array<i32: 0>} : vector<8x8xi32>
      %13 = tpu.iota {dimensions = array<i32: 1>} : vector<8x8xi32>
      %14 = arith.cmpi sgt, %13, %12 : vector<8x8xi32>
      %15 = vector.shape_cast %14 : vector<8x8xi1> to vector<1x8x8xi1>
      %c0 = arith.constant 0 : index
      %c0_5 = arith.constant 0 : index
      %c0_6 = arith.constant 0 : index
      %c0_7 = arith.constant 0 : index
      %16 = vector.load %arg3[%c0, %c0_5, %c0_6, %c0_7] : memref<1x4x8x8xbf16, #tpu.memory_space<vmem>>, vector<1x4x8x8xbf16>
      %17 = vector.shape_cast %16 : vector<1x4x8x8xbf16> to vector<4x8x8xbf16>
      %c0_8 = arith.constant 0 : index
      %c0_9 = arith.constant 0 : index
      %c0_10 = arith.constant 0 : index
      %c0_11 = arith.constant 0 : index
      %18 = vector.load %arg4[%c0_8, %c0_9, %c0_10, %c0_11] : memref<1x4x8x8xbf16, #tpu.memory_space<vmem>>, vector<1x4x8x8xbf16>
      %19 = vector.shape_cast %18 : vector<1x4x8x8xbf16> to vector<4x8x8xbf16>
      "tpu.trace_start"() <{level = 10 : i32, message = "hqd,hkd->hqk"}> : () -> ()
      %cst = arith.constant dense<0.000000e+00> : vector<4x8x8xf32>
      %20 = tpu.matmul %17, %19, %cst {dimension_numbers = #tpu.dot_dimension_numbers<[2], [2], [1], [1], [0, 0, 0, 1, 1, 1], [0], [0]>} : vector<4x8x8xbf16>, vector<4x8x8xbf16>, vector<4x8x8xf32> -> vector<4x8x8xf32>
      %cst_12 = arith.constant -1.000000e+30 : f32
      "tpu.trace_stop"() : () -> ()
      %21 = vector.shape_cast %15 : vector<1x8x8xi1> to vector<1x8x8xi1>
      %22 = vector.broadcast %21 : vector<1x8x8xi1> to vector<4x8x8xi1>
      %23 = vector.broadcast %cst_12 : f32 to vector<4x8x8xf32>
      %24 = arith.select %22, %23, %20 : vector<4x8x8xi1>, vector<4x8x8xf32>
      %c0_13 = arith.constant 0 : index
      %c0_14 = arith.constant 0 : index
      %c0_15 = arith.constant 0 : index
      %25 = vector.load %arg10[%c0_13, %c0_14, %c0_15] : memref<4x8x1xf32, #tpu.memory_space<vmem>>, vector<4x8x1xf32>
      %cst_16 = arith.constant dense<0xFF800000> : vector<4x8xf32>
      %26 = vector.multi_reduction <maximumf>, %24, %cst_16 [2] : vector<4x8x8xf32> to vector<4x8xf32>
      %27 = vector.shape_cast %26 : vector<4x8xf32> to vector<4x8x1xf32>
      %28 = arith.maximumf %25, %27 : vector<4x8x1xf32>
      %29 = arith.subf %25, %28 : vector<4x8x1xf32>
      %30 = math.exp %29 : vector<4x8x1xf32>
      %31 = vector.broadcast %28 : vector<4x8x1xf32> to vector<4x8x8xf32>
      %32 = arith.subf %24, %31 : vector<4x8x8xf32>
      %33 = math.exp %32 : vector<4x8x8xf32>
      %c0_17 = arith.constant 0 : index
      %c0_18 = arith.constant 0 : index
      %c0_19 = arith.constant 0 : index
      %34 = vector.load %arg11[%c0_17, %c0_18, %c0_19] : memref<4x8x1xf32, #tpu.memory_space<vmem>>, vector<4x8x1xf32>
      %35 = arith.mulf %30, %34 : vector<4x8x1xf32>
      %cst_20 = arith.constant dense<0.000000e+00> : vector<4x8xf32>
      %36 = vector.multi_reduction <add>, %33, %cst_20 [2] : vector<4x8x8xf32> to vector<4x8xf32>
      %37 = vector.shape_cast %36 : vector<4x8xf32> to vector<4x8x1xf32>
      %38 = arith.addf %35, %37 : vector<4x8x1xf32>
      %c0_21 = arith.constant 0 : index
      %c0_22 = arith.constant 0 : index
      %c0_23 = arith.constant 0 : index
      %39 = vector.load %arg11[%c0_21, %c0_22, %c0_23] : memref<4x8x1xf32, #tpu.memory_space<vmem>>, vector<4x8x1xf32>
      tpu.vector_store %arg11[%c0_21, %c0_22, %c0_23], %38 {strides = array<i32>} : memref<4x8x1xf32, #tpu.memory_space<vmem>>, vector<4x8x1xf32>,
      %c0_24 = arith.constant 0 : index
      %c0_25 = arith.constant 0 : index
      %c0_26 = arith.constant 0 : index
      %40 = vector.load %arg12[%c0_24, %c0_25, %c0_26] : memref<4x8x8xf32, #tpu.memory_space<vmem>>, vector<4x8x8xf32>
      %41 = vector.broadcast %30 : vector<4x8x1xf32> to vector<4x8x8xf32>
      %42 = arith.mulf %41, %40 : vector<4x8x8xf32>
      %43 = arith.truncf %33 : vector<4x8x8xf32> to vector<4x8x8xbf16>
      %c0_27 = arith.constant 0 : index
      %c0_28 = arith.constant 0 : index
      %c0_29 = arith.constant 0 : index
      %c0_30 = arith.constant 0 : index
      %44 = vector.load %arg5[%c0_27, %c0_28, %c0_29, %c0_30] : memref<1x4x8x8xbf16, #tpu.memory_space<vmem>>, vector<1x4x8x8xbf16>
      %45 = vector.shape_cast %44 : vector<1x4x8x8xbf16> to vector<4x8x8xbf16>
      "tpu.trace_start"() <{level = 10 : i32, message = "hqk,hkd->hqd"}> : () -> ()
      %cst_31 = arith.constant dense<0.000000e+00> : vector<4x8x8xf32>
      %46 = tpu.matmul %43, %45, %cst_31 {dimension_numbers = #tpu.dot_dimension_numbers<[2], [1], [1], [2], [0, 0, 0, 1, 1, 2], [0], [0]>} : vector<4x8x8xbf16>, vector<4x8x8xbf16>, vector<4x8x8xf32> -> vector<4x8x8xf32>
      "tpu.trace_stop"() : () -> ()
      %47 = arith.addf %42, %46 : vector<4x8x8xf32>
      %c0_32 = arith.constant 0 : index
      %c0_33 = arith.constant 0 : index
      %c0_34 = arith.constant 0 : index
      %48 = vector.load %arg12[%c0_32, %c0_33, %c0_34] : memref<4x8x8xf32, #tpu.memory_space<vmem>>, vector<4x8x8xf32>
      tpu.vector_store %arg12[%c0_32, %c0_33, %c0_34], %47 {strides = array<i32>} : memref<4x8x8xf32, #tpu.memory_space<vmem>>, vector<4x8x8xf32>,
      %c0_35 = arith.constant 0 : index
      %c0_36 = arith.constant 0 : index
      %c0_37 = arith.constant 0 : index
      %49 = vector.load %arg10[%c0_35, %c0_36, %c0_37] : memref<4x8x1xf32, #tpu.memory_space<vmem>>, vector<4x8x1xf32>
      tpu.vector_store %arg10[%c0_35, %c0_36, %c0_37], %28 {strides = array<i32>} : memref<4x8x1xf32, #tpu.memory_space<vmem>>, vector<4x8x1xf32>,
    } else {
    }
    %c0_i32_3 = arith.constant 0 : i32
    %9 = arith.cmpi eq, %arg2, %c0_i32_3 : i32
    %10 = arith.extui %9 : i1 to i32
    %c0_i32_4 = arith.constant 0 : i32
    %11 = arith.cmpi ne, %10, %c0_i32_4 : i32
    scf.if %11 {
      %c0 = arith.constant 0 : index
      %c0_5 = arith.constant 0 : index
      %c0_6 = arith.constant 0 : index
      %12 = vector.load %arg12[%c0, %c0_5, %c0_6] : memref<4x8x8xf32, #tpu.memory_space<vmem>>, vector<4x8x8xf32>
      %c0_7 = arith.constant 0 : index
      %c0_8 = arith.constant 0 : index
      %c0_9 = arith.constant 0 : index
      %13 = vector.load %arg11[%c0_7, %c0_8, %c0_9] : memref<4x8x1xf32, #tpu.memory_space<vmem>>, vector<4x8x1xf32>
      %14 = tpu.reciprocal %13 {approx = true} : vector<4x8x1xf32> -> vector<4x8x1xf32>
      %15 = vector.broadcast %14 : vector<4x8x1xf32> to vector<4x8x8xf32>
      %16 = arith.mulf %12, %15 : vector<4x8x8xf32>
      %c0_10 = arith.constant 0 : index
      %c0_11 = arith.constant 0 : index
      %17 = vector.load %arg8[%c0_10, %c0_11] : memref<1x32xf32, #tpu.memory_space<vmem>>, vector<1x32xf32>
      %18 = vector.extract_strided_slice %16 {offsets = [0, 0, 0], sizes = [1, 8, 8], strides = [1, 1, 1]} : vector<4x8x8xf32> to vector<1x8x8xf32>
      %19 = vector.shape_cast %18 : vector<1x8x8xf32> to vector<8x8xf32>
      %20 = arith.truncf %19 : vector<8x8xf32> to vector<8x8xbf16>
      %c0_12 = arith.constant 0 : index
      %c0_13 = arith.constant 0 : index
      %c0_14 = arith.constant 0 : index
      %21 = vector.load %arg7[%c0_12, %c0_13, %c0_14] : memref<4x8x32xbf16, #tpu.memory_space<vmem>>, vector<1x8x32xbf16>
      %22 = vector.shape_cast %21 : vector<1x8x32xbf16> to vector<8x32xbf16>
      %cst = arith.constant dense<0.000000e+00> : vector<8x32xf32>
      %23 = tpu.matmul %20, %22, %cst {dimension_numbers = #tpu.dot_dimension_numbers<[1], [0], [0], [1], [0, 0, 1, 1], [], []>} : vector<8x8xbf16>, vector<8x32xbf16>, vector<8x32xf32> -> vector<8x32xf32>
      %24 = vector.broadcast %17 : vector<1x32xf32> to vector<8x32xf32>
      %25 = arith.addf %24, %23 : vector<8x32xf32>
      %26 = vector.extract_strided_slice %16 {offsets = [1, 0, 0], sizes = [1, 8, 8], strides = [1, 1, 1]} : vector<4x8x8xf32> to vector<1x8x8xf32>
      %27 = vector.shape_cast %26 : vector<1x8x8xf32> to vector<8x8xf32>
      %28 = arith.truncf %27 : vector<8x8xf32> to vector<8x8xbf16>
      %c1 = arith.constant 1 : index
      %c0_15 = arith.constant 0 : index
      %c0_16 = arith.constant 0 : index
      %29 = vector.load %arg7[%c1, %c0_15, %c0_16] : memref<4x8x32xbf16, #tpu.memory_space<vmem>>, vector<1x8x32xbf16>
      %30 = vector.shape_cast %29 : vector<1x8x32xbf16> to vector<8x32xbf16>
      %cst_17 = arith.constant dense<0.000000e+00> : vector<8x32xf32>
      %31 = tpu.matmul %28, %30, %cst_17 {dimension_numbers = #tpu.dot_dimension_numbers<[1], [0], [0], [1], [0, 0, 1, 1], [], []>} : vector<8x8xbf16>, vector<8x32xbf16>, vector<8x32xf32> -> vector<8x32xf32>
      %32 = arith.addf %25, %31 : vector<8x32xf32>
      %33 = vector.extract_strided_slice %16 {offsets = [2, 0, 0], sizes = [1, 8, 8], strides = [1, 1, 1]} : vector<4x8x8xf32> to vector<1x8x8xf32>
      %34 = vector.shape_cast %33 : vector<1x8x8xf32> to vector<8x8xf32>
      %35 = arith.truncf %34 : vector<8x8xf32> to vector<8x8xbf16>
      %c2 = arith.constant 2 : index
      %c0_18 = arith.constant 0 : index
      %c0_19 = arith.constant 0 : index
      %36 = vector.load %arg7[%c2, %c0_18, %c0_19] : memref<4x8x32xbf16, #tpu.memory_space<vmem>>, vector<1x8x32xbf16>
      %37 = vector.shape_cast %36 : vector<1x8x32xbf16> to vector<8x32xbf16>
      %cst_20 = arith.constant dense<0.000000e+00> : vector<8x32xf32>
      %38 = tpu.matmul %35, %37, %cst_20 {dimension_numbers = #tpu.dot_dimension_numbers<[1], [0], [0], [1], [0, 0, 1, 1], [], []>} : vector<8x8xbf16>, vector<8x32xbf16>, vector<8x32xf32> -> vector<8x32xf32>
      %39 = arith.addf %32, %38 : vector<8x32xf32>
      %40 = vector.extract_strided_slice %16 {offsets = [3, 0, 0], sizes = [1, 8, 8], strides = [1, 1, 1]} : vector<4x8x8xf32> to vector<1x8x8xf32>
      %41 = vector.shape_cast %40 : vector<1x8x8xf32> to vector<8x8xf32>
      %42 = arith.truncf %41 : vector<8x8xf32> to vector<8x8xbf16>
      %c3 = arith.constant 3 : index
      %c0_21 = arith.constant 0 : index
      %c0_22 = arith.constant 0 : index
      %43 = vector.load %arg7[%c3, %c0_21, %c0_22] : memref<4x8x32xbf16, #tpu.memory_space<vmem>>, vector<1x8x32xbf16>
      %44 = vector.shape_cast %43 : vector<1x8x32xbf16> to vector<8x32xbf16>
      %cst_23 = arith.constant dense<0.000000e+00> : vector<8x32xf32>
      %45 = tpu.matmul %42, %44, %cst_23 {dimension_numbers = #tpu.dot_dimension_numbers<[1], [0], [0], [1], [0, 0, 1, 1], [], []>} : vector<8x8xbf16>, vector<8x32xbf16>, vector<8x32xf32> -> vector<8x32xf32>
      %46 = arith.addf %39, %45 : vector<8x32xf32>
      %c0_24 = arith.constant 0 : index
      %c0_25 = arith.constant 0 : index
      %c0_26 = arith.constant 0 : index
      %47 = vector.load %arg6[%c0_24, %c0_25, %c0_26] : memref<1x8x32xf32, #tpu.memory_space<vmem>>, vector<1x8x32xf32>
      %48 = vector.shape_cast %47 : vector<1x8x32xf32> to vector<8x32xf32>
      %49 = arith.addf %48, %46 : vector<8x32xf32>
      %c0_27 = arith.constant 0 : index
      %c0_28 = arith.constant 0 : index
      %c0_29 = arith.constant 0 : index
      %50 = vector.load %arg9[%c0_27, %c0_28, %c0_29] : memref<1x8x32xf32, #tpu.memory_space<vmem>>, vector<1x8x32xf32>
      %51 = vector.shape_cast %50 : vector<1x8x32xf32> to vector<8x32xf32>
      %52 = vector.shape_cast %49 : vector<8x32xf32> to vector<1x8x32xf32>
      tpu.vector_store %arg9[%c0_27, %c0_28, %c0_29], %52 {strides = array<i32>} : memref<1x8x32xf32, #tpu.memory_space<vmem>>, vector<1x8x32xf32>,
    } else {
    }
    return
  }
  func.func @transform_0(%arg0: i32, %arg1: i32, %arg2: i32) -> (i32, i32, i32, i32) {
    %c0_i32 = arith.constant 0 : i32
    %c0_i32_0 = arith.constant 0 : i32
    %c0_i32_1 = arith.constant 0 : i32
    return %arg0, %c0_i32, %arg1, %c0_i32_0 : i32, i32, i32, i32
  }
  func.func @transform_1(%arg0: i32, %arg1: i32, %arg2: i32) -> (i32, i32, i32, i32) {
    %0 = arith.minsi %arg1, %arg2 : i32
    %c0_i32 = arith.constant 0 : i32
    %c0_i32_0 = arith.constant 0 : i32
    %c0_i32_1 = arith.constant 0 : i32
    return %arg0, %c0_i32, %0, %c0_i32_0 : i32, i32, i32, i32
  }
  func.func @transform_2(%arg0: i32, %arg1: i32, %arg2: i32) -> (i32, i32, i32, i32) {
    %0 = arith.minsi %arg1, %arg2 : i32
    %c0_i32 = arith.constant 0 : i32
    %c0_i32_0 = arith.constant 0 : i32
    %c0_i32_1 = arith.constant 0 : i32
    return %arg0, %c0_i32, %0, %c0_i32_0 : i32, i32, i32, i32
  }
  func.func @transform_3(%arg0: i32, %arg1: i32, %arg2: i32) -> (i32, i32, i32) {
    %c0_i32 = arith.constant 0 : i32
    %c0_i32_0 = arith.constant 0 : i32
    return %arg0, %arg1, %c0_i32 : i32, i32, i32
  }
  func.func @transform_4(%arg0: i32, %arg1: i32, %arg2: i32) -> (i32, i32, i32) {
    %c0_i32 = arith.constant 0 : i32
    %c0_i32_0 = arith.constant 0 : i32
    %c0_i32_1 = arith.constant 0 : i32
    %c0_i32_2 = arith.constant 0 : i32
    return %c0_i32, %c0_i32_0, %c0_i32_1 : i32, i32, i32
  }
  func.func @transform_5(%arg0: i32, %arg1: i32, %arg2: i32) -> (i32, i32) {
    %c0_i32 = arith.constant 0 : i32
    %c0_i32_0 = arith.constant 0 : i32
    %c0_i32_1 = arith.constant 0 : i32
    return %c0_i32, %c0_i32_0 : i32, i32
  }
  func.func @transform_6(%arg0: i32, %arg1: i32, %arg2: i32) -> (i32, i32, i32) {
    %c0_i32 = arith.constant 0 : i32
    %c0_i32_0 = arith.constant 0 : i32
    return %arg0, %arg1, %c0_i32 : i32, i32, i32
  }
}

module attributes {stable_mosaic.version = 11 : i64} {
  func.func @mlp_kernel(%arg0: i32, %arg1: i32, %arg2: memref<16x32xf32, #tpu.memory_space<vmem>>, %arg3: memref<1x32xf32, #tpu.memory_space<vmem>>, %arg4: memref<1x32xf32, #tpu.memory_space<vmem>>, %arg5: memref<32x128xbf16, #tpu.memory_space<vmem>>, %arg6: memref<1x128xf32, #tpu.memory_space<vmem>>, %arg7: memref<128x32xbf16, #tpu.memory_space<vmem>>, %arg8: memref<1x32xf32, #tpu.memory_space<vmem>>, %arg9: memref<1x32xf32, #tpu.memory_space<vmem>>, %arg10: memref<1x32xf32, #tpu.memory_space<vmem>>, %arg11: memref<16x32xf32, #tpu.memory_space<vmem>>, %arg12: memref<16x32xbf16, #tpu.memory_space<vmem>>, %arg13: memref<16x32xf32, #tpu.memory_space<vmem>>) attributes {dimension_semantics = [#tpu.dimension_semantics<parallel>, #tpu.dimension_semantics<arbitrary>], iteration_bounds = array<i64: 1, 1>, scalar_prefetch = 0 : i64, scratch_operands = 2 : i64, tpu.core_type = #tpu.core_type<tc>, window_params = [{transform_indices = @transform_0, window_bounds = array<i64: 16, 32>}, {pipeline_mode = #tpu.pipeline_mode<synchronous>, transform_indices = @transform_1, window_bounds = array<i64: 1, 32>}, {pipeline_mode = #tpu.pipeline_mode<synchronous>, transform_indices = @transform_2, window_bounds = array<i64: 1, 32>}, {transform_indices = @transform_3, window_bounds = array<i64: 32, 128>}, {transform_indices = @transform_4, window_bounds = array<i64: 1, 128>}, {transform_indices = @transform_5, window_bounds = array<i64: 128, 32>}, {pipeline_mode = #tpu.pipeline_mode<synchronous>, transform_indices = @transform_6, window_bounds = array<i64: 1, 32>}, {pipeline_mode = #tpu.pipeline_mode<synchronous>, transform_indices = @transform_7, window_bounds = array<i64: 1, 32>}, {pipeline_mode = #tpu.pipeline_mode<synchronous>, transform_indices = @transform_8, window_bounds = array<i64: 1, 32>}, {transform_indices = @transform_9, window_bounds = array<i64: 16, 32>}]} {
    %c0_i32 = arith.constant 0 : i32
    %0 = arith.cmpi eq, %arg1, %c0_i32 : i32
    %1 = arith.extui %0 : i1 to i32
    %c0_i32_0 = arith.constant 0 : i32
    %2 = arith.cmpi ne, %1, %c0_i32_0 : i32
    scf.if %2 {
      %c0_18 = arith.constant 0 : index
      %c0_19 = arith.constant 0 : index
      %26 = vector.load %arg2[%c0_18, %c0_19] : memref<16x32xf32, #tpu.memory_space<vmem>>, vector<16x32xf32>
      %c0_20 = arith.constant 0 : index
      %c0_21 = arith.constant 0 : index
      %27 = vector.load %arg3[%c0_20, %c0_21] : memref<1x32xf32, #tpu.memory_space<vmem>>, vector<1x32xf32>
      %c0_22 = arith.constant 0 : index
      %c0_23 = arith.constant 0 : index
      %28 = vector.load %arg4[%c0_22, %c0_23] : memref<1x32xf32, #tpu.memory_space<vmem>>, vector<1x32xf32>
      %cst_24 = arith.constant dense<0.000000e+00> : vector<16xf32>
      %29 = vector.multi_reduction <add>, %26, %cst_24 [1] : vector<16x32xf32> to vector<16xf32>
      %30 = vector.shape_cast %29 : vector<16xf32> to vector<16x1xf32>
      %cst_25 = arith.constant 3.200000e+01 : f32
      %31 = vector.broadcast %cst_25 : f32 to vector<16x1xf32>
      %32 = arith.divf %30, %31 : vector<16x1xf32>
      %33 = vector.broadcast %32 : vector<16x1xf32> to vector<16x32xf32>
      %34 = arith.subf %26, %33 : vector<16x32xf32>
      %35 = arith.mulf %34, %34 : vector<16x32xf32>
      %cst_26 = arith.constant dense<0.000000e+00> : vector<16xf32>
      %36 = vector.multi_reduction <add>, %35, %cst_26 [1] : vector<16x32xf32> to vector<16xf32>
      %37 = vector.shape_cast %36 : vector<16xf32> to vector<16x1xf32>
      %cst_27 = arith.constant 3.200000e+01 : f32
      %38 = vector.broadcast %cst_27 : f32 to vector<16x1xf32>
      %39 = arith.divf %37, %38 : vector<16x1xf32>
      %40 = vector.broadcast %32 : vector<16x1xf32> to vector<16x32xf32>
      %41 = arith.subf %26, %40 : vector<16x32xf32>
      %cst_28 = arith.constant 9.99999997E-7 : f32
      %42 = vector.broadcast %cst_28 : f32 to vector<16x1xf32>
      %43 = arith.addf %39, %42 : vector<16x1xf32>
      %44 = math.rsqrt %43 : vector<16x1xf32>
      %45 = vector.broadcast %44 : vector<16x1xf32> to vector<16x32xf32>
      %46 = arith.mulf %41, %45 : vector<16x32xf32>
      %47 = vector.broadcast %27 : vector<1x32xf32> to vector<16x32xf32>
      %48 = arith.mulf %46, %47 : vector<16x32xf32>
      %49 = vector.broadcast %28 : vector<1x32xf32> to vector<16x32xf32>
      %50 = arith.addf %48, %49 : vector<16x32xf32>
      %51 = arith.truncf %50 : vector<16x32xf32> to vector<16x32xbf16>
      %c0_29 = arith.constant 0 : index
      %c0_30 = arith.constant 0 : index
      %52 = vector.load %arg12[%c0_29, %c0_30] : memref<16x32xbf16, #tpu.memory_space<vmem>>, vector<16x32xbf16>
      tpu.vector_store %arg12[%c0_29, %c0_30], %51 {strides = array<i32>} : memref<16x32xbf16, #tpu.memory_space<vmem>>, vector<16x32xbf16>,
      %cst_31 = arith.constant 0.000000e+00 : f32
      %53 = vector.broadcast %cst_31 : f32 to vector<16x32xf32>
      %c0_32 = arith.constant 0 : index
      %c0_33 = arith.constant 0 : index
      %54 = vector.load %arg13[%c0_32, %c0_33] : memref<16x32xf32, #tpu.memory_space<vmem>>, vector<16x32xf32>
      tpu.vector_store %arg13[%c0_32, %c0_33], %53 {strides = array<i32>} : memref<16x32xf32, #tpu.memory_space<vmem>>, vector<16x32xf32>,
    } else {
    }
    %c0 = arith.constant 0 : index
    %c0_1 = arith.constant 0 : index
    %3 = vector.load %arg12[%c0, %c0_1] : memref<16x32xbf16, #tpu.memory_space<vmem>>, vector<16x32xbf16>
    %c0_2 = arith.constant 0 : index
    %c0_3 = arith.constant 0 : index
    %4 = vector.load %arg5[%c0_2, %c0_3] : memref<32x128xbf16, #tpu.memory_space<vmem>>, vector<32x128xbf16>
    %cst = arith.constant dense<0.000000e+00> : vector<16x128xf32>
    %5 = tpu.matmul %3, %4, %cst {dimension_numbers = #tpu.dot_dimension_numbers<[1], [0], [0], [1], [0, 0, 1, 1], [], []>} : vector<16x32xbf16>, vector<32x128xbf16>, vector<16x128xf32> -> vector<16x128xf32>
    %c0_4 = arith.constant 0 : index
    %c0_5 = arith.constant 0 : index
    %6 = vector.load %arg6[%c0_4, %c0_5] : memref<1x128xf32, #tpu.memory_space<vmem>>, vector<1x128xf32>
    %7 = vector.broadcast %6 : vector<1x128xf32> to vector<16x128xf32>
    %8 = arith.addf %5, %7 : vector<16x128xf32>
    %cst_6 = arith.constant 5.000000e-01 : f32
    %9 = vector.broadcast %cst_6 : f32 to vector<16x128xf32>
    %10 = arith.mulf %9, %8 : vector<16x128xf32>
    %cst_7 = arith.constant 0.707106769 : f32
    %11 = vector.broadcast %cst_7 : f32 to vector<16x128xf32>
    %12 = arith.mulf %8, %11 : vector<16x128xf32>
    %13 = math.erf %12 : vector<16x128xf32>
    %cst_8 = arith.constant 1.000000e+00 : f32
    %14 = vector.broadcast %cst_8 : f32 to vector<16x128xf32>
    %15 = arith.addf %14, %13 : vector<16x128xf32>
    %16 = arith.mulf %10, %15 : vector<16x128xf32>
    %c0_9 = arith.constant 0 : index
    %c0_10 = arith.constant 0 : index
    %17 = vector.load %arg13[%c0_9, %c0_10] : memref<16x32xf32, #tpu.memory_space<vmem>>, vector<16x32xf32>
    %18 = arith.truncf %16 : vector<16x128xf32> to vector<16x128xbf16>
    %c0_11 = arith.constant 0 : index
    %c0_12 = arith.constant 0 : index
    %19 = vector.load %arg7[%c0_11, %c0_12] : memref<128x32xbf16, #tpu.memory_space<vmem>>, vector<128x32xbf16>
    %cst_13 = arith.constant dense<0.000000e+00> : vector<16x32xf32>
    %20 = tpu.matmul %18, %19, %cst_13 {dimension_numbers = #tpu.dot_dimension_numbers<[1], [0], [0], [1], [0, 0, 1, 1], [], []>} : vector<16x128xbf16>, vector<128x32xbf16>, vector<16x32xf32> -> vector<16x32xf32>
    %21 = arith.addf %17, %20 : vector<16x32xf32>
    %c0_14 = arith.constant 0 : index
    %c0_15 = arith.constant 0 : index
    %22 = vector.load %arg13[%c0_14, %c0_15] : memref<16x32xf32, #tpu.memory_space<vmem>>, vector<16x32xf32>
    tpu.vector_store %arg13[%c0_14, %c0_15], %21 {strides = array<i32>} : memref<16x32xf32, #tpu.memory_space<vmem>>, vector<16x32xf32>,
    %c0_i32_16 = arith.constant 0 : i32
    %23 = arith.cmpi eq, %arg1, %c0_i32_16 : i32
    %24 = arith.extui %23 : i1 to i32
    %c0_i32_17 = arith.constant 0 : i32
    %25 = arith.cmpi ne, %24, %c0_i32_17 : i32
    scf.if %25 {
      %c0_18 = arith.constant 0 : index
      %c0_19 = arith.constant 0 : index
      %26 = vector.load %arg2[%c0_18, %c0_19] : memref<16x32xf32, #tpu.memory_space<vmem>>, vector<16x32xf32>
      %c0_20 = arith.constant 0 : index
      %c0_21 = arith.constant 0 : index
      %27 = vector.load %arg13[%c0_20, %c0_21] : memref<16x32xf32, #tpu.memory_space<vmem>>, vector<16x32xf32>
      %28 = arith.addf %26, %27 : vector<16x32xf32>
      %c0_22 = arith.constant 0 : index
      %c0_23 = arith.constant 0 : index
      %29 = vector.load %arg8[%c0_22, %c0_23] : memref<1x32xf32, #tpu.memory_space<vmem>>, vector<1x32xf32>
      %30 = vector.broadcast %29 : vector<1x32xf32> to vector<16x32xf32>
      %31 = arith.addf %28, %30 : vector<16x32xf32>
      %c0_24 = arith.constant 0 : index
      %c0_25 = arith.constant 0 : index
      %32 = vector.load %arg11[%c0_24, %c0_25] : memref<16x32xf32, #tpu.memory_space<vmem>>, vector<16x32xf32>
      tpu.vector_store %arg11[%c0_24, %c0_25], %31 {strides = array<i32>} : memref<16x32xf32, #tpu.memory_space<vmem>>, vector<16x32xf32>,
    } else {
    }
    return
  }
  func.func @transform_0(%arg0: i32, %arg1: i32) -> (i32, i32) {
    %c0_i32 = arith.constant 0 : i32
    %c0_i32_0 = arith.constant 0 : i32
    return %arg0, %c0_i32 : i32, i32
  }
  func.func @transform_1(%arg0: i32, %arg1: i32) -> (i32, i32) {
    %c0_i32 = arith.constant 0 : i32
    %c0_i32_0 = arith.constant 0 : i32
    %c0_i32_1 = arith.constant 0 : i32
    return %c0_i32, %c0_i32_0 : i32, i32
  }
  func.func @transform_2(%arg0: i32, %arg1: i32) -> (i32, i32) {
    %c0_i32 = arith.constant 0 : i32
    %c0_i32_0 = arith.constant 0 : i32
    %c0_i32_1 = arith.constant 0 : i32
    return %c0_i32, %c0_i32_0 : i32, i32
  }
  func.func @transform_3(%arg0: i32, %arg1: i32) -> (i32, i32) {
    %c0_i32 = arith.constant 0 : i32
    %c0_i32_0 = arith.constant 0 : i32
    return %c0_i32, %arg1 : i32, i32
  }
  func.func @transform_4(%arg0: i32, %arg1: i32) -> (i32, i32) {
    %c0_i32 = arith.constant 0 : i32
    %c0_i32_0 = arith.constant 0 : i32
    return %c0_i32, %arg1 : i32, i32
  }
  func.func @transform_5(%arg0: i32, %arg1: i32) -> (i32, i32) {
    %c0_i32 = arith.constant 0 : i32
    %c0_i32_0 = arith.constant 0 : i32
    return %arg1, %c0_i32 : i32, i32
  }
  func.func @transform_6(%arg0: i32, %arg1: i32) -> (i32, i32) {
    %c0_i32 = arith.constant 0 : i32
    %c0_i32_0 = arith.constant 0 : i32
    %c0_i32_1 = arith.constant 0 : i32
    return %c0_i32, %c0_i32_0 : i32, i32
  }
  func.func @transform_7(%arg0: i32, %arg1: i32) -> (i32, i32) {
    %c0_i32 = arith.constant 0 : i32
    %c0_i32_0 = arith.constant 0 : i32
    %c0_i32_1 = arith.constant 0 : i32
    return %c0_i32, %c0_i32_0 : i32, i32
  }
  func.func @transform_8(%arg0: i32, %arg1: i32) -> (i32, i32) {
    %c0_i32 = arith.constant 0 : i32
    %c0_i32_0 = arith.constant 0 : i32
    %c0_i32_1 = arith.constant 0 : i32
    return %c0_i32, %c0_i32_0 : i32, i32
  }
  func.func @transform_9(%arg0: i32, %arg1: i32) -> (i32, i32) {
    %c0_i32 = arith.constant 0 : i32
    %c0_i32_0 = arith.constant 0 : i32
    return %arg0, %c0_i32 : i32, i32
  }
}

module attributes {stable_mosaic.version = 11 : i64} {
  func.func @mlp_kernel(%arg0: i32, %arg1: i32, %arg2: memref<16x32xf32, #tpu.memory_space<vmem>>, %arg3: memref<1x32xf32, #tpu.memory_space<vmem>>, %arg4: memref<1x32xf32, #tpu.memory_space<vmem>>, %arg5: memref<32x128xbf16, #tpu.memory_space<vmem>>, %arg6: memref<1x128xf32, #tpu.memory_space<vmem>>, %arg7: memref<128x32xbf16, #tpu.memory_space<vmem>>, %arg8: memref<1x32xf32, #tpu.memory_space<vmem>>, %arg9: memref<1x32xf32, #tpu.memory_space<vmem>>, %arg10: memref<1x32xf32, #tpu.memory_space<vmem>>, %arg11: memref<16x32xf32, #tpu.memory_space<vmem>>, %arg12: memref<16x32xbf16, #tpu.memory_space<vmem>>, %arg13: memref<16x32xf32, #tpu.memory_space<vmem>>) attributes {dimension_semantics = [#tpu.dimension_semantics<parallel>, #tpu.dimension_semantics<arbitrary>], iteration_bounds = array<i64: 1, 1>, scalar_prefetch = 0 : i64, scratch_operands = 2 : i64, tpu.core_type = #tpu.core_type<tc>, window_params = [{transform_indices = @transform_0, window_bounds = array<i64: 16, 32>}, {pipeline_mode = #tpu.pipeline_mode<synchronous>, transform_indices = @transform_1, window_bounds = array<i64: 1, 32>}, {pipeline_mode = #tpu.pipeline_mode<synchronous>, transform_indices = @transform_2, window_bounds = array<i64: 1, 32>}, {transform_indices = @transform_3, window_bounds = array<i64: 32, 128>}, {transform_indices = @transform_4, window_bounds = array<i64: 1, 128>}, {transform_indices = @transform_5, window_bounds = array<i64: 128, 32>}, {pipeline_mode = #tpu.pipeline_mode<synchronous>, transform_indices = @transform_6, window_bounds = array<i64: 1, 32>}, {pipeline_mode = #tpu.pipeline_mode<synchronous>, transform_indices = @transform_7, window_bounds = array<i64: 1, 32>}, {pipeline_mode = #tpu.pipeline_mode<synchronous>, transform_indices = @transform_8, window_bounds = array<i64: 1, 32>}, {transform_indices = @transform_9, window_bounds = array<i64: 16, 32>}]} {
    %c0_i32 = arith.constant 0 : i32
    %0 = arith.cmpi eq, %arg1, %c0_i32 : i32
    %1 = arith.extui %0 : i1 to i32
    %c0_i32_0 = arith.constant 0 : i32
    %2 = arith.cmpi ne, %1, %c0_i32_0 : i32
    scf.if %2 {
      %c0_18 = arith.constant 0 : index
      %c0_19 = arith.constant 0 : index
      %26 = vector.load %arg2[%c0_18, %c0_19] : memref<16x32xf32, #tpu.memory_space<vmem>>, vector<16x32xf32>
      %c0_20 = arith.constant 0 : index
      %c0_21 = arith.constant 0 : index
      %27 = vector.load %arg3[%c0_20, %c0_21] : memref<1x32xf32, #tpu.memory_space<vmem>>, vector<1x32xf32>
      %c0_22 = arith.constant 0 : index
      %c0_23 = arith.constant 0 : index
      %28 = vector.load %arg4[%c0_22, %c0_23] : memref<1x32xf32, #tpu.memory_space<vmem>>, vector<1x32xf32>
      %cst_24 = arith.constant dense<0.000000e+00> : vector<16xf32>
      %29 = vector.multi_reduction <add>, %26, %cst_24 [1] : vector<16x32xf32> to vector<16xf32>
      %30 = vector.shape_cast %29 : vector<16xf32> to vector<16x1xf32>
      %cst_25 = arith.constant 3.200000e+01 : f32
      %31 = vector.broadcast %cst_25 : f32 to vector<16x1xf32>
      %32 = arith.divf %30, %31 : vector<16x1xf32>
      %33 = vector.broadcast %32 : vector<16x1xf32> to vector<16x32xf32>
      %34 = arith.subf %26, %33 : vector<16x32xf32>
      %35 = arith.mulf %34, %34 : vector<16x32xf32>
      %cst_26 = arith.constant dense<0.000000e+00> : vector<16xf32>
      %36 = vector.multi_reduction <add>, %35, %cst_26 [1] : vector<16x32xf32> to vector<16xf32>
      %37 = vector.shape_cast %36 : vector<16xf32> to vector<16x1xf32>
      %cst_27 = arith.constant 3.200000e+01 : f32
      %38 = vector.broadcast %cst_27 : f32 to vector<16x1xf32>
      %39 = arith.divf %37, %38 : vector<16x1xf32>
      %40 = vector.broadcast %32 : vector<16x1xf32> to vector<16x32xf32>
      %41 = arith.subf %26, %40 : vector<16x32xf32>
      %cst_28 = arith.constant 9.99999997E-7 : f32
      %42 = vector.broadcast %cst_28 : f32 to vector<16x1xf32>
      %43 = arith.addf %39, %42 : vector<16x1xf32>
      %44 = math.rsqrt %43 : vector<16x1xf32>
      %45 = vector.broadcast %44 : vector<16x1xf32> to vector<16x32xf32>
      %46 = arith.mulf %41, %45 : vector<16x32xf32>
      %47 = vector.broadcast %27 : vector<1x32xf32> to vector<16x32xf32>
      %48 = arith.mulf %46, %47 : vector<16x32xf32>
      %49 = vector.broadcast %28 : vector<1x32xf32> to vector<16x32xf32>
      %50 = arith.addf %48, %49 : vector<16x32xf32>
      %51 = arith.truncf %50 : vector<16x32xf32> to vector<16x32xbf16>
      %c0_29 = arith.constant 0 : index
      %c0_30 = arith.constant 0 : index
      %52 = vector.load %arg12[%c0_29, %c0_30] : memref<16x32xbf16, #tpu.memory_space<vmem>>, vector<16x32xbf16>
      tpu.vector_store %arg12[%c0_29, %c0_30], %51 {strides = array<i32>} : memref<16x32xbf16, #tpu.memory_space<vmem>>, vector<16x32xbf16>,
      %cst_31 = arith.constant 0.000000e+00 : f32
      %53 = vector.broadcast %cst_31 : f32 to vector<16x32xf32>
      %c0_32 = arith.constant 0 : index
      %c0_33 = arith.constant 0 : index
      %54 = vector.load %arg13[%c0_32, %c0_33] : memref<16x32xf32, #tpu.memory_space<vmem>>, vector<16x32xf32>
      tpu.vector_store %arg13[%c0_32, %c0_33], %53 {strides = array<i32>} : memref<16x32xf32, #tpu.memory_space<vmem>>, vector<16x32xf32>,
    } else {
    }
    %c0 = arith.constant 0 : index
    %c0_1 = arith.constant 0 : index
    %3 = vector.load %arg12[%c0, %c0_1] : memref<16x32xbf16, #tpu.memory_space<vmem>>, vector<16x32xbf16>
    %c0_2 = arith.constant 0 : index
    %c0_3 = arith.constant 0 : index
    %4 = vector.load %arg5[%c0_2, %c0_3] : memref<32x128xbf16, #tpu.memory_space<vmem>>, vector<32x128xbf16>
    %cst = arith.constant dense<0.000000e+00> : vector<16x128xf32>
    %5 = tpu.matmul %3, %4, %cst {dimension_numbers = #tpu.dot_dimension_numbers<[1], [0], [0], [1], [0, 0, 1, 1], [], []>} : vector<16x32xbf16>, vector<32x128xbf16>, vector<16x128xf32> -> vector<16x128xf32>
    %c0_4 = arith.constant 0 : index
    %c0_5 = arith.constant 0 : index
    %6 = vector.load %arg6[%c0_4, %c0_5] : memref<1x128xf32, #tpu.memory_space<vmem>>, vector<1x128xf32>
    %7 = vector.broadcast %6 : vector<1x128xf32> to vector<16x128xf32>
    %8 = arith.addf %5, %7 : vector<16x128xf32>
    %cst_6 = arith.constant 5.000000e-01 : f32
    %9 = vector.broadcast %cst_6 : f32 to vector<16x128xf32>
    %10 = arith.mulf %9, %8 : vector<16x128xf32>
    %cst_7 = arith.constant 0.707106769 : f32
    %11 = vector.broadcast %cst_7 : f32 to vector<16x128xf32>
    %12 = arith.mulf %8, %11 : vector<16x128xf32>
    %13 = math.erf %12 : vector<16x128xf32>
    %cst_8 = arith.constant 1.000000e+00 : f32
    %14 = vector.broadcast %cst_8 : f32 to vector<16x128xf32>
    %15 = arith.addf %14, %13 : vector<16x128xf32>
    %16 = arith.mulf %10, %15 : vector<16x128xf32>
    %c0_9 = arith.constant 0 : index
    %c0_10 = arith.constant 0 : index
    %17 = vector.load %arg13[%c0_9, %c0_10] : memref<16x32xf32, #tpu.memory_space<vmem>>, vector<16x32xf32>
    %18 = arith.truncf %16 : vector<16x128xf32> to vector<16x128xbf16>
    %c0_11 = arith.constant 0 : index
    %c0_12 = arith.constant 0 : index
    %19 = vector.load %arg7[%c0_11, %c0_12] : memref<128x32xbf16, #tpu.memory_space<vmem>>, vector<128x32xbf16>
    %cst_13 = arith.constant dense<0.000000e+00> : vector<16x32xf32>
    %20 = tpu.matmul %18, %19, %cst_13 {dimension_numbers = #tpu.dot_dimension_numbers<[1], [0], [0], [1], [0, 0, 1, 1], [], []>} : vector<16x128xbf16>, vector<128x32xbf16>, vector<16x32xf32> -> vector<16x32xf32>
    %21 = arith.addf %17, %20 : vector<16x32xf32>
    %c0_14 = arith.constant 0 : index
    %c0_15 = arith.constant 0 : index
    %22 = vector.load %arg13[%c0_14, %c0_15] : memref<16x32xf32, #tpu.memory_space<vmem>>, vector<16x32xf32>
    tpu.vector_store %arg13[%c0_14, %c0_15], %21 {strides = array<i32>} : memref<16x32xf32, #tpu.memory_space<vmem>>, vector<16x32xf32>,
    %c0_i32_16 = arith.constant 0 : i32
    %23 = arith.cmpi eq, %arg1, %c0_i32_16 : i32
    %24 = arith.extui %23 : i1 to i32
    %c0_i32_17 = arith.constant 0 : i32
    %25 = arith.cmpi ne, %24, %c0_i32_17 : i32
    scf.if %25 {
      %c0_18 = arith.constant 0 : index
      %c0_19 = arith.constant 0 : index
      %26 = vector.load %arg2[%c0_18, %c0_19] : memref<16x32xf32, #tpu.memory_space<vmem>>, vector<16x32xf32>
      %c0_20 = arith.constant 0 : index
      %c0_21 = arith.constant 0 : index
      %27 = vector.load %arg13[%c0_20, %c0_21] : memref<16x32xf32, #tpu.memory_space<vmem>>, vector<16x32xf32>
      %28 = arith.addf %26, %27 : vector<16x32xf32>
      %c0_22 = arith.constant 0 : index
      %c0_23 = arith.constant 0 : index
      %29 = vector.load %arg8[%c0_22, %c0_23] : memref<1x32xf32, #tpu.memory_space<vmem>>, vector<1x32xf32>
      %30 = vector.broadcast %29 : vector<1x32xf32> to vector<16x32xf32>
      %31 = arith.addf %28, %30 : vector<16x32xf32>
      %c0_24 = arith.constant 0 : index
      %c0_25 = arith.constant 0 : index
      %32 = vector.load %arg9[%c0_24, %c0_25] : memref<1x32xf32, #tpu.memory_space<vmem>>, vector<1x32xf32>
      %c0_26 = arith.constant 0 : index
      %c0_27 = arith.constant 0 : index
      %33 = vector.load %arg10[%c0_26, %c0_27] : memref<1x32xf32, #tpu.memory_space<vmem>>, vector<1x32xf32>
      %cst_28 = arith.constant dense<0.000000e+00> : vector<16xf32>
      %34 = vector.multi_reduction <add>, %31, %cst_28 [1] : vector<16x32xf32> to vector<16xf32>
      %35 = vector.shape_cast %34 : vector<16xf32> to vector<16x1xf32>
      %cst_29 = arith.constant 3.200000e+01 : f32
      %36 = vector.broadcast %cst_29 : f32 to vector<16x1xf32>
      %37 = arith.divf %35, %36 : vector<16x1xf32>
      %38 = vector.broadcast %37 : vector<16x1xf32> to vector<16x32xf32>
      %39 = arith.subf %31, %38 : vector<16x32xf32>
      %40 = arith.mulf %39, %39 : vector<16x32xf32>
      %cst_30 = arith.constant dense<0.000000e+00> : vector<16xf32>
      %41 = vector.multi_reduction <add>, %40, %cst_30 [1] : vector<16x32xf32> to vector<16xf32>
      %42 = vector.shape_cast %41 : vector<16xf32> to vector<16x1xf32>
      %cst_31 = arith.constant 3.200000e+01 : f32
      %43 = vector.broadcast %cst_31 : f32 to vector<16x1xf32>
      %44 = arith.divf %42, %43 : vector<16x1xf32>
      %45 = vector.broadcast %37 : vector<16x1xf32> to vector<16x32xf32>
      %46 = arith.subf %31, %45 : vector<16x32xf32>
      %cst_32 = arith.constant 9.99999997E-7 : f32
      %47 = vector.broadcast %cst_32 : f32 to vector<16x1xf32>
      %48 = arith.addf %44, %47 : vector<16x1xf32>
      %49 = math.rsqrt %48 : vector<16x1xf32>
      %50 = vector.broadcast %49 : vector<16x1xf32> to vector<16x32xf32>
      %51 = arith.mulf %46, %50 : vector<16x32xf32>
      %52 = vector.broadcast %32 : vector<1x32xf32> to vector<16x32xf32>
      %53 = arith.mulf %51, %52 : vector<16x32xf32>
      %54 = vector.broadcast %33 : vector<1x32xf32> to vector<16x32xf32>
      %55 = arith.addf %53, %54 : vector<16x32xf32>
      %c0_33 = arith.constant 0 : index
      %c0_34 = arith.constant 0 : index
      %56 = vector.load %arg11[%c0_33, %c0_34] : memref<16x32xf32, #tpu.memory_space<vmem>>, vector<16x32xf32>
      tpu.vector_store %arg11[%c0_33, %c0_34], %55 {strides = array<i32>} : memref<16x32xf32, #tpu.memory_space<vmem>>, vector<16x32xf32>,
    } else {
    }
    return
  }
  func.func @transform_0(%arg0: i32, %arg1: i32) -> (i32, i32) {
    %c0_i32 = arith.constant 0 : i32
    %c0_i32_0 = arith.constant 0 : i32
    return %arg0, %c0_i32 : i32, i32
  }
  func.func @transform_1(%arg0: i32, %arg1: i32) -> (i32, i32) {
    %c0_i32 = arith.constant 0 : i32
    %c0_i32_0 = arith.constant 0 : i32
    %c0_i32_1 = arith.constant 0 : i32
    return %c0_i32, %c0_i32_0 : i32, i32
  }
  func.func @transform_2(%arg0: i32, %arg1: i32) -> (i32, i32) {
    %c0_i32 = arith.constant 0 : i32
    %c0_i32_0 = arith.constant 0 : i32
    %c0_i32_1 = arith.constant 0 : i32
    return %c0_i32, %c0_i32_0 : i32, i32
  }
  func.func @transform_3(%arg0: i32, %arg1: i32) -> (i32, i32) {
    %c0_i32 = arith.constant 0 : i32
    %c0_i32_0 = arith.constant 0 : i32
    return %c0_i32, %arg1 : i32, i32
  }
  func.func @transform_4(%arg0: i32, %arg1: i32) -> (i32, i32) {
    %c0_i32 = arith.constant 0 : i32
    %c0_i32_0 = arith.constant 0 : i32
    return %c0_i32, %arg1 : i32, i32
  }
  func.func @transform_5(%arg0: i32, %arg1: i32) -> (i32, i32) {
    %c0_i32 = arith.constant 0 : i32
    %c0_i32_0 = arith.constant 0 : i32
    return %arg1, %c0_i32 : i32, i32
  }
  func.func @transform_6(%arg0: i32, %arg1: i32) -> (i32, i32) {
    %c0_i32 = arith.constant 0 : i32
    %c0_i32_0 = arith.constant 0 : i32
    %c0_i32_1 = arith.constant 0 : i32
    return %c0_i32, %c0_i32_0 : i32, i32
  }
  func.func @transform_7(%arg0: i32, %arg1: i32) -> (i32, i32) {
    %c0_i32 = arith.constant 0 : i32
    %c0_i32_0 = arith.constant 0 : i32
    %c0_i32_1 = arith.constant 0 : i32
    return %c0_i32, %c0_i32_0 : i32, i32
  }
  func.func @transform_8(%arg0: i32, %arg1: i32) -> (i32, i32) {
    %c0_i32 = arith.constant 0 : i32
    %c0_i32_0 = arith.constant 0 : i32
    %c0_i32_1 = arith.constant 0 : i32
    return %c0_i32, %c0_i32_0 : i32, i32
  }
  func.func @transform_9(%arg0: i32, %arg1: i32) -> (i32, i32) {
    %c0_i32 = arith.constant 0 : i32
    %c0_i32_0 = arith.constant 0 : i32
    return %arg0, %c0_i32 : i32, i32
  }
}

</mosaic_0001>

<llo_original>
// kernel: global_latent_transformer.11
$region0: #{global_latent_transformer.11}
  #allocation0 [shape = 'u32[]', space=smem, size = 0x4, offset = 0x4, fixed_abs, tag = 'smem constant byte address 0x4 - core index']
  #allocation1 [shape = 'u32[144,128]{1,0:T(1,128)}', space=vmem, size = 0x12000, scoped, tag = 'internal scratch']
  #allocation2 [shape = 'bf16[16,32]{1,0:T(16,128)(2,1)}', space=vmem, size = 0x1000, scoped, tag = 'scratch operand']
  #allocation3 [shape = 'f32[16,32]{1,0:T(8,128)}', space=vmem, size = 0x2000, scoped, tag = 'scratch operand']
  %s0 = inlined_call_operand.vmem [shape: f32[16,32], index: 0, kind: input, shape index: {}]
  %s1 = inlined_call_operand.vmem [shape: f32[1,32], index: 1, kind: input, shape index: {}]
  %s2 = inlined_call_operand.vmem [shape: f32[1,32], index: 2, kind: input, shape index: {}]
  %s3 = inlined_call_operand.vmem [shape: bf16[32,128], index: 3, kind: input, shape index: {}]
  %s4 = inlined_call_operand.vmem [shape: f32[1,128], index: 4, kind: input, shape index: {}]
  %s5 = inlined_call_operand.vmem [shape: bf16[128,32], index: 5, kind: input, shape index: {}]
  %s6 = inlined_call_operand.vmem [shape: f32[1,32], index: 6, kind: input, shape index: {}]
  %s7 = inlined_call_operand.vmem [shape: f32[1,32], index: 7, kind: input, shape index: {}]
  %s8 = inlined_call_operand.vmem [shape: f32[1,32], index: 8, kind: input, shape index: {}]
  %s9 = inlined_call_operand.hbm [shape: f32[16,32], index: 9, kind: output, shape index: {}]
  %s10 = sld [smem:[#allocation0]]
  $region54: #{global_latent_transformer.11} parent=0
    _
  %s12 = ssub.s32 1, %s10
  %s13 = scalar_select 0, %s12, %s10
  $region1: #{global_latent_transformer.11} parent=0
    #allocation4 [shape = 'u8[8192]{0}', space=vmem, size = 0x2000, scoped, tag = 'output window, operand 0, single buffered']
    #allocation5 [shape = 's32[1]{0}', space=sflag, size = 0x4, scoped, tag = 'scoped memory for global_latent_transformer.11']
    %14 = vsyncpa [#allocation5], 0
    // Predicated region
    $region2: #{global_latent_transformer.11} parent=1 // pred_check
      _
    $region3: #{global_latent_transformer.11} parent=1 // pred_check_branch
      %16 = sbr.rel (0) target = $region5
    $region4: #{global_latent_transformer.11} parent=1 // pred_region
      _
    $region5: #{global_latent_transformer.11} parent=1 // pred_fallthru
      _
    // Predicated region
    $region6: #{global_latent_transformer.11} parent=1 // pred_check
      _
    $region7: #{global_latent_transformer.11} parent=1 // pred_check_branch
      %18 = sbr.rel (0) target = $region9
    $region8: #{global_latent_transformer.11} parent=1 // pred_region
      _
    $region9: #{global_latent_transformer.11} parent=1 // pred_fallthru
      _
    // Predicated region
    $region10: #{global_latent_transformer.11} parent=1 // pred_check
      _
    $region11: #{global_latent_transformer.11} parent=1 // pred_check_branch
      %20 = sbr.rel (0) target = $region13
    $region12: #{global_latent_transformer.11} parent=1 // pred_region
      _
    $region13: #{global_latent_transformer.11} parent=1 // pred_fallthru
      _
    // Predicated region
    $region14: #{global_latent_transformer.11} parent=1 // pred_check
      _
    $region15: #{global_latent_transformer.11} parent=1 // pred_check_branch
      %22 = sbr.rel (0) target = $region17
    $region16: #{global_latent_transformer.11} parent=1 // pred_region
      _
    $region17: #{global_latent_transformer.11} parent=1 // pred_fallthru
      _
    // Predicated region
    $region18: #{global_latent_transformer.11} parent=1 // pred_check
      _
    $region19: #{global_latent_transformer.11} parent=1 // pred_check_branch
      %24 = sbr.rel (0) target = $region21
    $region20: #{global_latent_transformer.11} parent=1 // pred_region
      _
    $region21: #{global_latent_transformer.11} parent=1 // pred_fallthru
      _
    // Predicated region
    $region22: #{global_latent_transformer.11} parent=1 // pred_check
      _
    $region23: #{global_latent_transformer.11} parent=1 // pred_check_branch
      %26 = sbr.rel (0) target = $region25
    $region24: #{global_latent_transformer.11} parent=1 // pred_region
      _
    $region25: #{global_latent_transformer.11} parent=1 // pred_fallthru
      _
    // Predicated region
    $region26: #{global_latent_transformer.11} parent=1 // pred_check
      _
    $region27: #{global_latent_transformer.11} parent=1 // pred_check_branch
      %28 = sbr.rel (0) target = $region29
    $region28: #{global_latent_transformer.11} parent=1 // pred_region
      _
    $region29: #{global_latent_transformer.11} parent=1 // pred_fallthru
      _
    // Predicated region
    $region30: #{global_latent_transformer.11} parent=1 // pred_check
      _
    $region31: #{global_latent_transformer.11} parent=1 // pred_check_branch
      %30 = sbr.rel (0) target = $region33
    $region32: #{global_latent_transformer.11} parent=1 // pred_region
      _
    $region33: #{global_latent_transformer.11} parent=1 // pred_fallthru
      _
    // Predicated region
    $region34: #{global_latent_transformer.11} parent=1 // pred_check
      _
    $region35: #{global_latent_transformer.11} parent=1 // pred_check_branch
      %32 = sbr.rel (0) target = $region37
    $region36: #{global_latent_transformer.11} parent=1 // pred_region
      _
    $region37: #{global_latent_transformer.11} parent=1 // pred_fallthru
      _
    %p34 = scmp.eq.s32.totalorder 0, 0
    // Predicated region
    $region38: #{global_latent_transformer.11} parent=1 // pred_check
      %p35 = pneg %p34
    $region39: #{global_latent_transformer.11} parent=1 // pred_check_branch
      %37 = sbr.rel (%p35) target = $region41
    $region40: #{global_latent_transformer.11} parent=1 // pred_region
      %v38 = vld [vmem:[%s0] sm:$0xff]
      %v39 = vld [vmem:[%s0 + $0x8] sm:$0xff]
      %v40 = vld [vmem:[%s1] sm:$0x1]
      %v41 = vld [vmem:[%s2] sm:$0x1]
      %vm42 = vcmask 261120
      %v43 = vsel %vm42, %v38, 0.0
      %44 = vadd.xlane.f32.xlu0 %v43
      %v45 = vpop.xlane.xlu0 %44
      %v46 = vsel %vm42, %v39, 0.0
      %47 = vadd.xlane.f32.xlu0 %v46
      %v48 = vpop.xlane.xlu0 %47
      %v49 = vrcp.pop 32.0
      %v50 = vmul.f32 %v45, %v49
      %v51 = vmul.f32 %v48, %v49
      %v52 = vsub.f32 %v38, %v50
      %v53 = vsub.f32 %v39, %v51
      %v54 = vmul.f32 %v52, %v52
      %v55 = vmul.f32 %v53, %v53
      %v56 = vsel %vm42, %v54, 0.0
      %57 = vadd.xlane.f32.xlu0 %v56
      %v58 = vpop.xlane.xlu0 %57
      %v59 = vsel %vm42, %v55, 0.0
      %60 = vadd.xlane.f32.xlu0 %v59
      %v61 = vpop.xlane.xlu0 %60
      %v62 = vmul.f32 %v58, %v49
      %v63 = vmul.f32 %v61, %v49
      %v64 = vadd.f32 %v62, 1e-06
      %v65 = vadd.f32 %v63, 1e-06
      %v66 = vrsqrt.pop %v64
      %v67 = vrsqrt.pop %v65
      %v68 = vmul.f32 %v52, %v66
      %v69 = vmul.f32 %v53, %v67
      %v71 = vlaneseq
      %v72 = vshrl.u32 %v71, 7
      %v73 = vsub.s32 0, %v72
      %v74 = vrot.slane %v40, %v73
      %v76 = vmul.f32 %v68, %v74
      %v77 = vmul.f32 %v69, %v74
      %v79 = vlaneseq
      %v80 = vshrl.u32 %v79, 7
      %v81 = vsub.s32 0, %v80
      %v82 = vrot.slane %v41, %v81
      %v84 = vadd.f32 %v76, %v82
      %v85 = vadd.f32 %v77, %v82
      %v86 = vpack.c.bf16 %v85, %v84
      %87 = vst.msk [vmem:[#allocation2] sm:$0xff] %vm42, %v86
      %88 = vst.msk [vmem:[#allocation3] sm:$0xff] %vm42, 0.0
      %89 = vst.msk [vmem:[#allocation3 + $0x8] sm:$0xff] %vm42, 0.0
    $region41: #{global_latent_transformer.11} parent=1 // pred_fallthru
      _
    %v90 = vld [vmem:[#allocation2] sm:$0xff]
    %v91 = vld [vmem:[%s3] sm:$0xf]
    %v92 = vld [vmem:[%s3 + $0x4] sm:$0xf]
    %v93 = vld [vmem:[%s3 + $0x8] sm:$0xf]
    %v94 = vld [vmem:[%s3 + $0xc] sm:$0xf]
    %v95 = vld [vmem:[%s4] sm:$0x1]
    %v97 = vlaneseq
    %v98 = vshrl.u32 %v97, 7
    %v99 = vsub.s32 0, %v98
    %v100 = vrot.slane %v95, %v99
    %v106 = vunpack.c.l.b16 %v91
    %v107 = vunpack.c.l.b16 %v92
    %v108 = vunpack.c.l.b16 %v93
    %v109 = vunpack.c.l.b16 %v94
    %v110 = vpack.c.b16 %v107, %v106
    %v111 = vpack.c.b16 %v109, %v108
    %vm114 = vcmask 261120
    %v116 = vsel %vm114, %v90, 0
    %118 = vmatprep.subr.bf16.mxu0 0
    %119 = vmatpush1.bf16.msra.mxu0 %v110
    %120 = vmatprep.subr.bf16.mxu0 0
    %121 = vmatpush1.bf16.msra.mxu0 %v111
    %122 = vmatprep.subr.bf16.mxu0 0
    %123 = vmatpush1.bf16.msra.mxu0 0
    %124 = vmatprep.subr.bf16.mxu0 0
    %125 = vmatpush1.bf16.msra.mxu0 0
    %126 = vmatprep.subr.bf16.mxu0 0
    %127 = vmatpush1.bf16.msra.mxu0 0
    %128 = vmatprep.subr.bf16.mxu0 0
    %129 = vmatpush1.bf16.msra.mxu0 0
    %130 = vmatprep.subr.bf16.mxu0 0
    %131 = vmatpush1.bf16.msra.mxu0 0
    %132 = vmatprep.subr.bf16.mxu0 0
    %133 = vmatpush1.bf16.msra.mxu0 0
    %134 = vmatprep.subr.bf16.mxu0 0
    %135 = vmatpush1.bf16.msra.mxu0 0
    %136 = vmatprep.subr.bf16.mxu0 0
    %137 = vmatpush1.bf16.msra.mxu0 0
    %138 = vmatprep.subr.bf16.mxu0 0
    %139 = vmatpush1.bf16.msra.mxu0 0
    %140 = vmatprep.subr.bf16.mxu0 0
    %141 = vmatpush1.bf16.msra.mxu0 0
    %142 = vmatprep.subr.bf16.mxu0 0
    %143 = vmatpush1.bf16.msra.mxu0 0
    %144 = vmatprep.subr.bf16.mxu0 0
    %145 = vmatpush1.bf16.msra.mxu0 0
    %146 = vmatprep.subr.bf16.mxu0 0
    %147 = vmatpush1.bf16.msra.mxu0 0
    %148 = vmatprep.subr.bf16.mxu0 0
    %149 = vmatpush1.bf16.msra.mxu0 0
    %150 = vmatprep.mubr.bf16.mxu0 0
    %151 = vmatmul.mubr.bf16.gmra.mrb[0].mxu0 %v116
    %v152 = vpop.f32.mrb[0].mxu0
    %v153 = vadd.f32 %v100, %v152
    %v154 = vpop.f32.mrb[0].mxu0
    %v155 = vpop.f32.mrb[0].mxu0
    %v156 = vadd.f32 %v100, %v155
    %v157 = vpop.f32.mrb[0].mxu0
    %158 = vdwg.mxu0
    %v159 = vmul.f32 %v153, 0.5
    %v160 = vmul.f32 %v156, 0.5
    %v161 = vmul.f32 %v153, 0.70710677
    %v162 = vmul.f32 %v156, 0.70710677
    %v163 = verf.f32.pop %v161
    %v164 = verf.f32.pop %v162
    %v165 = vadd.f32 %v163, 1.0
    %v166 = vadd.f32 %v164, 1.0
    %v167 = vmul.f32 %v159, %v165
    %v168 = vmul.f32 %v160, %v166
    %v169 = vld [vmem:[#allocation3] sm:$0xff]
    %v170 = vld [vmem:[#allocation3 + $0x8] sm:$0xff]
    %v171 = vpack.c.bf16 %v168, %v167
    %v172 = vld [vmem:[%s5] sm:$0xf]
    %v173 = vld [vmem:[%s5 + $0x4] sm:$0xf]
    %v174 = vld [vmem:[%s5 + $0x8] sm:$0xf]
    %v175 = vld [vmem:[%s5 + $0xc] sm:$0xf]
    %v176 = vld [vmem:[%s5 + $0x10] sm:$0xf]
    %v177 = vld [vmem:[%s5 + $0x14] sm:$0xf]
    %v178 = vld [vmem:[%s5 + $0x18] sm:$0xf]
    %v179 = vld [vmem:[%s5 + $0x1c] sm:$0xf]
    %v180 = vld [vmem:[%s5 + $0x20] sm:$0xf]
    %v181 = vld [vmem:[%s5 + $0x24] sm:$0xf]
    %v182 = vld [vmem:[%s5 + $0x28] sm:$0xf]
    %v183 = vld [vmem:[%s5 + $0x2c] sm:$0xf]
    %v184 = vld [vmem:[%s5 + $0x30] sm:$0xf]
    %v185 = vld [vmem:[%s5 + $0x34] sm:$0xf]
    %v186 = vld [vmem:[%s5 + $0x38] sm:$0xf]
    %v187 = vld [vmem:[%s5 + $0x3c] sm:$0xf]
    %v204 = vunpack.c.l.b16 %v172
    %v205 = vunpack.c.l.b16 %v173
    %v206 = vunpack.c.l.b16 %v174
    %v207 = vunpack.c.l.b16 %v175
    %v208 = vunpack.c.l.b16 %v176
    %v209 = vunpack.c.l.b16 %v177
    %v210 = vunpack.c.l.b16 %v178
    %v211 = vunpack.c.l.b16 %v179
    %v212 = vunpack.c.l.b16 %v180
    %v213 = vunpack.c.l.b16 %v181
    %v214 = vunpack.c.l.b16 %v182
    %v215 = vunpack.c.l.b16 %v183
    %v216 = vunpack.c.l.b16 %v184
    %v217 = vunpack.c.l.b16 %v185
    %v218 = vunpack.c.l.b16 %v186
    %v219 = vunpack.c.l.b16 %v187
    %v220 = vpack.c.b16 %v205, %v204
    %v221 = vpack.c.b16 %v207, %v206
    %v222 = vpack.c.b16 %v209, %v208
    %v223 = vpack.c.b16 %v211, %v210
    %v224 = vpack.c.b16 %v213, %v212
    %v225 = vpack.c.b16 %v215, %v214
    %v226 = vpack.c.b16 %v217, %v216
    %v227 = vpack.c.b16 %v219, %v218
    %236 = vmatprep.subr.bf16.mxu0 0
    %237 = vmatpush1.bf16.msra.mxu0 %v220
    %238 = vmatprep.subr.bf16.mxu0 0
    %239 = vmatpush1.bf16.msra.mxu0 %v221
    %240 = vmatprep.subr.bf16.mxu0 0
    %241 = vmatpush1.bf16.msra.mxu0 %v222
    %242 = vmatprep.subr.bf16.mxu0 0
    %243 = vmatpush1.bf16.msra.mxu0 %v223
    %244 = vmatprep.subr.bf16.mxu0 0
    %245 = vmatpush1.bf16.msra.mxu0 %v224
    %246 = vmatprep.subr.bf16.mxu0 0
    %247 = vmatpush1.bf16.msra.mxu0 %v225
    %248 = vmatprep.subr.bf16.mxu0 0
    %249 = vmatpush1.bf16.msra.mxu0 %v226
    %250 = vmatprep.subr.bf16.mxu0 0
    %251 = vmatpush1.bf16.msra.mxu0 %v227
    %252 = vmatprep.subr.bf16.mxu0 0
    %253 = vmatpush1.bf16.msra.mxu0 0
    %254 = vmatprep.subr.bf16.mxu0 0
    %255 = vmatpush1.bf16.msra.mxu0 0
    %256 = vmatprep.subr.bf16.mxu0 0
    %257 = vmatpush1.bf16.msra.mxu0 0
    %258 = vmatprep.subr.bf16.mxu0 0
    %259 = vmatpush1.bf16.msra.mxu0 0
    %260 = vmatprep.subr.bf16.mxu0 0
    %261 = vmatpush1.bf16.msra.mxu0 0
    %262 = vmatprep.subr.bf16.mxu0 0
    %263 = vmatpush1.bf16.msra.mxu0 0
    %264 = vmatprep.subr.bf16.mxu0 0
    %265 = vmatpush1.bf16.msra.mxu0 0
    %266 = vmatprep.subr.bf16.mxu0 0
    %267 = vmatpush1.bf16.msra.mxu0 0
    %268 = vmatprep.mubr.bf16.mxu0 0
    %269 = vmatmul.mubr.bf16.gmra.mrb[0].mxu0 %v171
    %v270 = vpop.f32.mrb[0].mxu0
    %v271 = vadd.f32 0.0, %v270
    %v272 = vpop.f32.mrb[0].mxu0
    %v273 = vpop.f32.mrb[0].mxu0
    %v274 = vadd.f32 0.0, %v273
    %v275 = vpop.f32.mrb[0].mxu0
    %276 = vdwg.mxu0
    %v277 = vadd.f32 %v169, %v271
    %v278 = vadd.f32 %v170, %v274
    %279 = vst.msk [vmem:[#allocation3] sm:$0xff] %vm114, %v277
    %280 = vst.msk [vmem:[#allocation3 + $0x8] sm:$0xff] %vm114, %v278
    // Predicated region
    $region42: #{global_latent_transformer.11} parent=1 // pred_check
      %p281 = pneg %p34
    $region43: #{global_latent_transformer.11} parent=1 // pred_check_branch
      %283 = sbr.rel (%p281) target = $region45
    $region44: #{global_latent_transformer.11} parent=1 // pred_region
      %v284 = vld [vmem:[%s0] sm:$0xff]
      %v285 = vld [vmem:[%s0 + $0x8] sm:$0xff]
      %v286 = vld [vmem:[#allocation3] sm:$0xff]
      %v287 = vld [vmem:[#allocation3 + $0x8] sm:$0xff]
      %v288 = vadd.f32 %v284, %v286
      %v289 = vadd.f32 %v285, %v287
      %v290 = vld [vmem:[%s6] sm:$0x1]
      %v292 = vlaneseq
      %v293 = vshrl.u32 %v292, 7
      %v294 = vsub.s32 0, %v293
      %v295 = vrot.slane %v290, %v294
      %v297 = vadd.f32 %v288, %v295
      %v298 = vadd.f32 %v289, %v295
      %v299 = vld [vmem:[%s7] sm:$0x1]
      %v300 = vld [vmem:[%s8] sm:$0x1]
      %v301 = vsel %vm114, %v297, 0.0
      %302 = vadd.xlane.f32.xlu0 %v301
      %v303 = vpop.xlane.xlu0 %302
      %v304 = vsel %vm114, %v298, 0.0
      %305 = vadd.xlane.f32.xlu0 %v304
      %v306 = vpop.xlane.xlu0 %305
      %v307 = vrcp.pop 32.0
      %v308 = vmul.f32 %v303, %v307
      %v309 = vmul.f32 %v306, %v307
      %v310 = vsub.f32 %v297, %v308
      %v311 = vsub.f32 %v298, %v309
      %v312 = vmul.f32 %v310, %v310
      %v313 = vmul.f32 %v311, %v311
      %v314 = vsel %vm114, %v312, 0.0
      %315 = vadd.xlane.f32.xlu0 %v314
      %v316 = vpop.xlane.xlu0 %315
      %v317 = vsel %vm114, %v313, 0.0
      %318 = vadd.xlane.f32.xlu0 %v317
      %v319 = vpop.xlane.xlu0 %318
      %v320 = vmul.f32 %v316, %v307
      %v321 = vmul.f32 %v319, %v307
      %v322 = vadd.f32 %v320, 1e-06
      %v323 = vadd.f32 %v321, 1e-06
      %v324 = vrsqrt.pop %v322
      %v325 = vrsqrt.pop %v323
      %v326 = vmul.f32 %v310, %v324
      %v327 = vmul.f32 %v311, %v325
      %v329 = vlaneseq
      %v330 = vshrl.u32 %v329, 7
      %v331 = vsub.s32 0, %v330
      %v332 = vrot.slane %v299, %v331
      %v334 = vmul.f32 %v326, %v332
      %v335 = vmul.f32 %v327, %v332
      %v337 = vlaneseq
      %v338 = vshrl.u32 %v337, 7
      %v339 = vsub.s32 0, %v338
      %v340 = vrot.slane %v300, %v339
      %v342 = vadd.f32 %v334, %v340
      %v343 = vadd.f32 %v335, %v340
      %344 = vst.msk [vmem:[#allocation4] sm:$0xff] %vm114, %v342
      %345 = vst.msk [vmem:[#allocation4 + $0x8] sm:$0xff] %vm114, %v343
    $region45: #{global_latent_transformer.11} parent=1 // pred_fallthru
      _
    // Predicated region
    $region46: #{global_latent_transformer.11} parent=1 // pred_check
      _
    $region47: #{global_latent_transformer.11} parent=1 // pred_check_branch
      %347 = sbr.rel (0) target = $region49
    $region48: #{global_latent_transformer.11} parent=1 // pred_region
      %s349 = ssub.s32 256, 256
      %350 = vsyncadd [#allocation5], %s349
      %s351 = sshll.u32 [#allocation4], 4
      %s352 = int_to_ptr.vmem [resolvable:$true] %s351
      %357 = dma.vmem_to_hbm [thread:$0]  %s352, 256, %s9, [#allocation5], 128, 128, 8
    $region49: #{global_latent_transformer.11} parent=1 // pred_fallthru
      _
    // Predicated region
    $region50: #{global_latent_transformer.11} parent=1 // pred_check
      _
    $region51: #{global_latent_transformer.11} parent=1 // pred_check_branch
      %359 = sbr.rel (0) target = $region53
    $region52: #{global_latent_transformer.11} parent=1 // pred_region
      %360 = dma.done [#allocation5], 256
    $region53: #{global_latent_transformer.11} parent=1 // pred_fallthru
      _
    %361 = vsyncpa [#allocation5], 1

// kernel: global_latent_transformer.8
$region0: #{global_latent_transformer.8}
  #allocation0 [shape = 'u32[]', space=smem, size = 0x4, offset = 0x4, fixed_abs, tag = 'smem constant byte address 0x4 - core index']
  #allocation1 [shape = 'u32[144,128]{1,0:T(1,128)}', space=vmem, size = 0x12000, scoped, tag = 'internal scratch']
  #allocation2 [shape = 'bf16[16,32]{1,0:T(16,128)(2,1)}', space=vmem, size = 0x1000, scoped, tag = 'scratch operand']
  #allocation3 [shape = 'f32[16,32]{1,0:T(8,128)}', space=vmem, size = 0x2000, scoped, tag = 'scratch operand']
  %s0 = inlined_call_operand.vmem [shape: f32[16,32], index: 0, kind: input, shape index: {}]
  %s1 = inlined_call_operand.vmem [shape: f32[1,32], index: 1, kind: input, shape index: {}]
  %s2 = inlined_call_operand.vmem [shape: f32[1,32], index: 2, kind: input, shape index: {}]
  %s3 = inlined_call_operand.vmem [shape: bf16[32,128], index: 3, kind: input, shape index: {}]
  %s4 = inlined_call_operand.vmem [shape: f32[1,128], index: 4, kind: input, shape index: {}]
  %s5 = inlined_call_operand.vmem [shape: bf16[128,32], index: 5, kind: input, shape index: {}]
  %s6 = inlined_call_operand.vmem [shape: f32[1,32], index: 6, kind: input, shape index: {}]
  %s7 = inlined_call_operand.vmem [shape: f32[1,32], index: 7, kind: input, shape index: {}]
  %s8 = inlined_call_operand.vmem [shape: f32[1,32], index: 8, kind: input, shape index: {}]
  %s9 = inlined_call_operand.vmem [shape: f32[16,32], index: 9, kind: output, shape index: {}]
  %s10 = sld [smem:[#allocation0]]
  $region54: #{global_latent_transformer.8} parent=0
    _
  %s12 = ssub.s32 1, %s10
  %s13 = scalar_select 0, %s12, %s10
  // Predicated region
  $region2: #{global_latent_transformer.8} parent=0 // pred_check
    _
  $region3: #{global_latent_transformer.8} parent=0 // pred_check_branch
    %15 = sbr.rel (0) target = $region5
  $region4: #{global_latent_transformer.8} parent=0 // pred_region
    _
  $region5: #{global_latent_transformer.8} parent=0 // pred_fallthru
    _
  // Predicated region
  $region6: #{global_latent_transformer.8} parent=0 // pred_check
    _
  $region7: #{global_latent_transformer.8} parent=0 // pred_check_branch
    %17 = sbr.rel (0) target = $region9
  $region8: #{global_latent_transformer.8} parent=0 // pred_region
    _
  $region9: #{global_latent_transformer.8} parent=0 // pred_fallthru
    _
  // Predicated region
  $region10: #{global_latent_transformer.8} parent=0 // pred_check
    _
  $region11: #{global_latent_transformer.8} parent=0 // pred_check_branch
    %19 = sbr.rel (0) target = $region13
  $region12: #{global_latent_transformer.8} parent=0 // pred_region
    _
  $region13: #{global_latent_transformer.8} parent=0 // pred_fallthru
    _
  // Predicated region
  $region14: #{global_latent_transformer.8} parent=0 // pred_check
    _
  $region15: #{global_latent_transformer.8} parent=0 // pred_check_branch
    %21 = sbr.rel (0) target = $region17
  $region16: #{global_latent_transformer.8} parent=0 // pred_region
    _
  $region17: #{global_latent_transformer.8} parent=0 // pred_fallthru
    _
  // Predicated region
  $region18: #{global_latent_transformer.8} parent=0 // pred_check
    _
  $region19: #{global_latent_transformer.8} parent=0 // pred_check_branch
    %23 = sbr.rel (0) target = $region21
  $region20: #{global_latent_transformer.8} parent=0 // pred_region
    _
  $region21: #{global_latent_transformer.8} parent=0 // pred_fallthru
    _
  // Predicated region
  $region22: #{global_latent_transformer.8} parent=0 // pred_check
    _
  $region23: #{global_latent_transformer.8} parent=0 // pred_check_branch
    %25 = sbr.rel (0) target = $region25
  $region24: #{global_latent_transformer.8} parent=0 // pred_region
    _
  $region25: #{global_latent_transformer.8} parent=0 // pred_fallthru
    _
  // Predicated region
  $region26: #{global_latent_transformer.8} parent=0 // pred_check
    _
  $region27: #{global_latent_transformer.8} parent=0 // pred_check_branch
    %27 = sbr.rel (0) target = $region29
  $region28: #{global_latent_transformer.8} parent=0 // pred_region
    _
  $region29: #{global_latent_transformer.8} parent=0 // pred_fallthru
    _
  // Predicated region
  $region30: #{global_latent_transformer.8} parent=0 // pred_check
    _
  $region31: #{global_latent_transformer.8} parent=0 // pred_check_branch
    %29 = sbr.rel (0) target = $region33
  $region32: #{global_latent_transformer.8} parent=0 // pred_region
    _
  $region33: #{global_latent_transformer.8} parent=0 // pred_fallthru
    _
  // Predicated region
  $region34: #{global_latent_transformer.8} parent=0 // pred_check
    _
  $region35: #{global_latent_transformer.8} parent=0 // pred_check_branch
    %31 = sbr.rel (0) target = $region37
  $region36: #{global_latent_transformer.8} parent=0 // pred_region
    _
  $region37: #{global_latent_transformer.8} parent=0 // pred_fallthru
    _
  %p33 = scmp.eq.s32.totalorder 0, 0
  // Predicated region
  $region38: #{global_latent_transformer.8} parent=0 // pred_check
    %p34 = pneg %p33
  $region39: #{global_latent_transformer.8} parent=0 // pred_check_branch
    %36 = sbr.rel (%p34) target = $region41
  $region40: #{global_latent_transformer.8} parent=0 // pred_region
    %v37 = vld [vmem:[%s0] sm:$0xff]
    %v38 = vld [vmem:[%s0 + $0x8] sm:$0xff]
    %v39 = vld [vmem:[%s1] sm:$0x1]
    %v40 = vld [vmem:[%s2] sm:$0x1]
    %vm41 = vcmask 261120
    %v42 = vsel %vm41, %v37, 0.0
    %43 = vadd.xlane.f32.xlu0 %v42
    %v44 = vpop.xlane.xlu0 %43
    %v45 = vsel %vm41, %v38, 0.0
    %46 = vadd.xlane.f32.xlu0 %v45
    %v47 = vpop.xlane.xlu0 %46
    %v48 = vrcp.pop 32.0
    %v49 = vmul.f32 %v44, %v48
    %v50 = vmul.f32 %v47, %v48
    %v51 = vsub.f32 %v37, %v49
    %v52 = vsub.f32 %v38, %v50
    %v53 = vmul.f32 %v51, %v51
    %v54 = vmul.f32 %v52, %v52
    %v55 = vsel %vm41, %v53, 0.0
    %56 = vadd.xlane.f32.xlu0 %v55
    %v57 = vpop.xlane.xlu0 %56
    %v58 = vsel %vm41, %v54, 0.0
    %59 = vadd.xlane.f32.xlu0 %v58
    %v60 = vpop.xlane.xlu0 %59
    %v61 = vmul.f32 %v57, %v48
    %v62 = vmul.f32 %v60, %v48
    %v63 = vadd.f32 %v61, 1e-06
    %v64 = vadd.f32 %v62, 1e-06
    %v65 = vrsqrt.pop %v63
    %v66 = vrsqrt.pop %v64
    %v67 = vmul.f32 %v51, %v65
    %v68 = vmul.f32 %v52, %v66
    %v70 = vlaneseq
    %v71 = vshrl.u32 %v70, 7
    %v72 = vsub.s32 0, %v71
    %v73 = vrot.slane %v39, %v72
    %v75 = vmul.f32 %v67, %v73
    %v76 = vmul.f32 %v68, %v73
    %v78 = vlaneseq
    %v79 = vshrl.u32 %v78, 7
    %v80 = vsub.s32 0, %v79
    %v81 = vrot.slane %v40, %v80
    %v83 = vadd.f32 %v75, %v81
    %v84 = vadd.f32 %v76, %v81
    %v85 = vpack.c.bf16 %v84, %v83
    %86 = vst.msk [vmem:[#allocation2] sm:$0xff] %vm41, %v85
    %87 = vst.msk [vmem:[#allocation3] sm:$0xff] %vm41, 0.0
    %88 = vst.msk [vmem:[#allocation3 + $0x8] sm:$0xff] %vm41, 0.0
  $region41: #{global_latent_transformer.8} parent=0 // pred_fallthru
    _
  %v89 = vld [vmem:[#allocation2] sm:$0xff]
  %v90 = vld [vmem:[%s3] sm:$0xf]
  %v91 = vld [vmem:[%s3 + $0x4] sm:$0xf]
  %v92 = vld [vmem:[%s3 + $0x8] sm:$0xf]
  %v93 = vld [vmem:[%s3 + $0xc] sm:$0xf]
  %v94 = vld [vmem:[%s4] sm:$0x1]
  %v96 = vlaneseq
  %v97 = vshrl.u32 %v96, 7
  %v98 = vsub.s32 0, %v97
  %v99 = vrot.slane %v94, %v98
  %v105 = vunpack.c.l.b16 %v90
  %v106 = vunpack.c.l.b16 %v91
  %v107 = vunpack.c.l.b16 %v92
  %v108 = vunpack.c.l.b16 %v93
  %v109 = vpack.c.b16 %v106, %v105
  %v110 = vpack.c.b16 %v108, %v107
  %vm113 = vcmask 261120
  %v115 = vsel %vm113, %v89, 0
  %117 = vmatprep.subr.bf16.mxu0 0
  %118 = vmatpush1.bf16.msra.mxu0 %v109
  %119 = vmatprep.subr.bf16.mxu0 0
  %120 = vmatpush1.bf16.msra.mxu0 %v110
  %121 = vmatprep.subr.bf16.mxu0 0
  %122 = vmatpush1.bf16.msra.mxu0 0
  %123 = vmatprep.subr.bf16.mxu0 0
  %124 = vmatpush1.bf16.msra.mxu0 0
  %125 = vmatprep.subr.bf16.mxu0 0
  %126 = vmatpush1.bf16.msra.mxu0 0
  %127 = vmatprep.subr.bf16.mxu0 0
  %128 = vmatpush1.bf16.msra.mxu0 0
  %129 = vmatprep.subr.bf16.mxu0 0
  %130 = vmatpush1.bf16.msra.mxu0 0
  %131 = vmatprep.subr.bf16.mxu0 0
  %132 = vmatpush1.bf16.msra.mxu0 0
  %133 = vmatprep.subr.bf16.mxu0 0
  %134 = vmatpush1.bf16.msra.mxu0 0
  %135 = vmatprep.subr.bf16.mxu0 0
  %136 = vmatpush1.bf16.msra.mxu0 0
  %137 = vmatprep.subr.bf16.mxu0 0
  %138 = vmatpush1.bf16.msra.mxu0 0
  %139 = vmatprep.subr.bf16.mxu0 0
  %140 = vmatpush1.bf16.msra.mxu0 0
  %141 = vmatprep.subr.bf16.mxu0 0
  %142 = vmatpush1.bf16.msra.mxu0 0
  %143 = vmatprep.subr.bf16.mxu0 0
  %144 = vmatpush1.bf16.msra.mxu0 0
  %145 = vmatprep.subr.bf16.mxu0 0
  %146 = vmatpush1.bf16.msra.mxu0 0
  %147 = vmatprep.subr.bf16.mxu0 0
  %148 = vmatpush1.bf16.msra.mxu0 0
  %149 = vmatprep.mubr.bf16.mxu0 0
  %150 = vmatmul.mubr.bf16.gmra.mrb[0].mxu0 %v115
  %v151 = vpop.f32.mrb[0].mxu0
  %v152 = vadd.f32 %v99, %v151
  %v153 = vpop.f32.mrb[0].mxu0
  %v154 = vpop.f32.mrb[0].mxu0
  %v155 = vadd.f32 %v99, %v154
  %v156 = vpop.f32.mrb[0].mxu0
  %157 = vdwg.mxu0
  %v158 = vmul.f32 %v152, 0.5
  %v159 = vmul.f32 %v155, 0.5
  %v160 = vmul.f32 %v152, 0.70710677
  %v161 = vmul.f32 %v155, 0.70710677
  %v162 = verf.f32.pop %v160
  %v163 = verf.f32.pop %v161
  %v164 = vadd.f32 %v162, 1.0
  %v165 = vadd.f32 %v163, 1.0
  %v166 = vmul.f32 %v158, %v164
  %v167 = vmul.f32 %v159, %v165
  %v168 = vld [vmem:[#allocation3] sm:$0xff]
  %v169 = vld [vmem:[#allocation3 + $0x8] sm:$0xff]
  %v170 = vpack.c.bf16 %v167, %v166
  %v171 = vld [vmem:[%s5] sm:$0xf]
  %v172 = vld [vmem:[%s5 + $0x4] sm:$0xf]
  %v173 = vld [vmem:[%s5 + $0x8] sm:$0xf]
  %v174 = vld [vmem:[%s5 + $0xc] sm:$0xf]
  %v175 = vld [vmem:[%s5 + $0x10] sm:$0xf]
  %v176 = vld [vmem:[%s5 + $0x14] sm:$0xf]
  %v177 = vld [vmem:[%s5 + $0x18] sm:$0xf]
  %v178 = vld [vmem:[%s5 + $0x1c] sm:$0xf]
  %v179 = vld [vmem:[%s5 + $0x20] sm:$0xf]
  %v180 = vld [vmem:[%s5 + $0x24] sm:$0xf]
  %v181 = vld [vmem:[%s5 + $0x28] sm:$0xf]
  %v182 = vld [vmem:[%s5 + $0x2c] sm:$0xf]
  %v183 = vld [vmem:[%s5 + $0x30] sm:$0xf]
  %v184 = vld [vmem:[%s5 + $0x34] sm:$0xf]
  %v185 = vld [vmem:[%s5 + $0x38] sm:$0xf]
  %v186 = vld [vmem:[%s5 + $0x3c] sm:$0xf]
  %v203 = vunpack.c.l.b16 %v171
  %v204 = vunpack.c.l.b16 %v172
  %v205 = vunpack.c.l.b16 %v173
  %v206 = vunpack.c.l.b16 %v174
  %v207 = vunpack.c.l.b16 %v175
  %v208 = vunpack.c.l.b16 %v176
  %v209 = vunpack.c.l.b16 %v177
  %v210 = vunpack.c.l.b16 %v178
  %v211 = vunpack.c.l.b16 %v179
  %v212 = vunpack.c.l.b16 %v180
  %v213 = vunpack.c.l.b16 %v181
  %v214 = vunpack.c.l.b16 %v182
  %v215 = vunpack.c.l.b16 %v183
  %v216 = vunpack.c.l.b16 %v184
  %v217 = vunpack.c.l.b16 %v185
  %v218 = vunpack.c.l.b16 %v186
  %v219 = vpack.c.b16 %v204, %v203
  %v220 = vpack.c.b16 %v206, %v205
  %v221 = vpack.c.b16 %v208, %v207
  %v222 = vpack.c.b16 %v210, %v209
  %v223 = vpack.c.b16 %v212, %v211
  %v224 = vpack.c.b16 %v214, %v213
  %v225 = vpack.c.b16 %v216, %v215
  %v226 = vpack.c.b16 %v218, %v217
  %235 = vmatprep.subr.bf16.mxu0 0
  %236 = vmatpush1.bf16.msra.mxu0 %v219
  %237 = vmatprep.subr.bf16.mxu0 0
  %238 = vmatpush1.bf16.msra.mxu0 %v220
  %239 = vmatprep.subr.bf16.mxu0 0
  %240 = vmatpush1.bf16.msra.mxu0 %v221
  %241 = vmatprep.subr.bf16.mxu0 0
  %242 = vmatpush1.bf16.msra.mxu0 %v222
  %243 = vmatprep.subr.bf16.mxu0 0
  %244 = vmatpush1.bf16.msra.mxu0 %v223
  %245 = vmatprep.subr.bf16.mxu0 0
  %246 = vmatpush1.bf16.msra.mxu0 %v224
  %247 = vmatprep.subr.bf16.mxu0 0
  %248 = vmatpush1.bf16.msra.mxu0 %v225
  %249 = vmatprep.subr.bf16.mxu0 0
  %250 = vmatpush1.bf16.msra.mxu0 %v226
  %251 = vmatprep.subr.bf16.mxu0 0
  %252 = vmatpush1.bf16.msra.mxu0 0
  %253 = vmatprep.subr.bf16.mxu0 0
  %254 = vmatpush1.bf16.msra.mxu0 0
  %255 = vmatprep.subr.bf16.mxu0 0
  %256 = vmatpush1.bf16.msra.mxu0 0
  %257 = vmatprep.subr.bf16.mxu0 0
  %258 = vmatpush1.bf16.msra.mxu0 0
  %259 = vmatprep.subr.bf16.mxu0 0
  %260 = vmatpush1.bf16.msra.mxu0 0
  %261 = vmatprep.subr.bf16.mxu0 0
  %262 = vmatpush1.bf16.msra.mxu0 0
  %263 = vmatprep.subr.bf16.mxu0 0
  %264 = vmatpush1.bf16.msra.mxu0 0
  %265 = vmatprep.subr.bf16.mxu0 0
  %266 = vmatpush1.bf16.msra.mxu0 0
  %267 = vmatprep.mubr.bf16.mxu0 0
  %268 = vmatmul.mubr.bf16.gmra.mrb[0].mxu0 %v170
  %v269 = vpop.f32.mrb[0].mxu0
  %v270 = vadd.f32 0.0, %v269
  %v271 = vpop.f32.mrb[0].mxu0
  %v272 = vpop.f32.mrb[0].mxu0
  %v273 = vadd.f32 0.0, %v272
  %v274 = vpop.f32.mrb[0].mxu0
  %275 = vdwg.mxu0
  %v276 = vadd.f32 %v168, %v270
  %v277 = vadd.f32 %v169, %v273
  %278 = vst.msk [vmem:[#allocation3] sm:$0xff] %vm113, %v276
  %279 = vst.msk [vmem:[#allocation3 + $0x8] sm:$0xff] %vm113, %v277
  // Predicated region
  $region42: #{global_latent_transformer.8} parent=0 // pred_check
    %p280 = pneg %p33
  $region43: #{global_latent_transformer.8} parent=0 // pred_check_branch
    %282 = sbr.rel (%p280) target = $region45
  $region44: #{global_latent_transformer.8} parent=0 // pred_region
    %v283 = vld [vmem:[%s0] sm:$0xff]
    %v284 = vld [vmem:[%s0 + $0x8] sm:$0xff]
    %v285 = vld [vmem:[#allocation3] sm:$0xff]
    %v286 = vld [vmem:[#allocation3 + $0x8] sm:$0xff]
    %v287 = vadd.f32 %v283, %v285
    %v288 = vadd.f32 %v284, %v286
    %v289 = vld [vmem:[%s6] sm:$0x1]
    %v291 = vlaneseq
    %v292 = vshrl.u32 %v291, 7
    %v293 = vsub.s32 0, %v292
    %v294 = vrot.slane %v289, %v293
    %v296 = vadd.f32 %v287, %v294
    %v297 = vadd.f32 %v288, %v294
    %298 = vst.msk [vmem:[%s9] sm:$0xff] %vm113, %v296
    %299 = vst.msk [vmem:[%s9 + $0x8] sm:$0xff] %vm113, %v297
  $region45: #{global_latent_transformer.8} parent=0 // pred_fallthru
    _
  // Predicated region
  $region46: #{global_latent_transformer.8} parent=0 // pred_check
    _
  $region47: #{global_latent_transformer.8} parent=0 // pred_check_branch
    %301 = sbr.rel (0) target = $region49
  $region48: #{global_latent_transformer.8} parent=0 // pred_region
    _
  $region49: #{global_latent_transformer.8} parent=0 // pred_fallthru
    _
  // Predicated region
  $region50: #{global_latent_transformer.8} parent=0 // pred_check
    _
  $region51: #{global_latent_transformer.8} parent=0 // pred_check_branch
    %303 = sbr.rel (0) target = $region53
  $region52: #{global_latent_transformer.8} parent=0 // pred_region
    _
  $region53: #{global_latent_transformer.8} parent=0 // pred_fallthru
    _

// kernel: global_latent_transformer.6
$region0: #{global_latent_transformer.6}
  #allocation0 [shape = 'u32[]', space=smem, size = 0x4, offset = 0x4, fixed_abs, tag = 'smem constant byte address 0x4 - core index']
  #allocation1 [shape = 'u32[144,128]{1,0:T(1,128)}', space=vmem, size = 0x12000, scoped, tag = 'internal scratch']
  #allocation2 [shape = 'bf16[8,32]{1,0:T(8,128)(2,1)}', space=vmem, size = 0x800, scoped, tag = 'scratch operand']
  %s0 = inlined_call_operand.vmem [shape: f32[2,8,32], index: 0, kind: input, shape index: {}]
  %s1 = inlined_call_operand.vmem [shape: f32[1,32], index: 1, kind: input, shape index: {}]
  %s2 = inlined_call_operand.vmem [shape: f32[1,32], index: 2, kind: input, shape index: {}]
  %s3 = inlined_call_operand.vmem [shape: bf16[4,32,8], index: 3, kind: input, shape index: {}]
  %s4 = inlined_call_operand.vmem [shape: bf16[4,32,8], index: 4, kind: input, shape index: {}]
  %s5 = inlined_call_operand.vmem [shape: bf16[4,32,8], index: 5, kind: input, shape index: {}]
  %s6 = inlined_call_operand.vmem [shape: f32[4,1,8], index: 6, kind: input, shape index: {}]
  %s7 = inlined_call_operand.vmem [shape: f32[4,1,8], index: 7, kind: input, shape index: {}]
  %s8 = inlined_call_operand.vmem [shape: f32[4,1,8], index: 8, kind: input, shape index: {}]
  %s9 = inlined_call_operand.vmem [shape: bf16[2,4,8,8], index: 9, kind: output, shape index: {0}]
  %s10 = inlined_call_operand.vmem [shape: bf16[2,4,8,8], index: 10, kind: output, shape index: {1}]
  %s11 = inlined_call_operand.vmem [shape: bf16[2,4,8,8], index: 11, kind: output, shape index: {2}]
  %12 = xla_tuple %s9, %s10, %s11
  %s13 = sld [smem:[#allocation0]]
  $region89: #{global_latent_transformer.6} parent=0
    _
  %s15 = ssub.s32 1, %s13
  %s16 = scalar_select 0, %s15, %s13
  loop: start=0, step=1, limit=4
  $region2: #{global_latent_transformer.6} parent=0 // loop_pre_header
    _
  $region3: #{global_latent_transformer.6} parent=0 // loop_header
    %s18 = sphi 0, %s22
    %p19 = scmp.ge.s32.totalorder %s18, 4
    %s25 = sphi 0, %s44
    %s26 = sphi 0, %s40
    %s27 = sphi 0, %s36
    %s28 = sphi 0, %s25
    %s29 = sphi 0, %s26
    %s30 = sphi 0, %s27
    %s31 = sphi 0, %s28
    %s32 = sphi 0, %s29
    %s33 = sphi 0, %s30
    %s49 = sphi 0, %s51
    %s52 = sphi 0, %s49
    %s53 = sphi 0, %s52
    %s69 = sphi 0, %s53
    %s73 = sphi 0, %s73
    %s75 = sphi 0, %s73
    %s76 = sphi 0, %s75
    %s90 = sphi 0, %s76
    %s94 = sphi 0, %s94
    %s96 = sphi 0, %s94
    %s97 = sphi 0, %s96
    %s111 = sphi 0, %s97
    %s117 = sphi 0, %s119
    %s120 = sphi 0, %s117
    %s121 = sphi 0, %s120
    %s137 = sphi 0, %s121
    %s143 = sphi 0, %s145
    %s146 = sphi 0, %s143
    %s147 = sphi 0, %s146
    %s163 = sphi 0, %s147
    %s169 = sphi 0, %s171
    %s172 = sphi 0, %s169
    %s173 = sphi 0, %s172
    %s189 = sphi 0, %s173
    %s195 = sphi 0, %s197
    %s198 = sphi 0, %s195
    %s199 = sphi 0, %s198
    %s215 = sphi 0, %s199
    %s221 = sphi 0, %s223
    %s224 = sphi 0, %s221
    %s225 = sphi 0, %s224
    %s241 = sphi 0, %s225
    %s247 = sphi 0, %s249
    %s250 = sphi 0, %s247
    %s251 = sphi 0, %s250
    %s267 = sphi 0, %s251
    %s277 = sphi 0, %s279
    %s280 = sphi 0, %s277
    %s281 = sphi 0, %s280
    %s297 = sphi 0, %s281
    %s307 = sphi 0, %s309
    %s310 = sphi 0, %s307
    %s311 = sphi 0, %s310
    %s327 = sphi 0, %s311
    %s337 = sphi 0, %s339
    %s340 = sphi 0, %s337
    %s341 = sphi 0, %s340
    %s357 = sphi 0, %s341
  $region4: #{global_latent_transformer.6} parent=0 // loop_header_branch
    %21 = sbr.rel (%p19) target = $region8
  $region5: #{global_latent_transformer.6} parent=0 // loop_body
    %s23 = ssub.s32 %s18, 1
    %s24 = ssub.s32 %s18, 2
    %s34 = sadd.s32 1, %s27
    %p35 = scmp.ge.s32.totalorder %s34, 1
    %s36 = scalar_select %p35, 0, %s34
    %s37 = sadd.s32 1, %s26
    %s38 = scalar_select %p35, %s37, %s26
    %p39 = scmp.ge.s32.totalorder %s38, 1
    %s40 = scalar_select %p39, 0, %s38
    %s41 = sadd.s32 1, %s25
    %s42 = scalar_select %p39, %s41, %s25
    %p43 = scmp.ge.s32.totalorder %s42, 2
    %s44 = scalar_select %p43, 0, %s42
    %s45 = ssub.s32 %s25, %s44
    %s46 = ssub.s32 %s26, %s40
    %s47 = sor.u32 %s45, %s46
    %p48 = scmp.eq.s32.totalorder %s47, 0
    %s50 = sadd.s32 %s49, 1
    %s51 = scalar_select %p48, %s49, %s50
    %p54 = pneg %p48
    %p55 = scmp.eq.s32.totalorder %s18, 1
    %p56 = por %p54, %p55
    %p57 = scmp.ne.s32.totalorder %s49, %s52
    %p58 = scmp.eq.s32.totalorder %s18, 0
    %p59 = por %p57, %p58
    %p60 = scmp.ne.s32.totalorder %s49, %s52
    %p61 = scmp.eq.s32.totalorder %s23, 1
    %p62 = por %p60, %p61
    %p63 = scmp.ne.s32.totalorder %s52, %s53
    %p64 = scmp.eq.s32.totalorder %s23, 0
    %p65 = por %p63, %p64
    %p66 = scmp.ne.s32.totalorder %s52, %s53
    %p67 = scmp.eq.s32.totalorder %s24, 1
    %p68 = por %p66, %p67
    %p70 = scmp.ne.s32.totalorder %s53, %s69
    %p71 = scmp.eq.s32.totalorder %s24, 0
    %p72 = por %p70, %p71
    %s74 = sadd.s32 %s73, 1
    %p77 = scmp.eq.s32.totalorder %s18, 1
    %p78 = scmp.ne.s32.totalorder %s73, %s75
    %p79 = scmp.eq.s32.totalorder %s18, 0
    %p80 = por %p78, %p79
    %p81 = scmp.ne.s32.totalorder %s73, %s75
    %p82 = scmp.eq.s32.totalorder %s23, 1
    %p83 = por %p81, %p82
    %p84 = scmp.ne.s32.totalorder %s75, %s76
    %p85 = scmp.eq.s32.totalorder %s23, 0
    %p86 = por %p84, %p85
    %p87 = scmp.ne.s32.totalorder %s75, %s76
    %p88 = scmp.eq.s32.totalorder %s24, 1
    %p89 = por %p87, %p88
    %p91 = scmp.ne.s32.totalorder %s76, %s90
    %p92 = scmp.eq.s32.totalorder %s24, 0
    %p93 = por %p91, %p92
    %s95 = sadd.s32 %s94, 1
    %p98 = scmp.eq.s32.totalorder %s18, 1
    %p99 = scmp.ne.s32.totalorder %s94, %s96
    %p100 = scmp.eq.s32.totalorder %s18, 0
    %p101 = por %p99, %p100
    %p102 = scmp.ne.s32.totalorder %s94, %s96
    %p103 = scmp.eq.s32.totalorder %s23, 1
    %p104 = por %p102, %p103
    %p105 = scmp.ne.s32.totalorder %s96, %s97
    %p106 = scmp.eq.s32.totalorder %s23, 0
    %p107 = por %p105, %p106
    %p108 = scmp.ne.s32.totalorder %s96, %s97
    %p109 = scmp.eq.s32.totalorder %s24, 1
    %p110 = por %p108, %p109
    %p112 = scmp.ne.s32.totalorder %s97, %s111
    %p113 = scmp.eq.s32.totalorder %s24, 0
    %p114 = por %p112, %p113
    %s115 = ssub.s32 %s27, %s36
    %p116 = scmp.eq.s32.totalorder %s115, 0
    %s118 = sadd.s32 %s117, 1
    %s119 = scalar_select %p116, %s117, %s118
    %p122 = pneg %p116
    %p123 = scmp.eq.s32.totalorder %s18, 1
    %p124 = por %p122, %p123
    %p125 = scmp.ne.s32.totalorder %s117, %s120
    %p126 = scmp.eq.s32.totalorder %s18, 0
    %p127 = por %p125, %p126
    %p128 = scmp.ne.s32.totalorder %s117, %s120
    %p129 = scmp.eq.s32.totalorder %s23, 1
    %p130 = por %p128, %p129
    %p131 = scmp.ne.s32.totalorder %s120, %s121
    %p132 = scmp.eq.s32.totalorder %s23, 0
    %p133 = por %p131, %p132
    %p134 = scmp.ne.s32.totalorder %s120, %s121
    %p135 = scmp.eq.s32.totalorder %s24, 1
    %p136 = por %p134, %p135
    %p138 = scmp.ne.s32.totalorder %s121, %s137
    %p139 = scmp.eq.s32.totalorder %s24, 0
    %p140 = por %p138, %p139
    %s141 = ssub.s32 %s27, %s36
    %p142 = scmp.eq.s32.totalorder %s141, 0
    %s144 = sadd.s32 %s143, 1
    %s145 = scalar_select %p142, %s143, %s144
    %p148 = pneg %p142
    %p149 = scmp.eq.s32.totalorder %s18, 1
    %p150 = por %p148, %p149
    %p151 = scmp.ne.s32.totalorder %s143, %s146
    %p152 = scmp.eq.s32.totalorder %s18, 0
    %p153 = por %p151, %p152
    %p154 = scmp.ne.s32.totalorder %s143, %s146
    %p155 = scmp.eq.s32.totalorder %s23, 1
    %p156 = por %p154, %p155
    %p157 = scmp.ne.s32.totalorder %s146, %s147
    %p158 = scmp.eq.s32.totalorder %s23, 0
    %p159 = por %p157, %p158
    %p160 = scmp.ne.s32.totalorder %s146, %s147
    %p161 = scmp.eq.s32.totalorder %s24, 1
    %p162 = por %p160, %p161
    %p164 = scmp.ne.s32.totalorder %s147, %s163
    %p165 = scmp.eq.s32.totalorder %s24, 0
    %p166 = por %p164, %p165
    %s167 = ssub.s32 %s27, %s36
    %p168 = scmp.eq.s32.totalorder %s167, 0
    %s170 = sadd.s32 %s169, 1
    %s171 = scalar_select %p168, %s169, %s170
    %p174 = pneg %p168
    %p175 = scmp.eq.s32.totalorder %s18, 1
    %p176 = por %p174, %p175
    %p177 = scmp.ne.s32.totalorder %s169, %s172
    %p178 = scmp.eq.s32.totalorder %s18, 0
    %p179 = por %p177, %p178
    %p180 = scmp.ne.s32.totalorder %s169, %s172
    %p181 = scmp.eq.s32.totalorder %s23, 1
    %p182 = por %p180, %p181
    %p183 = scmp.ne.s32.totalorder %s172, %s173
    %p184 = scmp.eq.s32.totalorder %s23, 0
    %p185 = por %p183, %p184
    %p186 = scmp.ne.s32.totalorder %s172, %s173
    %p187 = scmp.eq.s32.totalorder %s24, 1
    %p188 = por %p186, %p187
    %p190 = scmp.ne.s32.totalorder %s173, %s189
    %p191 = scmp.eq.s32.totalorder %s24, 0
    %p192 = por %p190, %p191
    %s193 = ssub.s32 %s27, %s36
    %p194 = scmp.eq.s32.totalorder %s193, 0
    %s196 = sadd.s32 %s195, 1
    %s197 = scalar_select %p194, %s195, %s196
    %p200 = pneg %p194
    %p201 = scmp.eq.s32.totalorder %s18, 1
    %p202 = por %p200, %p201
    %p203 = scmp.ne.s32.totalorder %s195, %s198
    %p204 = scmp.eq.s32.totalorder %s18, 0
    %p205 = por %p203, %p204
    %p206 = scmp.ne.s32.totalorder %s195, %s198
    %p207 = scmp.eq.s32.totalorder %s23, 1
    %p208 = por %p206, %p207
    %p209 = scmp.ne.s32.totalorder %s198, %s199
    %p210 = scmp.eq.s32.totalorder %s23, 0
    %p211 = por %p209, %p210
    %p212 = scmp.ne.s32.totalorder %s198, %s199
    %p213 = scmp.eq.s32.totalorder %s24, 1
    %p214 = por %p212, %p213
    %p216 = scmp.ne.s32.totalorder %s199, %s215
    %p217 = scmp.eq.s32.totalorder %s24, 0
    %p218 = por %p216, %p217
    %s219 = ssub.s32 %s27, %s36
    %p220 = scmp.eq.s32.totalorder %s219, 0
    %s222 = sadd.s32 %s221, 1
    %s223 = scalar_select %p220, %s221, %s222
    %p226 = pneg %p220
    %p227 = scmp.eq.s32.totalorder %s18, 1
    %p228 = por %p226, %p227
    %p229 = scmp.ne.s32.totalorder %s221, %s224
    %p230 = scmp.eq.s32.totalorder %s18, 0
    %p231 = por %p229, %p230
    %p232 = scmp.ne.s32.totalorder %s221, %s224
    %p233 = scmp.eq.s32.totalorder %s23, 1
    %p234 = por %p232, %p233
    %p235 = scmp.ne.s32.totalorder %s224, %s225
    %p236 = scmp.eq.s32.totalorder %s23, 0
    %p237 = por %p235, %p236
    %p238 = scmp.ne.s32.totalorder %s224, %s225
    %p239 = scmp.eq.s32.totalorder %s24, 1
    %p240 = por %p238, %p239
    %p242 = scmp.ne.s32.totalorder %s225, %s241
    %p243 = scmp.eq.s32.totalorder %s24, 0
    %p244 = por %p242, %p243
    %s245 = ssub.s32 %s27, %s36
    %p246 = scmp.eq.s32.totalorder %s245, 0
    %s248 = sadd.s32 %s247, 1
    %s249 = scalar_select %p246, %s247, %s248
    %p252 = pneg %p246
    %p253 = scmp.eq.s32.totalorder %s18, 1
    %p254 = por %p252, %p253
    %p255 = scmp.ne.s32.totalorder %s247, %s250
    %p256 = scmp.eq.s32.totalorder %s18, 0
    %p257 = por %p255, %p256
    %p258 = scmp.ne.s32.totalorder %s247, %s250
    %p259 = scmp.eq.s32.totalorder %s23, 1
    %p260 = por %p258, %p259
    %p261 = scmp.ne.s32.totalorder %s250, %s251
    %p262 = scmp.eq.s32.totalorder %s23, 0
    %p263 = por %p261, %p262
    %p264 = scmp.ne.s32.totalorder %s250, %s251
    %p265 = scmp.eq.s32.totalorder %s24, 1
    %p266 = por %p264, %p265
    %p268 = scmp.ne.s32.totalorder %s251, %s267
    %p269 = scmp.eq.s32.totalorder %s24, 0
    %p270 = por %p268, %p269
    %s271 = ssub.s32 %s25, %s44
    %s272 = ssub.s32 %s27, %s36
    %s273 = sor.u32 %s271, %s272
    %s274 = ssub.s32 %s26, %s40
    %s275 = sor.u32 %s273, %s274
    %p276 = scmp.eq.s32.totalorder %s275, 0
    %s278 = sadd.s32 %s277, 1
    %s279 = scalar_select %p276, %s277, %s278
    %p282 = pneg %p276
    %p283 = scmp.eq.s32.totalorder %s18, 1
    %p284 = por %p282, %p283
    %p285 = scmp.ne.s32.totalorder %s277, %s280
    %p286 = scmp.eq.s32.totalorder %s18, 0
    %p287 = por %p285, %p286
    %p288 = scmp.ne.s32.totalorder %s277, %s280
    %p289 = scmp.eq.s32.totalorder %s23, 1
    %p290 = por %p288, %p289
    %p291 = scmp.ne.s32.totalorder %s280, %s281
    %p292 = scmp.eq.s32.totalorder %s23, 0
    %p293 = por %p291, %p292
    %p294 = scmp.ne.s32.totalorder %s280, %s281
    %p295 = scmp.eq.s32.totalorder %s24, 1
    %p296 = por %p294, %p295
    %p298 = scmp.ne.s32.totalorder %s281, %s297
    %p299 = scmp.eq.s32.totalorder %s24, 0
    %p300 = por %p298, %p299
    %s301 = ssub.s32 %s25, %s44
    %s302 = ssub.s32 %s27, %s36
    %s303 = sor.u32 %s301, %s302
    %s304 = ssub.s32 %s26, %s40
    %s305 = sor.u32 %s303, %s304
    %p306 = scmp.eq.s32.totalorder %s305, 0
    %s308 = sadd.s32 %s307, 1
    %s309 = scalar_select %p306, %s307, %s308
    %p312 = pneg %p306
    %p313 = scmp.eq.s32.totalorder %s18, 1
    %p314 = por %p312, %p313
    %p315 = scmp.ne.s32.totalorder %s307, %s310
    %p316 = scmp.eq.s32.totalorder %s18, 0
    %p317 = por %p315, %p316
    %p318 = scmp.ne.s32.totalorder %s307, %s310
    %p319 = scmp.eq.s32.totalorder %s23, 1
    %p320 = por %p318, %p319
    %p321 = scmp.ne.s32.totalorder %s310, %s311
    %p322 = scmp.eq.s32.totalorder %s23, 0
    %p323 = por %p321, %p322
    %p324 = scmp.ne.s32.totalorder %s310, %s311
    %p325 = scmp.eq.s32.totalorder %s24, 1
    %p326 = por %p324, %p325
    %p328 = scmp.ne.s32.totalorder %s311, %s327
    %p329 = scmp.eq.s32.totalorder %s24, 0
    %p330 = por %p328, %p329
    %s331 = ssub.s32 %s25, %s44
    %s332 = ssub.s32 %s27, %s36
    %s333 = sor.u32 %s331, %s332
    %s334 = ssub.s32 %s26, %s40
    %s335 = sor.u32 %s333, %s334
    %p336 = scmp.eq.s32.totalorder %s335, 0
    %s338 = sadd.s32 %s337, 1
    %s339 = scalar_select %p336, %s337, %s338
    %p342 = pneg %p336
    %p343 = scmp.eq.s32.totalorder %s18, 1
    %p344 = por %p342, %p343
    %p345 = scmp.ne.s32.totalorder %s337, %s340
    %p346 = scmp.eq.s32.totalorder %s18, 0
    %p347 = por %p345, %p346
    %p348 = scmp.ne.s32.totalorder %s337, %s340
    %p349 = scmp.eq.s32.totalorder %s23, 1
    %p350 = por %p348, %p349
    %p351 = scmp.ne.s32.totalorder %s340, %s341
    %p352 = scmp.eq.s32.totalorder %s23, 0
    %p353 = por %p351, %p352
    %p354 = scmp.ne.s32.totalorder %s340, %s341
    %p355 = scmp.eq.s32.totalorder %s24, 1
    %p356 = por %p354, %p355
    %p358 = scmp.ne.s32.totalorder %s341, %s357
    %p359 = scmp.eq.s32.totalorder %s24, 0
    %p360 = por %p358, %p359
    %p361 = scmp.le.s32.totalorder 1, %s18
    %p362 = scmp.lt.s32.totalorder %s18, 3
    %p363 = pnand %p361, %p362
    %p364 = pneg %p363
    // Predicated region
    $region9: #{global_latent_transformer.6} parent=5 // pred_check
      _
    $region10: #{global_latent_transformer.6} parent=5 // pred_check_branch
      %366 = sbr.rel (%p363) target = $region12
    $region11: #{global_latent_transformer.6} parent=5 // pred_region
      %s367 = ssub.s32 %s18, 1
      // Predicated region
      $region13: #{global_latent_transformer.6} parent=11 // pred_check
        %p368 = pneg %p86
      $region14: #{global_latent_transformer.6} parent=11 // pred_check_branch
        %370 = sbr.rel (%p368) target = $region16
      $region15: #{global_latent_transformer.6} parent=11 // pred_region
        _
      $region16: #{global_latent_transformer.6} parent=11 // pred_fallthru
        _
      // Predicated region
      $region17: #{global_latent_transformer.6} parent=11 // pred_check
        %p371 = pneg %p107
      $region18: #{global_latent_transformer.6} parent=11 // pred_check_branch
        %373 = sbr.rel (%p371) target = $region20
      $region19: #{global_latent_transformer.6} parent=11 // pred_region
        _
      $region20: #{global_latent_transformer.6} parent=11 // pred_fallthru
        _
      // Predicated region
      $region21: #{global_latent_transformer.6} parent=11 // pred_check
        %p374 = pneg %p133
      $region22: #{global_latent_transformer.6} parent=11 // pred_check_branch
        %376 = sbr.rel (%p374) target = $region24
      $region23: #{global_latent_transformer.6} parent=11 // pred_region
        %s377 = smul.u32 4, %s30
        %p378 = scmp.lt.s32.totalorder %s377, 3
        %s379 = scalar_select %p378, %s377, 3
        %s380 = smul.addr %s379, 4
        %s381 = smul.addr %s380, 4
        %s382 = scalar_lea.vmem %s3, %s381
        %s383 = smul.u32 4, %s30
      $region24: #{global_latent_transformer.6} parent=11 // pred_fallthru
        _
      // Predicated region
      $region25: #{global_latent_transformer.6} parent=11 // pred_check
        %p384 = pneg %p159
      $region26: #{global_latent_transformer.6} parent=11 // pred_check_branch
        %386 = sbr.rel (%p384) target = $region28
      $region27: #{global_latent_transformer.6} parent=11 // pred_region
        %s387 = smul.u32 4, %s30
        %p388 = scmp.lt.s32.totalorder %s387, 3
        %s389 = scalar_select %p388, %s387, 3
        %s390 = smul.addr %s389, 4
        %s391 = smul.addr %s390, 4
        %s392 = scalar_lea.vmem %s4, %s391
        %s393 = smul.u32 4, %s30
      $region28: #{global_latent_transformer.6} parent=11 // pred_fallthru
        _
      // Predicated region
      $region29: #{global_latent_transformer.6} parent=11 // pred_check
        %p394 = pneg %p185
      $region30: #{global_latent_transformer.6} parent=11 // pred_check_branch
        %396 = sbr.rel (%p394) target = $region32
      $region31: #{global_latent_transformer.6} parent=11 // pred_region
        %s397 = smul.u32 4, %s30
        %p398 = scmp.lt.s32.totalorder %s397, 3
        %s399 = scalar_select %p398, %s397, 3
        %s400 = smul.addr %s399, 4
        %s401 = smul.addr %s400, 4
        %s402 = scalar_lea.vmem %s5, %s401
        %s403 = smul.u32 4, %s30
      $region32: #{global_latent_transformer.6} parent=11 // pred_fallthru
        _
      // Predicated region
      $region33: #{global_latent_transformer.6} parent=11 // pred_check
        %p404 = pneg %p211
      $region34: #{global_latent_transformer.6} parent=11 // pred_check_branch
        %406 = sbr.rel (%p404) target = $region36
      $region35: #{global_latent_transformer.6} parent=11 // pred_region
        %s407 = smul.u32 4, %s30
        %p408 = scmp.lt.s32.totalorder %s407, 3
        %s409 = scalar_select %p408, %s407, 3
        %s410 = scalar_lea.vmem %s6, %s409
        %s411 = smul.u32 4, %s30
      $region36: #{global_latent_transformer.6} parent=11 // pred_fallthru
        _
      // Predicated region
      $region37: #{global_latent_transformer.6} parent=11 // pred_check
        %p412 = pneg %p237
      $region38: #{global_latent_transformer.6} parent=11 // pred_check_branch
        %414 = sbr.rel (%p412) target = $region40
      $region39: #{global_latent_transformer.6} parent=11 // pred_region
        %s415 = smul.u32 4, %s30
        %p416 = scmp.lt.s32.totalorder %s415, 3
        %s417 = scalar_select %p416, %s415, 3
        %s418 = scalar_lea.vmem %s7, %s417
        %s419 = smul.u32 4, %s30
      $region40: #{global_latent_transformer.6} parent=11 // pred_fallthru
        _
      // Predicated region
      $region41: #{global_latent_transformer.6} parent=11 // pred_check
        %p420 = pneg %p263
      $region42: #{global_latent_transformer.6} parent=11 // pred_check_branch
        %422 = sbr.rel (%p420) target = $region44
      $region43: #{global_latent_transformer.6} parent=11 // pred_region
        %s423 = smul.u32 4, %s30
        %p424 = scmp.lt.s32.totalorder %s423, 3
        %s425 = scalar_select %p424, %s423, 3
        %s426 = scalar_lea.vmem %s8, %s425
        %s427 = smul.u32 4, %s30
      $region44: #{global_latent_transformer.6} parent=11 // pred_fallthru
        _
    $region12: #{global_latent_transformer.6} parent=5 // pred_fallthru
      _
    %p428 = scmp.lt.s32.totalorder %s18, 2
    // Predicated region
    $region45: #{global_latent_transformer.6} parent=5 // pred_check
      %p429 = pneg %p428
    $region46: #{global_latent_transformer.6} parent=5 // pred_check_branch
      %431 = sbr.rel (%p429) target = $region48
    $region47: #{global_latent_transformer.6} parent=5 // pred_region
      // Predicated region
      $region49: #{global_latent_transformer.6} parent=47 // pred_check
        %p432 = pneg %p59
      $region50: #{global_latent_transformer.6} parent=47 // pred_check_branch
        %434 = sbr.rel (%p432) target = $region52
      $region51: #{global_latent_transformer.6} parent=47 // pred_region
        %p435 = scmp.lt.s32.totalorder %s25, 1
        %s436 = scalar_select %p435, %s25, 1
        %p437 = scmp.lt.s32.totalorder %s26, 0
        %s438 = scalar_select %p437, %s26, 0
        %s439 = sadd.s32 %s438, %s436
        %s440 = smul.addr %s439, 8
        %s441 = scalar_lea.vmem %s0, %s440
      $region52: #{global_latent_transformer.6} parent=47 // pred_fallthru
        _
    $region48: #{global_latent_transformer.6} parent=5 // pred_fallthru
      _
    %p442 = scmp.le.s32.totalorder 1, %s18
    %p443 = scmp.lt.s32.totalorder %s18, 3
    %p444 = pnand %p442, %p443
    %p445 = pneg %p444
    // Predicated region
    $region53: #{global_latent_transformer.6} parent=5 // pred_check
      _
    $region54: #{global_latent_transformer.6} parent=5 // pred_check_branch
      %447 = sbr.rel (%p444) target = $region56
    $region55: #{global_latent_transformer.6} parent=5 // pred_region
      %s448 = ssub.s32 %s18, 1
      %p449 = scmp.lt.s32.totalorder %s28, 1
      %s450 = scalar_select %p449, %s28, 1
      %p451 = scmp.lt.s32.totalorder %s29, 0
      %s452 = scalar_select %p451, %s29, 0
      %s453 = sadd.s32 %s452, %s450
      %s454 = smul.addr %s453, 8
      %s455 = scalar_lea.vmem %s0, %s454
      %p456 = pneg %p65
      %p457 = pneg %p62
      %p458 = pneg %p86
      %p459 = pneg %p83
      %p460 = pneg %p107
      %p461 = pneg %p104
      %s462 = smul.u32 4, %s30
      %p463 = scmp.lt.s32.totalorder %s462, 3
      %s464 = scalar_select %p463, %s462, 3
      %s465 = smul.addr %s464, 4
      %s466 = smul.addr %s465, 4
      %s467 = scalar_lea.vmem %s3, %s466
      %p468 = pneg %p133
      %p469 = pneg %p130
      %s470 = smul.u32 4, %s30
      %p471 = scmp.lt.s32.totalorder %s470, 3
      %s472 = scalar_select %p471, %s470, 3
      %s473 = smul.addr %s472, 4
      %s474 = smul.addr %s473, 4
      %s475 = scalar_lea.vmem %s4, %s474
      %p476 = pneg %p159
      %p477 = pneg %p156
      %s478 = smul.u32 4, %s30
      %p479 = scmp.lt.s32.totalorder %s478, 3
      %s480 = scalar_select %p479, %s478, 3
      %s481 = smul.addr %s480, 4
      %s482 = smul.addr %s481, 4
      %s483 = scalar_lea.vmem %s5, %s482
      %p484 = pneg %p185
      %p485 = pneg %p182
      %s486 = smul.u32 4, %s30
      %p487 = scmp.lt.s32.totalorder %s486, 3
      %s488 = scalar_select %p487, %s486, 3
      %s489 = scalar_lea.vmem %s6, %s488
      %p490 = pneg %p211
      %p491 = pneg %p208
      %s492 = smul.u32 4, %s30
      %p493 = scmp.lt.s32.totalorder %s492, 3
      %s494 = scalar_select %p493, %s492, 3
      %s495 = scalar_lea.vmem %s7, %s494
      %p496 = pneg %p237
      %p497 = pneg %p234
      %s498 = smul.u32 4, %s30
      %p499 = scmp.lt.s32.totalorder %s498, 3
      %s500 = scalar_select %p499, %s498, 3
      %s501 = scalar_lea.vmem %s8, %s500
      %p502 = pneg %p263
      %p503 = pneg %p260
      %p504 = pneg %p293
      %p505 = pneg %p290
      %s506 = smul.u32 4, %s30
      %p507 = scmp.lt.s32.totalorder %s28, 1
      %s508 = scalar_select %p507, %s28, 1
      %p509 = scmp.lt.s32.totalorder %s506, 3
      %s510 = scalar_select %p509, %s506, 3
      %p511 = scmp.lt.s32.totalorder %s29, 0
      %s512 = scalar_select %p511, %s29, 0
      %s513 = sadd.s32 %s512, %s510
      %s514 = smul.addr %s508, 4
      %s515 = sadd.s32 %s513, %s514
      %s516 = smul.addr %s515, 4
      %s517 = scalar_lea.vmem %s9, %s516
      %p518 = pneg %p323
      %p519 = pneg %p320
      %s520 = smul.u32 4, %s30
      %p521 = scmp.lt.s32.totalorder %s28, 1
      %s522 = scalar_select %p521, %s28, 1
      %p523 = scmp.lt.s32.totalorder %s520, 3
      %s524 = scalar_select %p523, %s520, 3
      %p525 = scmp.lt.s32.totalorder %s29, 0
      %s526 = scalar_select %p525, %s29, 0
      %s527 = sadd.s32 %s526, %s524
      %s528 = smul.addr %s522, 4
      %s529 = sadd.s32 %s527, %s528
      %s530 = smul.addr %s529, 4
      %s531 = scalar_lea.vmem %s10, %s530
      %p532 = pneg %p353
      %p533 = pneg %p350
      %s534 = smul.u32 4, %s30
      %p535 = scmp.lt.s32.totalorder %s28, 1
      %s536 = scalar_select %p535, %s28, 1
      %p537 = scmp.lt.s32.totalorder %s534, 3
      %s538 = scalar_select %p537, %s534, 3
      %p539 = scmp.lt.s32.totalorder %s29, 0
      %s540 = scalar_select %p539, %s29, 0
      %s541 = sadd.s32 %s540, %s538
      %s542 = smul.addr %s536, 4
      %s543 = sadd.s32 %s541, %s542
      %s544 = smul.addr %s543, 4
      %s545 = scalar_lea.vmem %s11, %s544
      %p546 = scmp.lt.s32.totalorder %s28, 1
      %s547 = scalar_select %p546, %s28, 1
      %p548 = scmp.lt.s32.totalorder %s29, 0
      %s549 = scalar_select %p548, %s29, 0
      %s550 = sadd.s32 %s549, %s547
      %s551 = smul.addr %s550, 8
      %s552 = scalar_lea.vmem %s0, %s551
      %s553 = smul.u32 4, %s30
      %p554 = scmp.lt.s32.totalorder %s553, 3
      %s555 = scalar_select %p554, %s553, 3
      %s556 = smul.addr %s555, 4
      %s557 = smul.addr %s556, 4
      %s558 = scalar_lea.vmem %s3, %s557
      %s559 = smul.u32 4, %s30
      %s560 = smul.u32 4, %s30
      %p561 = scmp.lt.s32.totalorder %s560, 3
      %s562 = scalar_select %p561, %s560, 3
      %s563 = smul.addr %s562, 4
      %s564 = smul.addr %s563, 4
      %s565 = scalar_lea.vmem %s4, %s564
      %s566 = smul.u32 4, %s30
      %s567 = smul.u32 4, %s30
      %p568 = scmp.lt.s32.totalorder %s567, 3
      %s569 = scalar_select %p568, %s567, 3
      %s570 = smul.addr %s569, 4
      %s571 = smul.addr %s570, 4
      %s572 = scalar_lea.vmem %s5, %s571
      %s573 = smul.u32 4, %s30
      %s574 = smul.u32 4, %s30
      %p575 = scmp.lt.s32.totalorder %s574, 3
      %s576 = scalar_select %p575, %s574, 3
      %s577 = scalar_lea.vmem %s6, %s576
      %s578 = smul.u32 4, %s30
      %s579 = smul.u32 4, %s30
      %p580 = scmp.lt.s32.totalorder %s579, 3
      %s581 = scalar_select %p580, %s579, 3
      %s582 = scalar_lea.vmem %s7, %s581
      %s583 = smul.u32 4, %s30
      %s584 = smul.u32 4, %s30
      %p585 = scmp.lt.s32.totalorder %s584, 3
      %s586 = scalar_select %p585, %s584, 3
      %s587 = scalar_lea.vmem %s8, %s586
      %s588 = smul.u32 4, %s30
      %s589 = smul.u32 4, %s30
      %p590 = scmp.lt.s32.totalorder %s28, 1
      %s591 = scalar_select %p590, %s28, 1
      %p592 = scmp.lt.s32.totalorder %s589, 3
      %s593 = scalar_select %p592, %s589, 3
      %p594 = scmp.lt.s32.totalorder %s29, 0
      %s595 = scalar_select %p594, %s29, 0
      %s596 = sadd.s32 %s595, %s593
      %s597 = smul.addr %s591, 4
      %s598 = sadd.s32 %s596, %s597
      %s599 = smul.addr %s598, 4
      %s600 = scalar_lea.vmem %s9, %s599
      %s601 = smul.u32 4, %s30
      %s602 = smul.u32 4, %s30
      %p603 = scmp.lt.s32.totalorder %s28, 1
      %s604 = scalar_select %p603, %s28, 1
      %p605 = scmp.lt.s32.totalorder %s602, 3
      %s606 = scalar_select %p605, %s602, 3
      %p607 = scmp.lt.s32.totalorder %s29, 0
      %s608 = scalar_select %p607, %s29, 0
      %s609 = sadd.s32 %s608, %s606
      %s610 = smul.addr %s604, 4
      %s611 = sadd.s32 %s609, %s610
      %s612 = smul.addr %s611, 4
      %s613 = scalar_lea.vmem %s10, %s612
      %s614 = smul.u32 4, %s30
      %s615 = smul.u32 4, %s30
      %p616 = scmp.lt.s32.totalorder %s28, 1
      %s617 = scalar_select %p616, %s28, 1
      %p618 = scmp.lt.s32.totalorder %s615, 3
      %s619 = scalar_select %p618, %s615, 3
      %p620 = scmp.lt.s32.totalorder %s29, 0
      %s621 = scalar_select %p620, %s29, 0
      %s622 = sadd.s32 %s621, %s619
      %s623 = smul.addr %s617, 4
      %s624 = sadd.s32 %s622, %s623
      %s625 = smul.addr %s624, 4
      %s626 = scalar_lea.vmem %s11, %s625
      %s627 = smul.u32 4, %s30
      %p629 = scmp.eq.s32.totalorder %s30, 0
      // Predicated region
      $region57: #{global_latent_transformer.6} parent=55 // pred_check
        %p630 = pneg %p629
      $region58: #{global_latent_transformer.6} parent=55 // pred_check_branch
        %632 = sbr.rel (%p630) target = $region60
      $region59: #{global_latent_transformer.6} parent=55 // pred_region
        %v633 = vld [vmem:[%s552] sm:$0xff]
        %v634 = vld [vmem:[%s1] sm:$0x1]
        %v635 = vld [vmem:[%s2] sm:$0x1]
        %vm636 = vcmask 261120
        %v637 = vsel %vm636, %v633, 0.0
        %638 = vadd.xlane.f32.xlu0 %v637
        %v639 = vpop.xlane.xlu0 %638
        %v640 = vrcp.pop 32.0
        %v641 = vmul.f32 %v639, %v640
        %v642 = vsub.f32 %v633, %v641
        %v643 = vmul.f32 %v642, %v642
        %v644 = vsel %vm636, %v643, 0.0
        %645 = vadd.xlane.f32.xlu0 %v644
        %v646 = vpop.xlane.xlu0 %645
        %v647 = vmul.f32 %v646, %v640
        %v648 = vadd.f32 %v647, 1e-06
        %v649 = vrsqrt.pop %v648
        %v650 = vmul.f32 %v642, %v649
        %v652 = vlaneseq
        %v653 = vshrl.u32 %v652, 7
        %v654 = vsub.s32 0, %v653
        %v655 = vrot.slane %v634, %v654
        %v657 = vmul.f32 %v650, %v655
        %v659 = vlaneseq
        %v660 = vshrl.u32 %v659, 7
        %v661 = vsub.s32 0, %v660
        %v662 = vrot.slane %v635, %v661
        %v664 = vadd.f32 %v657, %v662
        %v665 = vpack.c.bf16 %v664, %v664
        %vm666 = vcmask 257024
        %667 = vst.msk [vmem:[#allocation2] sm:$0xf] %vm666, %v665
      $region60: #{global_latent_transformer.6} parent=55 // pred_fallthru
        _
      %v668 = vld [vmem:[#allocation2] sm:$0xf]
      %v669 = vld [vmem:[%s558] sm:$0xf]
      %v670 = vld [vmem:[%s558 + $0x4] sm:$0xf]
      %v671 = vld [vmem:[%s558 + $0x8] sm:$0xf]
      %v672 = vld [vmem:[%s558 + $0xc] sm:$0xf]
      %v673 = vld [vmem:[%s577] sm:$0x1]
      %v675 = vlaneseq
      %v676 = vshrl.u32 %v675, 7
      %v677 = vsub.s32 0, %v676
      %v678 = vrot.slane %v673, %v677
      %v684 = vunpack.c.l.b16 %v669
      %v685 = vunpack.c.l.b16 %v670
      %v686 = vunpack.c.l.b16 %v671
      %v687 = vunpack.c.l.b16 %v672
      %v688 = vpack.c.b16 %v685, %v684
      %v689 = vpack.c.b16 %v687, %v686
      %vm692 = vcmask 261120
      %v694 = vsel %vm692, %v668, 0
      %696 = vmatprep.subr.bf16.mxu0 0
      %697 = vmatpush1.bf16.msra.mxu0 %v688
      %698 = vmatprep.subr.bf16.mxu0 0
      %699 = vmatpush1.bf16.msra.mxu0 %v689
      %700 = vmatprep.subr.bf16.mxu0 0
      %701 = vmatpush1.bf16.msra.mxu0 0
      %702 = vmatprep.subr.bf16.mxu0 0
      %703 = vmatpush1.bf16.msra.mxu0 0
      %704 = vmatprep.subr.bf16.mxu0 0
      %705 = vmatpush1.bf16.msra.mxu0 0
      %706 = vmatprep.subr.bf16.mxu0 0
      %707 = vmatpush1.bf16.msra.mxu0 0
      %708 = vmatprep.subr.bf16.mxu0 0
      %709 = vmatpush1.bf16.msra.mxu0 0
      %710 = vmatprep.subr.bf16.mxu0 0
      %711 = vmatpush1.bf16.msra.mxu0 0
      %712 = vmatprep.subr.bf16.mxu0 0
      %713 = vmatpush1.bf16.msra.mxu0 0
      %714 = vmatprep.subr.bf16.mxu0 0
      %715 = vmatpush1.bf16.msra.mxu0 0
      %716 = vmatprep.subr.bf16.mxu0 0
      %717 = vmatpush1.bf16.msra.mxu0 0
      %718 = vmatprep.subr.bf16.mxu0 0
      %719 = vmatpush1.bf16.msra.mxu0 0
      %720 = vmatprep.subr.bf16.mxu0 0
      %721 = vmatpush1.bf16.msra.mxu0 0
      %722 = vmatprep.subr.bf16.mxu0 0
      %723 = vmatpush1.bf16.msra.mxu0 0
      %724 = vmatprep.subr.bf16.mxu0 0
      %725 = vmatpush1.bf16.msra.mxu0 0
      %726 = vmatprep.subr.bf16.mxu0 0
      %727 = vmatpush1.bf16.msra.mxu0 0
      %728 = vmatprep.mubr.bf16.mxu0 0
      %729 = vmatmul.mubr.bf16.gmra.mrb[0].mxu0 %v694
      %v730 = vpop.f32.mrb[0].mxu0
      %v731 = vadd.f32 %v678, %v730
      %v732 = vpop.f32.mrb[0].mxu0
      %v733 = vpop.f32.mrb[0].mxu0
      %v734 = vpop.f32.mrb[0].mxu0
      %735 = vdwg.mxu0
      %v736 = vpack.c.bf16 %v731, %v731
      %vm737 = vcmask 60416
      %738 = vst.msk [vmem:[%s600] sm:$0xf] %vm737, %v736
      %v739 = vld [vmem:[%s565] sm:$0xf]
      %v740 = vld [vmem:[%s565 + $0x4] sm:$0xf]
      %v741 = vld [vmem:[%s565 + $0x8] sm:$0xf]
      %v742 = vld [vmem:[%s565 + $0xc] sm:$0xf]
      %v743 = vld [vmem:[%s582] sm:$0x1]
      %v745 = vlaneseq
      %v746 = vshrl.u32 %v745, 7
      %v747 = vsub.s32 0, %v746
      %v748 = vrot.slane %v743, %v747
      %v754 = vunpack.c.l.b16 %v739
      %v755 = vunpack.c.l.b16 %v740
      %v756 = vunpack.c.l.b16 %v741
      %v757 = vunpack.c.l.b16 %v742
      %v758 = vpack.c.b16 %v755, %v754
      %v759 = vpack.c.b16 %v757, %v756
      %762 = vmatprep.subr.bf16.mxu0 0
      %763 = vmatpush1.bf16.msra.mxu0 %v758
      %764 = vmatprep.subr.bf16.mxu0 0
      %765 = vmatpush1.bf16.msra.mxu0 %v759
      %766 = vmatprep.subr.bf16.mxu0 0
      %767 = vmatpush1.bf16.msra.mxu0 0
      %768 = vmatprep.subr.bf16.mxu0 0
      %769 = vmatpush1.bf16.msra.mxu0 0
      %770 = vmatprep.subr.bf16.mxu0 0
      %771 = vmatpush1.bf16.msra.mxu0 0
      %772 = vmatprep.subr.bf16.mxu0 0
      %773 = vmatpush1.bf16.msra.mxu0 0
      %774 = vmatprep.subr.bf16.mxu0 0
      %775 = vmatpush1.bf16.msra.mxu0 0
      %776 = vmatprep.subr.bf16.mxu0 0
      %777 = vmatpush1.bf16.msra.mxu0 0
      %778 = vmatprep.subr.bf16.mxu0 0
      %779 = vmatpush1.bf16.msra.mxu0 0
      %780 = vmatprep.subr.bf16.mxu0 0
      %781 = vmatpush1.bf16.msra.mxu0 0
      %782 = vmatprep.subr.bf16.mxu0 0
      %783 = vmatpush1.bf16.msra.mxu0 0
      %784 = vmatprep.subr.bf16.mxu0 0
      %785 = vmatpush1.bf16.msra.mxu0 0
      %786 = vmatprep.subr.bf16.mxu0 0
      %787 = vmatpush1.bf16.msra.mxu0 0
      %788 = vmatprep.subr.bf16.mxu0 0
      %789 = vmatpush1.bf16.msra.mxu0 0
      %790 = vmatprep.subr.bf16.mxu0 0
      %791 = vmatpush1.bf16.msra.mxu0 0
      %792 = vmatprep.subr.bf16.mxu0 0
      %793 = vmatpush1.bf16.msra.mxu0 0
      %794 = vmatprep.mubr.bf16.mxu0 0
      %795 = vmatmul.mubr.bf16.gmra.mrb[0].mxu0 %v694
      %v796 = vpop.f32.mrb[0].mxu0
      %v797 = vadd.f32 %v748, %v796
      %v798 = vpop.f32.mrb[0].mxu0
      %v799 = vpop.f32.mrb[0].mxu0
      %v800 = vpop.f32.mrb[0].mxu0
      %801 = vdwg.mxu0
      %v802 = vpack.c.bf16 %v797, %v797
      %803 = vst.msk [vmem:[%s613] sm:$0xf] %vm737, %v802
      %v804 = vld [vmem:[%s572] sm:$0xf]
      %v805 = vld [vmem:[%s572 + $0x4] sm:$0xf]
      %v806 = vld [vmem:[%s572 + $0x8] sm:$0xf]
      %v807 = vld [vmem:[%s572 + $0xc] sm:$0xf]
      %v808 = vld [vmem:[%s587] sm:$0x1]
      %v810 = vlaneseq
      %v811 = vshrl.u32 %v810, 7
      %v812 = vsub.s32 0, %v811
      %v813 = vrot.slane %v808, %v812
      %v819 = vunpack.c.l.b16 %v804
      %v820 = vunpack.c.l.b16 %v805
      %v821 = vunpack.c.l.b16 %v806
      %v822 = vunpack.c.l.b16 %v807
      %v823 = vpack.c.b16 %v820, %v819
      %v824 = vpack.c.b16 %v822, %v821
      %827 = vmatprep.subr.bf16.mxu0 0
      %828 = vmatpush1.bf16.msra.mxu0 %v823
      %829 = vmatprep.subr.bf16.mxu0 0
      %830 = vmatpush1.bf16.msra.mxu0 %v824
      %831 = vmatprep.subr.bf16.mxu0 0
      %832 = vmatpush1.bf16.msra.mxu0 0
      %833 = vmatprep.subr.bf16.mxu0 0
      %834 = vmatpush1.bf16.msra.mxu0 0
      %835 = vmatprep.subr.bf16.mxu0 0
      %836 = vmatpush1.bf16.msra.mxu0 0
      %837 = vmatprep.subr.bf16.mxu0 0
      %838 = vmatpush1.bf16.msra.mxu0 0
      %839 = vmatprep.subr.bf16.mxu0 0
      %840 = vmatpush1.bf16.msra.mxu0 0
      %841 = vmatprep.subr.bf16.mxu0 0
      %842 = vmatpush1.bf16.msra.mxu0 0
      %843 = vmatprep.subr.bf16.mxu0 0
      %844 = vmatpush1.bf16.msra.mxu0 0
      %845 = vmatprep.subr.bf16.mxu0 0
      %846 = vmatpush1.bf16.msra.mxu0 0
      %847 = vmatprep.subr.bf16.mxu0 0
      %848 = vmatpush1.bf16.msra.mxu0 0
      %849 = vmatprep.subr.bf16.mxu0 0
      %850 = vmatpush1.bf16.msra.mxu0 0
      %851 = vmatprep.subr.bf16.mxu0 0
      %852 = vmatpush1.bf16.msra.mxu0 0
      %853 = vmatprep.subr.bf16.mxu0 0
      %854 = vmatpush1.bf16.msra.mxu0 0
      %855 = vmatprep.subr.bf16.mxu0 0
      %856 = vmatpush1.bf16.msra.mxu0 0
      %857 = vmatprep.subr.bf16.mxu0 0
      %858 = vmatpush1.bf16.msra.mxu0 0
      %859 = vmatprep.mubr.bf16.mxu0 0
      %860 = vmatmul.mubr.bf16.gmra.mrb[0].mxu0 %v694
      %v861 = vpop.f32.mrb[0].mxu0
      %v862 = vadd.f32 %v813, %v861
      %v863 = vpop.f32.mrb[0].mxu0
      %v864 = vpop.f32.mrb[0].mxu0
      %v865 = vpop.f32.mrb[0].mxu0
      %866 = vdwg.mxu0
      %v867 = vpack.c.bf16 %v862, %v862
      %868 = vst.msk [vmem:[%s626] sm:$0xf] %vm737, %v867
      %s869 = scalar_lea.vmem %s558, 16
      %v870 = vld [vmem:[%s869] sm:$0xf]
      %v871 = vld [vmem:[%s869 + $0x4] sm:$0xf]
      %v872 = vld [vmem:[%s869 + $0x8] sm:$0xf]
      %v873 = vld [vmem:[%s869 + $0xc] sm:$0xf]
      %s874 = scalar_lea.vmem %s577, 1
      %v875 = vld [vmem:[%s874] sm:$0x1]
      %v877 = vlaneseq
      %v878 = vshrl.u32 %v877, 7
      %v879 = vsub.s32 0, %v878
      %v880 = vrot.slane %v875, %v879
      %v886 = vunpack.c.l.b16 %v870
      %v887 = vunpack.c.l.b16 %v871
      %v888 = vunpack.c.l.b16 %v872
      %v889 = vunpack.c.l.b16 %v873
      %v890 = vpack.c.b16 %v887, %v886
      %v891 = vpack.c.b16 %v889, %v888
      %894 = vmatprep.subr.bf16.mxu0 0
      %895 = vmatpush1.bf16.msra.mxu0 %v890
      %896 = vmatprep.subr.bf16.mxu0 0
      %897 = vmatpush1.bf16.msra.mxu0 %v891
      %898 = vmatprep.subr.bf16.mxu0 0
      %899 = vmatpush1.bf16.msra.mxu0 0
      %900 = vmatprep.subr.bf16.mxu0 0
      %901 = vmatpush1.bf16.msra.mxu0 0
      %902 = vmatprep.subr.bf16.mxu0 0
      %903 = vmatpush1.bf16.msra.mxu0 0
      %904 = vmatprep.subr.bf16.mxu0 0
      %905 = vmatpush1.bf16.msra.mxu0 0
      %906 = vmatprep.subr.bf16.mxu0 0
      %907 = vmatpush1.bf16.msra.mxu0 0
      %908 = vmatprep.subr.bf16.mxu0 0
      %909 = vmatpush1.bf16.msra.mxu0 0
      %910 = vmatprep.subr.bf16.mxu0 0
      %911 = vmatpush1.bf16.msra.mxu0 0
      %912 = vmatprep.subr.bf16.mxu0 0
      %913 = vmatpush1.bf16.msra.mxu0 0
      %914 = vmatprep.subr.bf16.mxu0 0
      %915 = vmatpush1.bf16.msra.mxu0 0
      %916 = vmatprep.subr.bf16.mxu0 0
      %917 = vmatpush1.bf16.msra.mxu0 0
      %918 = vmatprep.subr.bf16.mxu0 0
      %919 = vmatpush1.bf16.msra.mxu0 0
      %920 = vmatprep.subr.bf16.mxu0 0
      %921 = vmatpush1.bf16.msra.mxu0 0
      %922 = vmatprep.subr.bf16.mxu0 0
      %923 = vmatpush1.bf16.msra.mxu0 0
      %924 = vmatprep.subr.bf16.mxu0 0
      %925 = vmatpush1.bf16.msra.mxu0 0
      %926 = vmatprep.mubr.bf16.mxu0 0
      %927 = vmatmul.mubr.bf16.gmra.mrb[0].mxu0 %v694
      %v928 = vpop.f32.mrb[0].mxu0
      %v929 = vadd.f32 %v880, %v928
      %v930 = vpop.f32.mrb[0].mxu0
      %v931 = vpop.f32.mrb[0].mxu0
      %v932 = vpop.f32.mrb[0].mxu0
      %933 = vdwg.mxu0
      %v934 = vpack.c.bf16 %v929, %v929
      %s935 = scalar_lea.vmem %s600, 4
      %936 = vst.msk [vmem:[%s935] sm:$0xf] %vm737, %v934
      %s937 = scalar_lea.vmem %s565, 16
      %v938 = vld [vmem:[%s937] sm:$0xf]
      %v939 = vld [vmem:[%s937 + $0x4] sm:$0xf]
      %v940 = vld [vmem:[%s937 + $0x8] sm:$0xf]
      %v941 = vld [vmem:[%s937 + $0xc] sm:$0xf]
      %s942 = scalar_lea.vmem %s582, 1
      %v943 = vld [vmem:[%s942] sm:$0x1]
      %v945 = vlaneseq
      %v946 = vshrl.u32 %v945, 7
      %v947 = vsub.s32 0, %v946
      %v948 = vrot.slane %v943, %v947
      %v954 = vunpack.c.l.b16 %v938
      %v955 = vunpack.c.l.b16 %v939
      %v956 = vunpack.c.l.b16 %v940
      %v957 = vunpack.c.l.b16 %v941
      %v958 = vpack.c.b16 %v955, %v954
      %v959 = vpack.c.b16 %v957, %v956
      %962 = vmatprep.subr.bf16.mxu0 0
      %963 = vmatpush1.bf16.msra.mxu0 %v958
      %964 = vmatprep.subr.bf16.mxu0 0
      %965 = vmatpush1.bf16.msra.mxu0 %v959
      %966 = vmatprep.subr.bf16.mxu0 0
      %967 = vmatpush1.bf16.msra.mxu0 0
      %968 = vmatprep.subr.bf16.mxu0 0
      %969 = vmatpush1.bf16.msra.mxu0 0
      %970 = vmatprep.subr.bf16.mxu0 0
      %971 = vmatpush1.bf16.msra.mxu0 0
      %972 = vmatprep.subr.bf16.mxu0 0
      %973 = vmatpush1.bf16.msra.mxu0 0
      %974 = vmatprep.subr.bf16.mxu0 0
      %975 = vmatpush1.bf16.msra.mxu0 0
      %976 = vmatprep.subr.bf16.mxu0 0
      %977 = vmatpush1.bf16.msra.mxu0 0
      %978 = vmatprep.subr.bf16.mxu0 0
      %979 = vmatpush1.bf16.msra.mxu0 0
      %980 = vmatprep.subr.bf16.mxu0 0
      %981 = vmatpush1.bf16.msra.mxu0 0
      %982 = vmatprep.subr.bf16.mxu0 0
      %983 = vmatpush1.bf16.msra.mxu0 0
      %984 = vmatprep.subr.bf16.mxu0 0
      %985 = vmatpush1.bf16.msra.mxu0 0
      %986 = vmatprep.subr.bf16.mxu0 0
      %987 = vmatpush1.bf16.msra.mxu0 0
      %988 = vmatprep.subr.bf16.mxu0 0
      %989 = vmatpush1.bf16.msra.mxu0 0
      %990 = vmatprep.subr.bf16.mxu0 0
      %991 = vmatpush1.bf16.msra.mxu0 0
      %992 = vmatprep.subr.bf16.mxu0 0
      %993 = vmatpush1.bf16.msra.mxu0 0
      %994 = vmatprep.mubr.bf16.mxu0 0
      %995 = vmatmul.mubr.bf16.gmra.mrb[0].mxu0 %v694
      %v996 = vpop.f32.mrb[0].mxu0
      %v997 = vadd.f32 %v948, %v996
      %v998 = vpop.f32.mrb[0].mxu0
      %v999 = vpop.f32.mrb[0].mxu0
      %v1000 = vpop.f32.mrb[0].mxu0
      %1001 = vdwg.mxu0
      %v1002 = vpack.c.bf16 %v997, %v997
      %s1003 = scalar_lea.vmem %s613, 4
      %1004 = vst.msk [vmem:[%s1003] sm:$0xf] %vm737, %v1002
      %s1005 = scalar_lea.vmem %s572, 16
      %v1006 = vld [vmem:[%s1005] sm:$0xf]
      %v1007 = vld [vmem:[%s1005 + $0x4] sm:$0xf]
      %v1008 = vld [vmem:[%s1005 + $0x8] sm:$0xf]
      %v1009 = vld [vmem:[%s1005 + $0xc] sm:$0xf]
      %s1010 = scalar_lea.vmem %s587, 1
      %v1011 = vld [vmem:[%s1010] sm:$0x1]
      %v1013 = vlaneseq
      %v1014 = vshrl.u32 %v1013, 7
      %v1015 = vsub.s32 0, %v1014
      %v1016 = vrot.slane %v1011, %v1015
      %v1022 = vunpack.c.l.b16 %v1006
      %v1023 = vunpack.c.l.b16 %v1007
      %v1024 = vunpack.c.l.b16 %v1008
      %v1025 = vunpack.c.l.b16 %v1009
      %v1026 = vpack.c.b16 %v1023, %v1022
      %v1027 = vpack.c.b16 %v1025, %v1024
      %1030 = vmatprep.subr.bf16.mxu0 0
      %1031 = vmatpush1.bf16.msra.mxu0 %v1026
      %1032 = vmatprep.subr.bf16.mxu0 0
      %1033 = vmatpush1.bf16.msra.mxu0 %v1027
      %1034 = vmatprep.subr.bf16.mxu0 0
      %1035 = vmatpush1.bf16.msra.mxu0 0
      %1036 = vmatprep.subr.bf16.mxu0 0
      %1037 = vmatpush1.bf16.msra.mxu0 0
      %1038 = vmatprep.subr.bf16.mxu0 0
      %1039 = vmatpush1.bf16.msra.mxu0 0
      %1040 = vmatprep.subr.bf16.mxu0 0
      %1041 = vmatpush1.bf16.msra.mxu0 0
      %1042 = vmatprep.subr.bf16.mxu0 0
      %1043 = vmatpush1.bf16.msra.mxu0 0
      %1044 = vmatprep.subr.bf16.mxu0 0
      %1045 = vmatpush1.bf16.msra.mxu0 0
      %1046 = vmatprep.subr.bf16.mxu0 0
      %1047 = vmatpush1.bf16.msra.mxu0 0
      %1048 = vmatprep.subr.bf16.mxu0 0
      %1049 = vmatpush1.bf16.msra.mxu0 0
      %1050 = vmatprep.subr.bf16.mxu0 0
      %1051 = vmatpush1.bf16.msra.mxu0 0
      %1052 = vmatprep.subr.bf16.mxu0 0
      %1053 = vmatpush1.bf16.msra.mxu0 0
      %1054 = vmatprep.subr.bf16.mxu0 0
      %1055 = vmatpush1.bf16.msra.mxu0 0
      %1056 = vmatprep.subr.bf16.mxu0 0
      %1057 = vmatpush1.bf16.msra.mxu0 0
      %1058 = vmatprep.subr.bf16.mxu0 0
      %1059 = vmatpush1.bf16.msra.mxu0 0
      %1060 = vmatprep.subr.bf16.mxu0 0
      %1061 = vmatpush1.bf16.msra.mxu0 0
      %1062 = vmatprep.mubr.bf16.mxu0 0
      %1063 = vmatmul.mubr.bf16.gmra.mrb[0].mxu0 %v694
      %v1064 = vpop.f32.mrb[0].mxu0
      %v1065 = vadd.f32 %v1016, %v1064
      %v1066 = vpop.f32.mrb[0].mxu0
      %v1067 = vpop.f32.mrb[0].mxu0
      %v1068 = vpop.f32.mrb[0].mxu0
      %1069 = vdwg.mxu0
      %v1070 = vpack.c.bf16 %v1065, %v1065
      %s1071 = scalar_lea.vmem %s626, 4
      %1072 = vst.msk [vmem:[%s1071] sm:$0xf] %vm737, %v1070
      %s1073 = scalar_lea.vmem %s558, 32
      %v1074 = vld [vmem:[%s1073] sm:$0xf]
      %v1075 = vld [vmem:[%s1073 + $0x4] sm:$0xf]
      %v1076 = vld [vmem:[%s1073 + $0x8] sm:$0xf]
      %v1077 = vld [vmem:[%s1073 + $0xc] sm:$0xf]
      %s1078 = scalar_lea.vmem %s577, 2
      %v1079 = vld [vmem:[%s1078] sm:$0x1]
      %v1081 = vlaneseq
      %v1082 = vshrl.u32 %v1081, 7
      %v1083 = vsub.s32 0, %v1082
      %v1084 = vrot.slane %v1079, %v1083
      %v1090 = vunpack.c.l.b16 %v1074
      %v1091 = vunpack.c.l.b16 %v1075
      %v1092 = vunpack.c.l.b16 %v1076
      %v1093 = vunpack.c.l.b16 %v1077
      %v1094 = vpack.c.b16 %v1091, %v1090
      %v1095 = vpack.c.b16 %v1093, %v1092
      %1098 = vmatprep.subr.bf16.mxu0 0
      %1099 = vmatpush1.bf16.msra.mxu0 %v1094
      %1100 = vmatprep.subr.bf16.mxu0 0
      %1101 = vmatpush1.bf16.msra.mxu0 %v1095
      %1102 = vmatprep.subr.bf16.mxu0 0
      %1103 = vmatpush1.bf16.msra.mxu0 0
      %1104 = vmatprep.subr.bf16.mxu0 0
      %1105 = vmatpush1.bf16.msra.mxu0 0
      %1106 = vmatprep.subr.bf16.mxu0 0
      %1107 = vmatpush1.bf16.msra.mxu0 0
      %1108 = vmatprep.subr.bf16.mxu0 0
      %1109 = vmatpush1.bf16.msra.mxu0 0
      %1110 = vmatprep.subr.bf16.mxu0 0
      %1111 = vmatpush1.bf16.msra.mxu0 0
      %1112 = vmatprep.subr.bf16.mxu0 0
      %1113 = vmatpush1.bf16.msra.mxu0 0
      %1114 = vmatprep.subr.bf16.mxu0 0
      %1115 = vmatpush1.bf16.msra.mxu0 0
      %1116 = vmatprep.subr.bf16.mxu0 0
      %1117 = vmatpush1.bf16.msra.mxu0 0
      %1118 = vmatprep.subr.bf16.mxu0 0
      %1119 = vmatpush1.bf16.msra.mxu0 0
      %1120 = vmatprep.subr.bf16.mxu0 0
      %1121 = vmatpush1.bf16.msra.mxu0 0
      %1122 = vmatprep.subr.bf16.mxu0 0
      %1123 = vmatpush1.bf16.msra.mxu0 0
      %1124 = vmatprep.subr.bf16.mxu0 0
      %1125 = vmatpush1.bf16.msra.mxu0 0
      %1126 = vmatprep.subr.bf16.mxu0 0
      %1127 = vmatpush1.bf16.msra.mxu0 0
      %1128 = vmatprep.subr.bf16.mxu0 0
      %1129 = vmatpush1.bf16.msra.mxu0 0
      %1130 = vmatprep.mubr.bf16.mxu0 0
      %1131 = vmatmul.mubr.bf16.gmra.mrb[0].mxu0 %v694
      %v1132 = vpop.f32.mrb[0].mxu0
      %v1133 = vadd.f32 %v1084, %v1132
      %v1134 = vpop.f32.mrb[0].mxu0
      %v1135 = vpop.f32.mrb[0].mxu0
      %v1136 = vpop.f32.mrb[0].mxu0
      %1137 = vdwg.mxu0
      %v1138 = vpack.c.bf16 %v1133, %v1133
      %s1139 = scalar_lea.vmem %s600, 8
      %1140 = vst.msk [vmem:[%s1139] sm:$0xf] %vm737, %v1138
      %s1141 = scalar_lea.vmem %s565, 32
      %v1142 = vld [vmem:[%s1141] sm:$0xf]
      %v1143 = vld [vmem:[%s1141 + $0x4] sm:$0xf]
      %v1144 = vld [vmem:[%s1141 + $0x8] sm:$0xf]
      %v1145 = vld [vmem:[%s1141 + $0xc] sm:$0xf]
      %s1146 = scalar_lea.vmem %s582, 2
      %v1147 = vld [vmem:[%s1146] sm:$0x1]
      %v1149 = vlaneseq
      %v1150 = vshrl.u32 %v1149, 7
      %v1151 = vsub.s32 0, %v1150
      %v1152 = vrot.slane %v1147, %v1151
      %v1158 = vunpack.c.l.b16 %v1142
      %v1159 = vunpack.c.l.b16 %v1143
      %v1160 = vunpack.c.l.b16 %v1144
      %v1161 = vunpack.c.l.b16 %v1145
      %v1162 = vpack.c.b16 %v1159, %v1158
      %v1163 = vpack.c.b16 %v1161, %v1160
      %1166 = vmatprep.subr.bf16.mxu0 0
      %1167 = vmatpush1.bf16.msra.mxu0 %v1162
      %1168 = vmatprep.subr.bf16.mxu0 0
      %1169 = vmatpush1.bf16.msra.mxu0 %v1163
      %1170 = vmatprep.subr.bf16.mxu0 0
      %1171 = vmatpush1.bf16.msra.mxu0 0
      %1172 = vmatprep.subr.bf16.mxu0 0
      %1173 = vmatpush1.bf16.msra.mxu0 0
      %1174 = vmatprep.subr.bf16.mxu0 0
      %1175 = vmatpush1.bf16.msra.mxu0 0
      %1176 = vmatprep.subr.bf16.mxu0 0
      %1177 = vmatpush1.bf16.msra.mxu0 0
      %1178 = vmatprep.subr.bf16.mxu0 0
      %1179 = vmatpush1.bf16.msra.mxu0 0
      %1180 = vmatprep.subr.bf16.mxu0 0
      %1181 = vmatpush1.bf16.msra.mxu0 0
      %1182 = vmatprep.subr.bf16.mxu0 0
      %1183 = vmatpush1.bf16.msra.mxu0 0
      %1184 = vmatprep.subr.bf16.mxu0 0
      %1185 = vmatpush1.bf16.msra.mxu0 0
      %1186 = vmatprep.subr.bf16.mxu0 0
      %1187 = vmatpush1.bf16.msra.mxu0 0
      %1188 = vmatprep.subr.bf16.mxu0 0
      %1189 = vmatpush1.bf16.msra.mxu0 0
      %1190 = vmatprep.subr.bf16.mxu0 0
      %1191 = vmatpush1.bf16.msra.mxu0 0
      %1192 = vmatprep.subr.bf16.mxu0 0
      %1193 = vmatpush1.bf16.msra.mxu0 0
      %1194 = vmatprep.subr.bf16.mxu0 0
      %1195 = vmatpush1.bf16.msra.mxu0 0
      %1196 = vmatprep.subr.bf16.mxu0 0
      %1197 = vmatpush1.bf16.msra.mxu0 0
      %1198 = vmatprep.mubr.bf16.mxu0 0
      %1199 = vmatmul.mubr.bf16.gmra.mrb[0].mxu0 %v694
      %v1200 = vpop.f32.mrb[0].mxu0
      %v1201 = vadd.f32 %v1152, %v1200
      %v1202 = vpop.f32.mrb[0].mxu0
      %v1203 = vpop.f32.mrb[0].mxu0
      %v1204 = vpop.f32.mrb[0].mxu0
      %1205 = vdwg.mxu0
      %v1206 = vpack.c.bf16 %v1201, %v1201
      %s1207 = scalar_lea.vmem %s613, 8
      %1208 = vst.msk [vmem:[%s1207] sm:$0xf] %vm737, %v1206
      %s1209 = scalar_lea.vmem %s572, 32
      %v1210 = vld [vmem:[%s1209] sm:$0xf]
      %v1211 = vld [vmem:[%s1209 + $0x4] sm:$0xf]
      %v1212 = vld [vmem:[%s1209 + $0x8] sm:$0xf]
      %v1213 = vld [vmem:[%s1209 + $0xc] sm:$0xf]
      %s1214 = scalar_lea.vmem %s587, 2
      %v1215 = vld [vmem:[%s1214] sm:$0x1]
      %v1217 = vlaneseq
      %v1218 = vshrl.u32 %v1217, 7
      %v1219 = vsub.s32 0, %v1218
      %v1220 = vrot.slane %v1215, %v1219
      %v1226 = vunpack.c.l.b16 %v1210
      %v1227 = vunpack.c.l.b16 %v1211
      %v1228 = vunpack.c.l.b16 %v1212
      %v1229 = vunpack.c.l.b16 %v1213
      %v1230 = vpack.c.b16 %v1227, %v1226
      %v1231 = vpack.c.b16 %v1229, %v1228
      %1234 = vmatprep.subr.bf16.mxu0 0
      %1235 = vmatpush1.bf16.msra.mxu0 %v1230
      %1236 = vmatprep.subr.bf16.mxu0 0
      %1237 = vmatpush1.bf16.msra.mxu0 %v1231
      %1238 = vmatprep.subr.bf16.mxu0 0
      %1239 = vmatpush1.bf16.msra.mxu0 0
      %1240 = vmatprep.subr.bf16.mxu0 0
      %1241 = vmatpush1.bf16.msra.mxu0 0
      %1242 = vmatprep.subr.bf16.mxu0 0
      %1243 = vmatpush1.bf16.msra.mxu0 0
      %1244 = vmatprep.subr.bf16.mxu0 0
      %1245 = vmatpush1.bf16.msra.mxu0 0
      %1246 = vmatprep.subr.bf16.mxu0 0
      %1247 = vmatpush1.bf16.msra.mxu0 0
      %1248 = vmatprep.subr.bf16.mxu0 0
      %1249 = vmatpush1.bf16.msra.mxu0 0
      %1250 = vmatprep.subr.bf16.mxu0 0
      %1251 = vmatpush1.bf16.msra.mxu0 0
      %1252 = vmatprep.subr.bf16.mxu0 0
      %1253 = vmatpush1.bf16.msra.mxu0 0
      %1254 = vmatprep.subr.bf16.mxu0 0
      %1255 = vmatpush1.bf16.msra.mxu0 0
      %1256 = vmatprep.subr.bf16.mxu0 0
      %1257 = vmatpush1.bf16.msra.mxu0 0
      %1258 = vmatprep.subr.bf16.mxu0 0
      %1259 = vmatpush1.bf16.msra.mxu0 0
      %1260 = vmatprep.subr.bf16.mxu0 0
      %1261 = vmatpush1.bf16.msra.mxu0 0
      %1262 = vmatprep.subr.bf16.mxu0 0
      %1263 = vmatpush1.bf16.msra.mxu0 0
      %1264 = vmatprep.subr.bf16.mxu0 0
      %1265 = vmatpush1.bf16.msra.mxu0 0
      %1266 = vmatprep.mubr.bf16.mxu0 0
      %1267 = vmatmul.mubr.bf16.gmra.mrb[0].mxu0 %v694
      %v1268 = vpop.f32.mrb[0].mxu0
      %v1269 = vadd.f32 %v1220, %v1268
      %v1270 = vpop.f32.mrb[0].mxu0
      %v1271 = vpop.f32.mrb[0].mxu0
      %v1272 = vpop.f32.mrb[0].mxu0
      %1273 = vdwg.mxu0
      %v1274 = vpack.c.bf16 %v1269, %v1269
      %s1275 = scalar_lea.vmem %s626, 8
      %1276 = vst.msk [vmem:[%s1275] sm:$0xf] %vm737, %v1274
      %s1277 = scalar_lea.vmem %s558, 48
      %v1278 = vld [vmem:[%s1277] sm:$0xf]
      %v1279 = vld [vmem:[%s1277 + $0x4] sm:$0xf]
      %v1280 = vld [vmem:[%s1277 + $0x8] sm:$0xf]
      %v1281 = vld [vmem:[%s1277 + $0xc] sm:$0xf]
      %s1282 = scalar_lea.vmem %s577, 3
      %v1283 = vld [vmem:[%s1282] sm:$0x1]
      %v1285 = vlaneseq
      %v1286 = vshrl.u32 %v1285, 7
      %v1287 = vsub.s32 0, %v1286
      %v1288 = vrot.slane %v1283, %v1287
      %v1294 = vunpack.c.l.b16 %v1278
      %v1295 = vunpack.c.l.b16 %v1279
      %v1296 = vunpack.c.l.b16 %v1280
      %v1297 = vunpack.c.l.b16 %v1281
      %v1298 = vpack.c.b16 %v1295, %v1294
      %v1299 = vpack.c.b16 %v1297, %v1296
      %1302 = vmatprep.subr.bf16.mxu0 0
      %1303 = vmatpush1.bf16.msra.mxu0 %v1298
      %1304 = vmatprep.subr.bf16.mxu0 0
      %1305 = vmatpush1.bf16.msra.mxu0 %v1299
      %1306 = vmatprep.subr.bf16.mxu0 0
      %1307 = vmatpush1.bf16.msra.mxu0 0
      %1308 = vmatprep.subr.bf16.mxu0 0
      %1309 = vmatpush1.bf16.msra.mxu0 0
      %1310 = vmatprep.subr.bf16.mxu0 0
      %1311 = vmatpush1.bf16.msra.mxu0 0
      %1312 = vmatprep.subr.bf16.mxu0 0
      %1313 = vmatpush1.bf16.msra.mxu0 0
      %1314 = vmatprep.subr.bf16.mxu0 0
      %1315 = vmatpush1.bf16.msra.mxu0 0
      %1316 = vmatprep.subr.bf16.mxu0 0
      %1317 = vmatpush1.bf16.msra.mxu0 0
      %1318 = vmatprep.subr.bf16.mxu0 0
      %1319 = vmatpush1.bf16.msra.mxu0 0
      %1320 = vmatprep.subr.bf16.mxu0 0
      %1321 = vmatpush1.bf16.msra.mxu0 0
      %1322 = vmatprep.subr.bf16.mxu0 0
      %1323 = vmatpush1.bf16.msra.mxu0 0
      %1324 = vmatprep.subr.bf16.mxu0 0
      %1325 = vmatpush1.bf16.msra.mxu0 0
      %1326 = vmatprep.subr.bf16.mxu0 0
      %1327 = vmatpush1.bf16.msra.mxu0 0
      %1328 = vmatprep.subr.bf16.mxu0 0
      %1329 = vmatpush1.bf16.msra.mxu0 0
      %1330 = vmatprep.subr.bf16.mxu0 0
      %1331 = vmatpush1.bf16.msra.mxu0 0
      %1332 = vmatprep.subr.bf16.mxu0 0
      %1333 = vmatpush1.bf16.msra.mxu0 0
      %1334 = vmatprep.mubr.bf16.mxu0 0
      %1335 = vmatmul.mubr.bf16.gmra.mrb[0].mxu0 %v694
      %v1336 = vpop.f32.mrb[0].mxu0
      %v1337 = vadd.f32 %v1288, %v1336
      %v1338 = vpop.f32.mrb[0].mxu0
      %v1339 = vpop.f32.mrb[0].mxu0
      %v1340 = vpop.f32.mrb[0].mxu0
      %1341 = vdwg.mxu0
      %v1342 = vpack.c.bf16 %v1337, %v1337
      %s1343 = scalar_lea.vmem %s600, 12
      %1344 = vst.msk [vmem:[%s1343] sm:$0xf] %vm737, %v1342
      %s1345 = scalar_lea.vmem %s565, 48
      %v1346 = vld [vmem:[%s1345] sm:$0xf]
      %v1347 = vld [vmem:[%s1345 + $0x4] sm:$0xf]
      %v1348 = vld [vmem:[%s1345 + $0x8] sm:$0xf]
      %v1349 = vld [vmem:[%s1345 + $0xc] sm:$0xf]
      %s1350 = scalar_lea.vmem %s582, 3
      %v1351 = vld [vmem:[%s1350] sm:$0x1]
      %v1353 = vlaneseq
      %v1354 = vshrl.u32 %v1353, 7
      %v1355 = vsub.s32 0, %v1354
      %v1356 = vrot.slane %v1351, %v1355
      %v1362 = vunpack.c.l.b16 %v1346
      %v1363 = vunpack.c.l.b16 %v1347
      %v1364 = vunpack.c.l.b16 %v1348
      %v1365 = vunpack.c.l.b16 %v1349
      %v1366 = vpack.c.b16 %v1363, %v1362
      %v1367 = vpack.c.b16 %v1365, %v1364
      %1370 = vmatprep.subr.bf16.mxu0 0
      %1371 = vmatpush1.bf16.msra.mxu0 %v1366
      %1372 = vmatprep.subr.bf16.mxu0 0
      %1373 = vmatpush1.bf16.msra.mxu0 %v1367
      %1374 = vmatprep.subr.bf16.mxu0 0
      %1375 = vmatpush1.bf16.msra.mxu0 0
      %1376 = vmatprep.subr.bf16.mxu0 0
      %1377 = vmatpush1.bf16.msra.mxu0 0
      %1378 = vmatprep.subr.bf16.mxu0 0
      %1379 = vmatpush1.bf16.msra.mxu0 0
      %1380 = vmatprep.subr.bf16.mxu0 0
      %1381 = vmatpush1.bf16.msra.mxu0 0
      %1382 = vmatprep.subr.bf16.mxu0 0
      %1383 = vmatpush1.bf16.msra.mxu0 0
      %1384 = vmatprep.subr.bf16.mxu0 0
      %1385 = vmatpush1.bf16.msra.mxu0 0
      %1386 = vmatprep.subr.bf16.mxu0 0
      %1387 = vmatpush1.bf16.msra.mxu0 0
      %1388 = vmatprep.subr.bf16.mxu0 0
      %1389 = vmatpush1.bf16.msra.mxu0 0
      %1390 = vmatprep.subr.bf16.mxu0 0
      %1391 = vmatpush1.bf16.msra.mxu0 0
      %1392 = vmatprep.subr.bf16.mxu0 0
      %1393 = vmatpush1.bf16.msra.mxu0 0
      %1394 = vmatprep.subr.bf16.mxu0 0
      %1395 = vmatpush1.bf16.msra.mxu0 0
      %1396 = vmatprep.subr.bf16.mxu0 0
      %1397 = vmatpush1.bf16.msra.mxu0 0
      %1398 = vmatprep.subr.bf16.mxu0 0
      %1399 = vmatpush1.bf16.msra.mxu0 0
      %1400 = vmatprep.subr.bf16.mxu0 0
      %1401 = vmatpush1.bf16.msra.mxu0 0
      %1402 = vmatprep.mubr.bf16.mxu0 0
      %1403 = vmatmul.mubr.bf16.gmra.mrb[0].mxu0 %v694
      %v1404 = vpop.f32.mrb[0].mxu0
      %v1405 = vadd.f32 %v1356, %v1404
      %v1406 = vpop.f32.mrb[0].mxu0
      %v1407 = vpop.f32.mrb[0].mxu0
      %v1408 = vpop.f32.mrb[0].mxu0
      %1409 = vdwg.mxu0
      %v1410 = vpack.c.bf16 %v1405, %v1405
      %s1411 = scalar_lea.vmem %s613, 12
      %1412 = vst.msk [vmem:[%s1411] sm:$0xf] %vm737, %v1410
      %s1413 = scalar_lea.vmem %s572, 48
      %v1414 = vld [vmem:[%s1413] sm:$0xf]
      %v1415 = vld [vmem:[%s1413 + $0x4] sm:$0xf]
      %v1416 = vld [vmem:[%s1413 + $0x8] sm:$0xf]
      %v1417 = vld [vmem:[%s1413 + $0xc] sm:$0xf]
      %s1418 = scalar_lea.vmem %s587, 3
      %v1419 = vld [vmem:[%s1418] sm:$0x1]
      %v1421 = vlaneseq
      %v1422 = vshrl.u32 %v1421, 7
      %v1423 = vsub.s32 0, %v1422
      %v1424 = vrot.slane %v1419, %v1423
      %v1430 = vunpack.c.l.b16 %v1414
      %v1431 = vunpack.c.l.b16 %v1415
      %v1432 = vunpack.c.l.b16 %v1416
      %v1433 = vunpack.c.l.b16 %v1417
      %v1434 = vpack.c.b16 %v1431, %v1430
      %v1435 = vpack.c.b16 %v1433, %v1432
      %1438 = vmatprep.subr.bf16.mxu0 0
      %1439 = vmatpush1.bf16.msra.mxu0 %v1434
      %1440 = vmatprep.subr.bf16.mxu0 0
      %1441 = vmatpush1.bf16.msra.mxu0 %v1435
      %1442 = vmatprep.subr.bf16.mxu0 0
      %1443 = vmatpush1.bf16.msra.mxu0 0
      %1444 = vmatprep.subr.bf16.mxu0 0
      %1445 = vmatpush1.bf16.msra.mxu0 0
      %1446 = vmatprep.subr.bf16.mxu0 0
      %1447 = vmatpush1.bf16.msra.mxu0 0
      %1448 = vmatprep.subr.bf16.mxu0 0
      %1449 = vmatpush1.bf16.msra.mxu0 0
      %1450 = vmatprep.subr.bf16.mxu0 0
      %1451 = vmatpush1.bf16.msra.mxu0 0
      %1452 = vmatprep.subr.bf16.mxu0 0
      %1453 = vmatpush1.bf16.msra.mxu0 0
      %1454 = vmatprep.subr.bf16.mxu0 0
      %1455 = vmatpush1.bf16.msra.mxu0 0
      %1456 = vmatprep.subr.bf16.mxu0 0
      %1457 = vmatpush1.bf16.msra.mxu0 0
      %1458 = vmatprep.subr.bf16.mxu0 0
      %1459 = vmatpush1.bf16.msra.mxu0 0
      %1460 = vmatprep.subr.bf16.mxu0 0
      %1461 = vmatpush1.bf16.msra.mxu0 0
      %1462 = vmatprep.subr.bf16.mxu0 0
      %1463 = vmatpush1.bf16.msra.mxu0 0
      %1464 = vmatprep.subr.bf16.mxu0 0
      %1465 = vmatpush1.bf16.msra.mxu0 0
      %1466 = vmatprep.subr.bf16.mxu0 0
      %1467 = vmatpush1.bf16.msra.mxu0 0
      %1468 = vmatprep.subr.bf16.mxu0 0
      %1469 = vmatpush1.bf16.msra.mxu0 0
      %1470 = vmatprep.mubr.bf16.mxu0 0
      %1471 = vmatmul.mubr.bf16.gmra.mrb[0].mxu0 %v694
      %v1472 = vpop.f32.mrb[0].mxu0
      %v1473 = vadd.f32 %v1424, %v1472
      %v1474 = vpop.f32.mrb[0].mxu0
      %v1475 = vpop.f32.mrb[0].mxu0
      %v1476 = vpop.f32.mrb[0].mxu0
      %1477 = vdwg.mxu0
      %v1478 = vpack.c.bf16 %v1473, %v1473
      %s1479 = scalar_lea.vmem %s626, 12
      %1480 = vst.msk [vmem:[%s1479] sm:$0xf] %vm737, %v1478
      %s1481 = smul.u32 4, %s30
      %p1482 = scmp.lt.s32.totalorder %s28, 1
      %s1483 = scalar_select %p1482, %s28, 1
      %p1484 = scmp.lt.s32.totalorder %s1481, 3
      %s1485 = scalar_select %p1484, %s1481, 3
      %p1486 = scmp.lt.s32.totalorder %s29, 0
      %s1487 = scalar_select %p1486, %s29, 0
      %s1488 = sadd.s32 %s1487, %s1485
      %s1489 = smul.addr %s1483, 4
      %s1490 = sadd.s32 %s1488, %s1489
      %s1491 = smul.addr %s1490, 4
      %s1492 = scalar_lea.vmem %s9, %s1491
      %s1493 = smul.u32 4, %s30
      %p1494 = scmp.lt.s32.totalorder %s28, 1
      %s1495 = scalar_select %p1494, %s28, 1
      %p1496 = scmp.lt.s32.totalorder %s1493, 3
      %s1497 = scalar_select %p1496, %s1493, 3
      %p1498 = scmp.lt.s32.totalorder %s29, 0
      %s1499 = scalar_select %p1498, %s29, 0
      %s1500 = sadd.s32 %s1499, %s1497
      %s1501 = smul.addr %s1495, 4
      %s1502 = sadd.s32 %s1500, %s1501
      %s1503 = smul.addr %s1502, 4
      %s1504 = scalar_lea.vmem %s10, %s1503
      %s1505 = smul.u32 4, %s30
      %p1506 = scmp.lt.s32.totalorder %s28, 1
      %s1507 = scalar_select %p1506, %s28, 1
      %p1508 = scmp.lt.s32.totalorder %s1505, 3
      %s1509 = scalar_select %p1508, %s1505, 3
      %p1510 = scmp.lt.s32.totalorder %s29, 0
      %s1511 = scalar_select %p1510, %s29, 0
      %s1512 = sadd.s32 %s1511, %s1509
      %s1513 = smul.addr %s1507, 4
      %s1514 = sadd.s32 %s1512, %s1513
      %s1515 = smul.addr %s1514, 4
      %s1516 = scalar_lea.vmem %s11, %s1515
      // Predicated region
      $region61: #{global_latent_transformer.6} parent=55 // pred_check
        %p1517 = pneg %p290
      $region62: #{global_latent_transformer.6} parent=55 // pred_check_branch
        %1519 = sbr.rel (%p1517) target = $region64
      $region63: #{global_latent_transformer.6} parent=55 // pred_region
        %s1520 = smul.u32 4, %s30
      $region64: #{global_latent_transformer.6} parent=55 // pred_fallthru
        _
      // Predicated region
      $region65: #{global_latent_transformer.6} parent=55 // pred_check
        %p1521 = pneg %p320
      $region66: #{global_latent_transformer.6} parent=55 // pred_check_branch
        %1523 = sbr.rel (%p1521) target = $region68
      $region67: #{global_latent_transformer.6} parent=55 // pred_region
        %s1524 = smul.u32 4, %s30
      $region68: #{global_latent_transformer.6} parent=55 // pred_fallthru
        _
      // Predicated region
      $region69: #{global_latent_transformer.6} parent=55 // pred_check
        %p1525 = pneg %p350
      $region70: #{global_latent_transformer.6} parent=55 // pred_check_branch
        %1527 = sbr.rel (%p1525) target = $region72
      $region71: #{global_latent_transformer.6} parent=55 // pred_region
        %s1528 = smul.u32 4, %s30
      $region72: #{global_latent_transformer.6} parent=55 // pred_fallthru
        _
    $region56: #{global_latent_transformer.6} parent=5 // pred_fallthru
      _
    %p1529 = scmp.le.s32.totalorder 2, %s18
    // Predicated region
    $region73: #{global_latent_transformer.6} parent=5 // pred_check
      %p1530 = pneg %p1529
    $region74: #{global_latent_transformer.6} parent=5 // pred_check_branch
      %1532 = sbr.rel (%p1530) target = $region76
    $region75: #{global_latent_transformer.6} parent=5 // pred_region
      %s1533 = ssub.s32 %s18, 2
      // Predicated region
      $region77: #{global_latent_transformer.6} parent=75 // pred_check
        %p1534 = pneg %p296
      $region78: #{global_latent_transformer.6} parent=75 // pred_check_branch
        %1536 = sbr.rel (%p1534) target = $region80
      $region79: #{global_latent_transformer.6} parent=75 // pred_region
        %s1537 = smul.u32 4, %s33
        %p1538 = scmp.lt.s32.totalorder %s31, 1
        %s1539 = scalar_select %p1538, %s31, 1
        %p1540 = scmp.lt.s32.totalorder %s1537, 3
        %s1541 = scalar_select %p1540, %s1537, 3
        %p1542 = scmp.lt.s32.totalorder %s32, 0
        %s1543 = scalar_select %p1542, %s32, 0
        %s1544 = sadd.s32 %s1543, %s1541
        %s1545 = smul.addr %s1539, 4
        %s1546 = sadd.s32 %s1544, %s1545
        %s1547 = smul.addr %s1546, 4
        %s1548 = scalar_lea.vmem %s9, %s1547
      $region80: #{global_latent_transformer.6} parent=75 // pred_fallthru
        _
      // Predicated region
      $region81: #{global_latent_transformer.6} parent=75 // pred_check
        %p1549 = pneg %p326
      $region82: #{global_latent_transformer.6} parent=75 // pred_check_branch
        %1551 = sbr.rel (%p1549) target = $region84
      $region83: #{global_latent_transformer.6} parent=75 // pred_region
        %s1552 = smul.u32 4, %s33
        %p1553 = scmp.lt.s32.totalorder %s31, 1
        %s1554 = scalar_select %p1553, %s31, 1
        %p1555 = scmp.lt.s32.totalorder %s1552, 3
        %s1556 = scalar_select %p1555, %s1552, 3
        %p1557 = scmp.lt.s32.totalorder %s32, 0
        %s1558 = scalar_select %p1557, %s32, 0
        %s1559 = sadd.s32 %s1558, %s1556
        %s1560 = smul.addr %s1554, 4
        %s1561 = sadd.s32 %s1559, %s1560
        %s1562 = smul.addr %s1561, 4
        %s1563 = scalar_lea.vmem %s10, %s1562
      $region84: #{global_latent_transformer.6} parent=75 // pred_fallthru
        _
      // Predicated region
      $region85: #{global_latent_transformer.6} parent=75 // pred_check
        %p1564 = pneg %p356
      $region86: #{global_latent_transformer.6} parent=75 // pred_check_branch
        %1566 = sbr.rel (%p1564) target = $region88
      $region87: #{global_latent_transformer.6} parent=75 // pred_region
        %s1567 = smul.u32 4, %s33
        %p1568 = scmp.lt.s32.totalorder %s31, 1
        %s1569 = scalar_select %p1568, %s31, 1
        %p1570 = scmp.lt.s32.totalorder %s1567, 3
        %s1571 = scalar_select %p1570, %s1567, 3
        %p1572 = scmp.lt.s32.totalorder %s32, 0
        %s1573 = scalar_select %p1572, %s32, 0
        %s1574 = sadd.s32 %s1573, %s1571
        %s1575 = smul.addr %s1569, 4
        %s1576 = sadd.s32 %s1574, %s1575
        %s1577 = smul.addr %s1576, 4
        %s1578 = scalar_lea.vmem %s11, %s1577
      $region88: #{global_latent_transformer.6} parent=75 // pred_fallthru
        _
    $region76: #{global_latent_transformer.6} parent=5 // pred_fallthru
      _
  $region6: #{global_latent_transformer.6} parent=0 // loop_footer
    %s22 = sadd.s32 1, %s18
  $region7: #{global_latent_transformer.6} parent=0 // loop_footer_branch
    %17 = sbr.rel target = $region3
  $region8: #{global_latent_transformer.6} parent=0 // loop_exit
    _

// kernel: global_latent_transformer.7
$region0: #{global_latent_transformer.7}
  #allocation0 [shape = 'u32[]', space=smem, size = 0x4, offset = 0x4, fixed_abs, tag = 'smem constant byte address 0x4 - core index']
  #allocation1 [shape = 'u32[144,128]{1,0:T(1,128)}', space=vmem, size = 0x12000, scoped, tag = 'internal scratch']
  #allocation2 [shape = 'f32[4,8,1]{2,1,0:T(8,128)}', space=vmem, size = 0x4000, scoped, tag = 'scratch operand']
  #allocation3 [shape = 'f32[4,8,1]{2,1,0:T(8,128)}', space=vmem, size = 0x4000, scoped, tag = 'scratch operand']
  #allocation4 [shape = 'f32[4,8,8]{2,1,0:T(8,128)}', space=vmem, size = 0x4000, scoped, tag = 'scratch operand']
  %s0 = inlined_call_operand.vmem [shape: bf16[2,4,8,8], index: 0, kind: input, shape index: {}]
  %s1 = inlined_call_operand.vmem [shape: bf16[2,4,8,8], index: 1, kind: input, shape index: {}]
  %s2 = inlined_call_operand.vmem [shape: bf16[2,4,8,8], index: 2, kind: input, shape index: {}]
  %s3 = inlined_call_operand.vmem [shape: f32[2,8,32], index: 3, kind: input, shape index: {}]
  %s4 = inlined_call_operand.vmem [shape: bf16[4,8,32], index: 4, kind: input, shape index: {}]
  %s5 = inlined_call_operand.vmem [shape: f32[1,32], index: 5, kind: input, shape index: {}]
  %s6 = inlined_call_operand.vmem [shape: f32[2,8,32], index: 6, kind: output, shape index: {}]
  %s7 = sld [smem:[#allocation0]]
  $region73: #{global_latent_transformer.7} parent=0
    _
  %s9 = ssub.s32 1, %s7
  %s10 = scalar_select 0, %s9, %s7
  loop: start=0, step=1, limit=4
  $region2: #{global_latent_transformer.7} parent=0 // loop_pre_header
    _
  $region3: #{global_latent_transformer.7} parent=0 // loop_header
    %s12 = sphi 0, %s16
    %p13 = scmp.ge.s32.totalorder %s12, 4
    %s19 = sphi 0, %s38
    %s20 = sphi 0, %s34
    %s21 = sphi 0, %s30
    %s22 = sphi 0, %s19
    %s23 = sphi 0, %s20
    %s24 = sphi 0, %s21
    %s25 = sphi 0, %s22
    %s26 = sphi 0, %s23
    %s27 = sphi 0, %s24
    %s43 = sphi 0, %s45
    %s46 = sphi 0, %s43
    %s47 = sphi 0, %s46
    %s63 = sphi 0, %s47
    %s75 = sphi 0, %s77
    %s78 = sphi 0, %s75
    %s79 = sphi 0, %s78
    %s95 = sphi 0, %s79
    %s107 = sphi 0, %s109
    %s110 = sphi 0, %s107
    %s111 = sphi 0, %s110
    %s127 = sphi 0, %s111
    %s135 = sphi 0, %s137
    %s138 = sphi 0, %s135
    %s139 = sphi 0, %s138
    %s155 = sphi 0, %s139
    %s159 = sphi 0, %s159
    %s161 = sphi 0, %s159
    %s162 = sphi 0, %s161
    %s176 = sphi 0, %s162
    %s180 = sphi 0, %s180
    %s182 = sphi 0, %s180
    %s183 = sphi 0, %s182
    %s197 = sphi 0, %s183
    %s205 = sphi 0, %s207
    %s208 = sphi 0, %s205
    %s209 = sphi 0, %s208
    %s225 = sphi 0, %s209
  $region4: #{global_latent_transformer.7} parent=0 // loop_header_branch
    %15 = sbr.rel (%p13) target = $region8
  $region5: #{global_latent_transformer.7} parent=0 // loop_body
    %s17 = ssub.s32 %s12, 1
    %s18 = ssub.s32 %s12, 2
    %s28 = sadd.s32 1, %s21
    %p29 = scmp.ge.s32.totalorder %s28, 1
    %s30 = scalar_select %p29, 0, %s28
    %s31 = sadd.s32 1, %s20
    %s32 = scalar_select %p29, %s31, %s20
    %p33 = scmp.ge.s32.totalorder %s32, 1
    %s34 = scalar_select %p33, 0, %s32
    %s35 = sadd.s32 1, %s19
    %s36 = scalar_select %p33, %s35, %s19
    %p37 = scmp.ge.s32.totalorder %s36, 2
    %s38 = scalar_select %p37, 0, %s36
    %s39 = ssub.s32 %s19, %s38
    %s40 = ssub.s32 %s20, %s34
    %s41 = sor.u32 %s39, %s40
    %p42 = scmp.eq.s32.totalorder %s41, 0
    %s44 = sadd.s32 %s43, 1
    %s45 = scalar_select %p42, %s43, %s44
    %p48 = pneg %p42
    %p49 = scmp.eq.s32.totalorder %s12, 1
    %p50 = por %p48, %p49
    %p51 = scmp.ne.s32.totalorder %s43, %s46
    %p52 = scmp.eq.s32.totalorder %s12, 0
    %p53 = por %p51, %p52
    %p54 = scmp.ne.s32.totalorder %s43, %s46
    %p55 = scmp.eq.s32.totalorder %s17, 1
    %p56 = por %p54, %p55
    %p57 = scmp.ne.s32.totalorder %s46, %s47
    %p58 = scmp.eq.s32.totalorder %s17, 0
    %p59 = por %p57, %p58
    %p60 = scmp.ne.s32.totalorder %s46, %s47
    %p61 = scmp.eq.s32.totalorder %s18, 1
    %p62 = por %p60, %p61
    %p64 = scmp.ne.s32.totalorder %s47, %s63
    %p65 = scmp.eq.s32.totalorder %s18, 0
    %p66 = por %p64, %p65
    %p67 = scmp.lt.s32.totalorder %s20, %s21
    %s68 = scalar_select %p67, %s20, %s21
    %p69 = scmp.lt.s32.totalorder %s34, %s30
    %s70 = scalar_select %p69, %s34, %s30
    %s71 = ssub.s32 %s19, %s38
    %s72 = ssub.s32 %s68, %s70
    %s73 = sor.u32 %s71, %s72
    %p74 = scmp.eq.s32.totalorder %s73, 0
    %s76 = sadd.s32 %s75, 1
    %s77 = scalar_select %p74, %s75, %s76
    %p80 = pneg %p74
    %p81 = scmp.eq.s32.totalorder %s12, 1
    %p82 = por %p80, %p81
    %p83 = scmp.ne.s32.totalorder %s75, %s78
    %p84 = scmp.eq.s32.totalorder %s12, 0
    %p85 = por %p83, %p84
    %p86 = scmp.ne.s32.totalorder %s75, %s78
    %p87 = scmp.eq.s32.totalorder %s17, 1
    %p88 = por %p86, %p87
    %p89 = scmp.ne.s32.totalorder %s78, %s79
    %p90 = scmp.eq.s32.totalorder %s17, 0
    %p91 = por %p89, %p90
    %p92 = scmp.ne.s32.totalorder %s78, %s79
    %p93 = scmp.eq.s32.totalorder %s18, 1
    %p94 = por %p92, %p93
    %p96 = scmp.ne.s32.totalorder %s79, %s95
    %p97 = scmp.eq.s32.totalorder %s18, 0
    %p98 = por %p96, %p97
    %p99 = scmp.lt.s32.totalorder %s20, %s21
    %s100 = scalar_select %p99, %s20, %s21
    %p101 = scmp.lt.s32.totalorder %s34, %s30
    %s102 = scalar_select %p101, %s34, %s30
    %s103 = ssub.s32 %s19, %s38
    %s104 = ssub.s32 %s100, %s102
    %s105 = sor.u32 %s103, %s104
    %p106 = scmp.eq.s32.totalorder %s105, 0
    %s108 = sadd.s32 %s107, 1
    %s109 = scalar_select %p106, %s107, %s108
    %p112 = pneg %p106
    %p113 = scmp.eq.s32.totalorder %s12, 1
    %p114 = por %p112, %p113
    %p115 = scmp.ne.s32.totalorder %s107, %s110
    %p116 = scmp.eq.s32.totalorder %s12, 0
    %p117 = por %p115, %p116
    %p118 = scmp.ne.s32.totalorder %s107, %s110
    %p119 = scmp.eq.s32.totalorder %s17, 1
    %p120 = por %p118, %p119
    %p121 = scmp.ne.s32.totalorder %s110, %s111
    %p122 = scmp.eq.s32.totalorder %s17, 0
    %p123 = por %p121, %p122
    %p124 = scmp.ne.s32.totalorder %s110, %s111
    %p125 = scmp.eq.s32.totalorder %s18, 1
    %p126 = por %p124, %p125
    %p128 = scmp.ne.s32.totalorder %s111, %s127
    %p129 = scmp.eq.s32.totalorder %s18, 0
    %p130 = por %p128, %p129
    %s131 = ssub.s32 %s19, %s38
    %s132 = ssub.s32 %s20, %s34
    %s133 = sor.u32 %s131, %s132
    %p134 = scmp.eq.s32.totalorder %s133, 0
    %s136 = sadd.s32 %s135, 1
    %s137 = scalar_select %p134, %s135, %s136
    %p140 = pneg %p134
    %p141 = scmp.eq.s32.totalorder %s12, 1
    %p142 = por %p140, %p141
    %p143 = scmp.ne.s32.totalorder %s135, %s138
    %p144 = scmp.eq.s32.totalorder %s12, 0
    %p145 = por %p143, %p144
    %p146 = scmp.ne.s32.totalorder %s135, %s138
    %p147 = scmp.eq.s32.totalorder %s17, 1
    %p148 = por %p146, %p147
    %p149 = scmp.ne.s32.totalorder %s138, %s139
    %p150 = scmp.eq.s32.totalorder %s17, 0
    %p151 = por %p149, %p150
    %p152 = scmp.ne.s32.totalorder %s138, %s139
    %p153 = scmp.eq.s32.totalorder %s18, 1
    %p154 = por %p152, %p153
    %p156 = scmp.ne.s32.totalorder %s139, %s155
    %p157 = scmp.eq.s32.totalorder %s18, 0
    %p158 = por %p156, %p157
    %s160 = sadd.s32 %s159, 1
    %p163 = scmp.eq.s32.totalorder %s12, 1
    %p164 = scmp.ne.s32.totalorder %s159, %s161
    %p165 = scmp.eq.s32.totalorder %s12, 0
    %p166 = por %p164, %p165
    %p167 = scmp.ne.s32.totalorder %s159, %s161
    %p168 = scmp.eq.s32.totalorder %s17, 1
    %p169 = por %p167, %p168
    %p170 = scmp.ne.s32.totalorder %s161, %s162
    %p171 = scmp.eq.s32.totalorder %s17, 0
    %p172 = por %p170, %p171
    %p173 = scmp.ne.s32.totalorder %s161, %s162
    %p174 = scmp.eq.s32.totalorder %s18, 1
    %p175 = por %p173, %p174
    %p177 = scmp.ne.s32.totalorder %s162, %s176
    %p178 = scmp.eq.s32.totalorder %s18, 0
    %p179 = por %p177, %p178
    %s181 = sadd.s32 %s180, 1
    %p184 = scmp.eq.s32.totalorder %s12, 1
    %p185 = scmp.ne.s32.totalorder %s180, %s182
    %p186 = scmp.eq.s32.totalorder %s12, 0
    %p187 = por %p185, %p186
    %p188 = scmp.ne.s32.totalorder %s180, %s182
    %p189 = scmp.eq.s32.totalorder %s17, 1
    %p190 = por %p188, %p189
    %p191 = scmp.ne.s32.totalorder %s182, %s183
    %p192 = scmp.eq.s32.totalorder %s17, 0
    %p193 = por %p191, %p192
    %p194 = scmp.ne.s32.totalorder %s182, %s183
    %p195 = scmp.eq.s32.totalorder %s18, 1
    %p196 = por %p194, %p195
    %p198 = scmp.ne.s32.totalorder %s183, %s197
    %p199 = scmp.eq.s32.totalorder %s18, 0
    %p200 = por %p198, %p199
    %s201 = ssub.s32 %s19, %s38
    %s202 = ssub.s32 %s20, %s34
    %s203 = sor.u32 %s201, %s202
    %p204 = scmp.eq.s32.totalorder %s203, 0
    %s206 = sadd.s32 %s205, 1
    %s207 = scalar_select %p204, %s205, %s206
    %p210 = pneg %p204
    %p211 = scmp.eq.s32.totalorder %s12, 1
    %p212 = por %p210, %p211
    %p213 = scmp.ne.s32.totalorder %s205, %s208
    %p214 = scmp.eq.s32.totalorder %s12, 0
    %p215 = por %p213, %p214
    %p216 = scmp.ne.s32.totalorder %s205, %s208
    %p217 = scmp.eq.s32.totalorder %s17, 1
    %p218 = por %p216, %p217
    %p219 = scmp.ne.s32.totalorder %s208, %s209
    %p220 = scmp.eq.s32.totalorder %s17, 0
    %p221 = por %p219, %p220
    %p222 = scmp.ne.s32.totalorder %s208, %s209
    %p223 = scmp.eq.s32.totalorder %s18, 1
    %p224 = por %p222, %p223
    %p226 = scmp.ne.s32.totalorder %s209, %s225
    %p227 = scmp.eq.s32.totalorder %s18, 0
    %p228 = por %p226, %p227
    %p229 = scmp.le.s32.totalorder 1, %s12
    %p230 = scmp.lt.s32.totalorder %s12, 3
    %p231 = pnand %p229, %p230
    %p232 = pneg %p231
    // Predicated region
    $region9: #{global_latent_transformer.7} parent=5 // pred_check
      _
    $region10: #{global_latent_transformer.7} parent=5 // pred_check_branch
      %234 = sbr.rel (%p231) target = $region12
    $region11: #{global_latent_transformer.7} parent=5 // pred_region
      %s235 = ssub.s32 %s12, 1
      // Predicated region
      $region13: #{global_latent_transformer.7} parent=11 // pred_check
        %p236 = pneg %p172
      $region14: #{global_latent_transformer.7} parent=11 // pred_check_branch
        %238 = sbr.rel (%p236) target = $region16
      $region15: #{global_latent_transformer.7} parent=11 // pred_region
        _
      $region16: #{global_latent_transformer.7} parent=11 // pred_fallthru
        _
      // Predicated region
      $region17: #{global_latent_transformer.7} parent=11 // pred_check
        %p239 = pneg %p193
      $region18: #{global_latent_transformer.7} parent=11 // pred_check_branch
        %241 = sbr.rel (%p239) target = $region20
      $region19: #{global_latent_transformer.7} parent=11 // pred_region
        _
      $region20: #{global_latent_transformer.7} parent=11 // pred_fallthru
        _
    $region12: #{global_latent_transformer.7} parent=5 // pred_fallthru
      _
    %p242 = scmp.lt.s32.totalorder %s12, 2
    // Predicated region
    $region21: #{global_latent_transformer.7} parent=5 // pred_check
      %p243 = pneg %p242
    $region22: #{global_latent_transformer.7} parent=5 // pred_check_branch
      %245 = sbr.rel (%p243) target = $region24
    $region23: #{global_latent_transformer.7} parent=5 // pred_region
      // Predicated region
      $region25: #{global_latent_transformer.7} parent=23 // pred_check
        %p246 = pneg %p53
      $region26: #{global_latent_transformer.7} parent=23 // pred_check_branch
        %248 = sbr.rel (%p246) target = $region28
      $region27: #{global_latent_transformer.7} parent=23 // pred_region
        %p249 = scmp.lt.s32.totalorder %s19, 1
        %s250 = scalar_select %p249, %s19, 1
        %p251 = scmp.lt.s32.totalorder %s20, 0
        %s252 = scalar_select %p251, %s20, 0
        %s253 = smul.addr %s250, 4
        %s254 = sadd.s32 %s252, %s253
        %s255 = smul.addr %s254, 4
        %s256 = scalar_lea.vmem %s0, %s255
      $region28: #{global_latent_transformer.7} parent=23 // pred_fallthru
        _
      // Predicated region
      $region29: #{global_latent_transformer.7} parent=23 // pred_check
        %p257 = pneg %p85
      $region30: #{global_latent_transformer.7} parent=23 // pred_check_branch
        %259 = sbr.rel (%p257) target = $region32
      $region31: #{global_latent_transformer.7} parent=23 // pred_region
        %p260 = scmp.lt.s32.totalorder %s20, %s21
        %s261 = scalar_select %p260, %s20, %s21
        %p262 = scmp.lt.s32.totalorder %s19, 1
        %s263 = scalar_select %p262, %s19, 1
        %p264 = scmp.lt.s32.totalorder %s261, 0
        %s265 = scalar_select %p264, %s261, 0
        %s266 = smul.addr %s263, 4
        %s267 = sadd.s32 %s265, %s266
        %s268 = smul.addr %s267, 4
        %s269 = scalar_lea.vmem %s1, %s268
        %p270 = scmp.lt.s32.totalorder %s20, %s21
        %s271 = scalar_select %p270, %s20, %s21
      $region32: #{global_latent_transformer.7} parent=23 // pred_fallthru
        _
      // Predicated region
      $region33: #{global_latent_transformer.7} parent=23 // pred_check
        %p272 = pneg %p117
      $region34: #{global_latent_transformer.7} parent=23 // pred_check_branch
        %274 = sbr.rel (%p272) target = $region36
      $region35: #{global_latent_transformer.7} parent=23 // pred_region
        %p275 = scmp.lt.s32.totalorder %s20, %s21
        %s276 = scalar_select %p275, %s20, %s21
        %p277 = scmp.lt.s32.totalorder %s19, 1
        %s278 = scalar_select %p277, %s19, 1
        %p279 = scmp.lt.s32.totalorder %s276, 0
        %s280 = scalar_select %p279, %s276, 0
        %s281 = smul.addr %s278, 4
        %s282 = sadd.s32 %s280, %s281
        %s283 = smul.addr %s282, 4
        %s284 = scalar_lea.vmem %s2, %s283
        %p285 = scmp.lt.s32.totalorder %s20, %s21
        %s286 = scalar_select %p285, %s20, %s21
      $region36: #{global_latent_transformer.7} parent=23 // pred_fallthru
        _
      // Predicated region
      $region37: #{global_latent_transformer.7} parent=23 // pred_check
        %p287 = pneg %p145
      $region38: #{global_latent_transformer.7} parent=23 // pred_check_branch
        %289 = sbr.rel (%p287) target = $region40
      $region39: #{global_latent_transformer.7} parent=23 // pred_region
        %p290 = scmp.lt.s32.totalorder %s19, 1
        %s291 = scalar_select %p290, %s19, 1
        %p292 = scmp.lt.s32.totalorder %s20, 0
        %s293 = scalar_select %p292, %s20, 0
        %s294 = sadd.s32 %s293, %s291
        %s295 = smul.addr %s294, 8
        %s296 = scalar_lea.vmem %s3, %s295
      $region40: #{global_latent_transformer.7} parent=23 // pred_fallthru
        _
    $region24: #{global_latent_transformer.7} parent=5 // pred_fallthru
      _
    %p297 = scmp.le.s32.totalorder 1, %s12
    %p298 = scmp.lt.s32.totalorder %s12, 3
    %p299 = pnand %p297, %p298
    %p300 = pneg %p299
    // Predicated region
    $region41: #{global_latent_transformer.7} parent=5 // pred_check
      _
    $region42: #{global_latent_transformer.7} parent=5 // pred_check_branch
      %302 = sbr.rel (%p299) target = $region44
    $region43: #{global_latent_transformer.7} parent=5 // pred_region
      %s303 = ssub.s32 %s12, 1
      %p304 = scmp.lt.s32.totalorder %s22, 1
      %s305 = scalar_select %p304, %s22, 1
      %p306 = scmp.lt.s32.totalorder %s23, 0
      %s307 = scalar_select %p306, %s23, 0
      %s308 = smul.addr %s305, 4
      %s309 = sadd.s32 %s307, %s308
      %s310 = smul.addr %s309, 4
      %s311 = scalar_lea.vmem %s0, %s310
      %p312 = pneg %p59
      %p313 = pneg %p56
      %p314 = scmp.lt.s32.totalorder %s23, %s24
      %s315 = scalar_select %p314, %s23, %s24
      %p316 = scmp.lt.s32.totalorder %s22, 1
      %s317 = scalar_select %p316, %s22, 1
      %p318 = scmp.lt.s32.totalorder %s315, 0
      %s319 = scalar_select %p318, %s315, 0
      %s320 = smul.addr %s317, 4
      %s321 = sadd.s32 %s319, %s320
      %s322 = smul.addr %s321, 4
      %s323 = scalar_lea.vmem %s1, %s322
      %p324 = pneg %p91
      %p325 = pneg %p88
      %p326 = scmp.lt.s32.totalorder %s23, %s24
      %s327 = scalar_select %p326, %s23, %s24
      %p328 = scmp.lt.s32.totalorder %s22, 1
      %s329 = scalar_select %p328, %s22, 1
      %p330 = scmp.lt.s32.totalorder %s327, 0
      %s331 = scalar_select %p330, %s327, 0
      %s332 = smul.addr %s329, 4
      %s333 = sadd.s32 %s331, %s332
      %s334 = smul.addr %s333, 4
      %s335 = scalar_lea.vmem %s2, %s334
      %p336 = pneg %p123
      %p337 = pneg %p120
      %p338 = scmp.lt.s32.totalorder %s22, 1
      %s339 = scalar_select %p338, %s22, 1
      %p340 = scmp.lt.s32.totalorder %s23, 0
      %s341 = scalar_select %p340, %s23, 0
      %s342 = sadd.s32 %s341, %s339
      %s343 = smul.addr %s342, 8
      %s344 = scalar_lea.vmem %s3, %s343
      %p345 = pneg %p151
      %p346 = pneg %p148
      %p347 = pneg %p172
      %p348 = pneg %p169
      %p349 = pneg %p193
      %p350 = pneg %p190
      %p351 = pneg %p221
      %p352 = pneg %p218
      %p353 = scmp.lt.s32.totalorder %s22, 1
      %s354 = scalar_select %p353, %s22, 1
      %p355 = scmp.lt.s32.totalorder %s23, 0
      %s356 = scalar_select %p355, %s23, 0
      %s357 = sadd.s32 %s356, %s354
      %s358 = smul.addr %s357, 8
      %s359 = scalar_lea.vmem %s6, %s358
      %p360 = scmp.lt.s32.totalorder %s22, 1
      %s361 = scalar_select %p360, %s22, 1
      %p362 = scmp.lt.s32.totalorder %s23, 0
      %s363 = scalar_select %p362, %s23, 0
      %s364 = smul.addr %s361, 4
      %s365 = sadd.s32 %s363, %s364
      %s366 = smul.addr %s365, 4
      %s367 = scalar_lea.vmem %s0, %s366
      %p368 = scmp.lt.s32.totalorder %s23, %s24
      %s369 = scalar_select %p368, %s23, %s24
      %p370 = scmp.lt.s32.totalorder %s22, 1
      %s371 = scalar_select %p370, %s22, 1
      %p372 = scmp.lt.s32.totalorder %s369, 0
      %s373 = scalar_select %p372, %s369, 0
      %s374 = smul.addr %s371, 4
      %s375 = sadd.s32 %s373, %s374
      %s376 = smul.addr %s375, 4
      %s377 = scalar_lea.vmem %s1, %s376
      %p378 = scmp.lt.s32.totalorder %s23, %s24
      %s379 = scalar_select %p378, %s23, %s24
      %p380 = scmp.lt.s32.totalorder %s23, %s24
      %s381 = scalar_select %p380, %s23, %s24
      %p382 = scmp.lt.s32.totalorder %s22, 1
      %s383 = scalar_select %p382, %s22, 1
      %p384 = scmp.lt.s32.totalorder %s381, 0
      %s385 = scalar_select %p384, %s381, 0
      %s386 = smul.addr %s383, 4
      %s387 = sadd.s32 %s385, %s386
      %s388 = smul.addr %s387, 4
      %s389 = scalar_lea.vmem %s2, %s388
      %p390 = scmp.lt.s32.totalorder %s23, %s24
      %s391 = scalar_select %p390, %s23, %s24
      %p392 = scmp.lt.s32.totalorder %s22, 1
      %s393 = scalar_select %p392, %s22, 1
      %p394 = scmp.lt.s32.totalorder %s23, 0
      %s395 = scalar_select %p394, %s23, 0
      %s396 = sadd.s32 %s395, %s393
      %s397 = smul.addr %s396, 8
      %s398 = scalar_lea.vmem %s3, %s397
      %p399 = scmp.lt.s32.totalorder %s22, 1
      %s400 = scalar_select %p399, %s22, 1
      %p401 = scmp.lt.s32.totalorder %s23, 0
      %s402 = scalar_select %p401, %s23, 0
      %s403 = sadd.s32 %s402, %s400
      %s404 = smul.addr %s403, 8
      %s405 = scalar_lea.vmem %s6, %s404
      %p407 = scmp.eq.s32.totalorder %s24, 0
      // Predicated region
      $region45: #{global_latent_transformer.7} parent=43 // pred_check
        %p408 = pneg %p407
      $region46: #{global_latent_transformer.7} parent=43 // pred_check_branch
        %410 = sbr.rel (%p408) target = $region48
      $region47: #{global_latent_transformer.7} parent=43 // pred_region
        %vm411 = vcmask 7168
        %412 = vst.msk [vmem:[#allocation2] sm:$0xff] %vm411, -1e+30
        %413 = vst.msk [vmem:[#allocation2 + $0x8] sm:$0xff] %vm411, -1e+30
        %414 = vst.msk [vmem:[#allocation2 + $0x10] sm:$0xff] %vm411, -1e+30
        %415 = vst.msk [vmem:[#allocation2 + $0x18] sm:$0xff] %vm411, -1e+30
        %416 = vst.msk [vmem:[#allocation3] sm:$0xff] %vm411, 0.0
        %417 = vst.msk [vmem:[#allocation3 + $0x8] sm:$0xff] %vm411, 0.0
        %418 = vst.msk [vmem:[#allocation3 + $0x10] sm:$0xff] %vm411, 0.0
        %419 = vst.msk [vmem:[#allocation3 + $0x18] sm:$0xff] %vm411, 0.0
        %vm420 = vcmask 64512
        %421 = vst.msk [vmem:[#allocation4] sm:$0xff] %vm420, 0.0
        %422 = vst.msk [vmem:[#allocation4 + $0x8] sm:$0xff] %vm420, 0.0
        %423 = vst.msk [vmem:[#allocation4 + $0x10] sm:$0xff] %vm420, 0.0
        %424 = vst.msk [vmem:[#allocation4 + $0x18] sm:$0xff] %vm420, 0.0
      $region48: #{global_latent_transformer.7} parent=43 // pred_fallthru
        _
      %p425 = scmp.lt.s32.totalorder %s24, %s23
      // Predicated region
      $region49: #{global_latent_transformer.7} parent=43 // pred_check
        %p426 = pneg %p425
      $region50: #{global_latent_transformer.7} parent=43 // pred_check_branch
        %428 = sbr.rel (%p426) target = $region52
      $region51: #{global_latent_transformer.7} parent=43 // pred_region
        %v429 = vld [vmem:[%s367] sm:$0xf]
        %v430 = vld [vmem:[%s367 + $0x4] sm:$0xf]
        %v431 = vld [vmem:[%s367 + $0x8] sm:$0xf]
        %v432 = vld [vmem:[%s367 + $0xc] sm:$0xf]
        %v433 = vld [vmem:[%s377] sm:$0xf]
        %v434 = vld [vmem:[%s377 + $0x4] sm:$0xf]
        %v435 = vld [vmem:[%s377 + $0x8] sm:$0xf]
        %v436 = vld [vmem:[%s377 + $0xc] sm:$0xf]
        %vm437 = vcmask 64512
        %v439 = vsel %vm437, %v429, 0
        %v442 = vsel %vm437, %v433, 0
        %444 = vmatprep.subr.bf16.mxu0 0
        %445 = vmatpush1.bf16.xpose.msra.mxu0 %v442
        %446 = vmatprep.subr.bf16.mxu0 0
        %447 = vmatpush1.bf16.xpose.msra.mxu0 0
        %448 = vmatprep.subr.bf16.mxu0 0
        %449 = vmatpush1.bf16.xpose.msra.mxu0 0
        %450 = vmatprep.subr.bf16.mxu0 0
        %451 = vmatpush1.bf16.xpose.msra.mxu0 0
        %452 = vmatprep.subr.bf16.mxu0 0
        %453 = vmatpush1.bf16.xpose.msra.mxu0 0
        %454 = vmatprep.subr.bf16.mxu0 0
        %455 = vmatpush1.bf16.xpose.msra.mxu0 0
        %456 = vmatprep.subr.bf16.mxu0 0
        %457 = vmatpush1.bf16.xpose.msra.mxu0 0
        %458 = vmatprep.subr.bf16.mxu0 0
        %459 = vmatpush1.bf16.xpose.msra.mxu0 0
        %460 = vmatprep.subr.bf16.mxu0 0
        %461 = vmatpush1.bf16.xpose.msra.mxu0 0
        %462 = vmatprep.subr.bf16.mxu0 0
        %463 = vmatpush1.bf16.xpose.msra.mxu0 0
        %464 = vmatprep.subr.bf16.mxu0 0
        %465 = vmatpush1.bf16.xpose.msra.mxu0 0
        %466 = vmatprep.subr.bf16.mxu0 0
        %467 = vmatpush1.bf16.xpose.msra.mxu0 0
        %468 = vmatprep.subr.bf16.mxu0 0
        %469 = vmatpush1.bf16.xpose.msra.mxu0 0
        %470 = vmatprep.subr.bf16.mxu0 0
        %471 = vmatpush1.bf16.xpose.msra.mxu0 0
        %472 = vmatprep.subr.bf16.mxu0 0
        %473 = vmatpush1.bf16.xpose.msra.mxu0 0
        %474 = vmatprep.subr.bf16.mxu0 0
        %475 = vmatpush1.bf16.xpose.msra.mxu0 0
        %476 = vmatprep.mubr.bf16.mxu0 0
        %477 = vmatmul.mubr.bf16.gmra.mrb[0].mxu0 %v439
        %v478 = vpop.f32.mrb[0].mxu0
        %v479 = vadd.f32 0.0, %v478
        %v480 = vpop.f32.mrb[0].mxu0
        %v481 = vpop.f32.mrb[0].mxu0
        %v482 = vpop.f32.mrb[0].mxu0
        %483 = vdwg.mxu0
        %v485 = vsel %vm437, %v430, 0
        %v488 = vsel %vm437, %v434, 0
        %490 = vmatprep.subr.bf16.mxu0 0
        %491 = vmatpush1.bf16.xpose.msra.mxu0 %v488
        %492 = vmatprep.subr.bf16.mxu0 0
        %493 = vmatpush1.bf16.xpose.msra.mxu0 0
        %494 = vmatprep.subr.bf16.mxu0 0
        %495 = vmatpush1.bf16.xpose.msra.mxu0 0
        %496 = vmatprep.subr.bf16.mxu0 0
        %497 = vmatpush1.bf16.xpose.msra.mxu0 0
        %498 = vmatprep.subr.bf16.mxu0 0
        %499 = vmatpush1.bf16.xpose.msra.mxu0 0
        %500 = vmatprep.subr.bf16.mxu0 0
        %501 = vmatpush1.bf16.xpose.msra.mxu0 0
        %502 = vmatprep.subr.bf16.mxu0 0
        %503 = vmatpush1.bf16.xpose.msra.mxu0 0
        %504 = vmatprep.subr.bf16.mxu0 0
        %505 = vmatpush1.bf16.xpose.msra.mxu0 0
        %506 = vmatprep.subr.bf16.mxu0 0
        %507 = vmatpush1.bf16.xpose.msra.mxu0 0
        %508 = vmatprep.subr.bf16.mxu0 0
        %509 = vmatpush1.bf16.xpose.msra.mxu0 0
        %510 = vmatprep.subr.bf16.mxu0 0
        %511 = vmatpush1.bf16.xpose.msra.mxu0 0
        %512 = vmatprep.subr.bf16.mxu0 0
        %513 = vmatpush1.bf16.xpose.msra.mxu0 0
        %514 = vmatprep.subr.bf16.mxu0 0
        %515 = vmatpush1.bf16.xpose.msra.mxu0 0
        %516 = vmatprep.subr.bf16.mxu0 0
        %517 = vmatpush1.bf16.xpose.msra.mxu0 0
        %518 = vmatprep.subr.bf16.mxu0 0
        %519 = vmatpush1.bf16.xpose.msra.mxu0 0
        %520 = vmatprep.subr.bf16.mxu0 0
        %521 = vmatpush1.bf16.xpose.msra.mxu0 0
        %522 = vmatprep.mubr.bf16.mxu0 0
        %523 = vmatmul.mubr.bf16.gmra.mrb[0].mxu0 %v485
        %v524 = vpop.f32.mrb[0].mxu0
        %v525 = vadd.f32 0.0, %v524
        %v526 = vpop.f32.mrb[0].mxu0
        %v527 = vpop.f32.mrb[0].mxu0
        %v528 = vpop.f32.mrb[0].mxu0
        %529 = vdwg.mxu0
        %v531 = vsel %vm437, %v431, 0
        %v534 = vsel %vm437, %v435, 0
        %536 = vmatprep.subr.bf16.mxu0 0
        %537 = vmatpush1.bf16.xpose.msra.mxu0 %v534
        %538 = vmatprep.subr.bf16.mxu0 0
        %539 = vmatpush1.bf16.xpose.msra.mxu0 0
        %540 = vmatprep.subr.bf16.mxu0 0
        %541 = vmatpush1.bf16.xpose.msra.mxu0 0
        %542 = vmatprep.subr.bf16.mxu0 0
        %543 = vmatpush1.bf16.xpose.msra.mxu0 0
        %544 = vmatprep.subr.bf16.mxu0 0
        %545 = vmatpush1.bf16.xpose.msra.mxu0 0
        %546 = vmatprep.subr.bf16.mxu0 0
        %547 = vmatpush1.bf16.xpose.msra.mxu0 0
        %548 = vmatprep.subr.bf16.mxu0 0
        %549 = vmatpush1.bf16.xpose.msra.mxu0 0
        %550 = vmatprep.subr.bf16.mxu0 0
        %551 = vmatpush1.bf16.xpose.msra.mxu0 0
        %552 = vmatprep.subr.bf16.mxu0 0
        %553 = vmatpush1.bf16.xpose.msra.mxu0 0
        %554 = vmatprep.subr.bf16.mxu0 0
        %555 = vmatpush1.bf16.xpose.msra.mxu0 0
        %556 = vmatprep.subr.bf16.mxu0 0
        %557 = vmatpush1.bf16.xpose.msra.mxu0 0
        %558 = vmatprep.subr.bf16.mxu0 0
        %559 = vmatpush1.bf16.xpose.msra.mxu0 0
        %560 = vmatprep.subr.bf16.mxu0 0
        %561 = vmatpush1.bf16.xpose.msra.mxu0 0
        %562 = vmatprep.subr.bf16.mxu0 0
        %563 = vmatpush1.bf16.xpose.msra.mxu0 0
        %564 = vmatprep.subr.bf16.mxu0 0
        %565 = vmatpush1.bf16.xpose.msra.mxu0 0
        %566 = vmatprep.subr.bf16.mxu0 0
        %567 = vmatpush1.bf16.xpose.msra.mxu0 0
        %568 = vmatprep.mubr.bf16.mxu0 0
        %569 = vmatmul.mubr.bf16.gmra.mrb[0].mxu0 %v531
        %v570 = vpop.f32.mrb[0].mxu0
        %v571 = vadd.f32 0.0, %v570
        %v572 = vpop.f32.mrb[0].mxu0
        %v573 = vpop.f32.mrb[0].mxu0
        %v574 = vpop.f32.mrb[0].mxu0
        %575 = vdwg.mxu0
        %v577 = vsel %vm437, %v432, 0
        %v580 = vsel %vm437, %v436, 0
        %582 = vmatprep.subr.bf16.mxu0 0
        %583 = vmatpush1.bf16.xpose.msra.mxu0 %v580
        %584 = vmatprep.subr.bf16.mxu0 0
        %585 = vmatpush1.bf16.xpose.msra.mxu0 0
        %586 = vmatprep.subr.bf16.mxu0 0
        %587 = vmatpush1.bf16.xpose.msra.mxu0 0
        %588 = vmatprep.subr.bf16.mxu0 0
        %589 = vmatpush1.bf16.xpose.msra.mxu0 0
        %590 = vmatprep.subr.bf16.mxu0 0
        %591 = vmatpush1.bf16.xpose.msra.mxu0 0
        %592 = vmatprep.subr.bf16.mxu0 0
        %593 = vmatpush1.bf16.xpose.msra.mxu0 0
        %594 = vmatprep.subr.bf16.mxu0 0
        %595 = vmatpush1.bf16.xpose.msra.mxu0 0
        %596 = vmatprep.subr.bf16.mxu0 0
        %597 = vmatpush1.bf16.xpose.msra.mxu0 0
        %598 = vmatprep.subr.bf16.mxu0 0
        %599 = vmatpush1.bf16.xpose.msra.mxu0 0
        %600 = vmatprep.subr.bf16.mxu0 0
        %601 = vmatpush1.bf16.xpose.msra.mxu0 0
        %602 = vmatprep.subr.bf16.mxu0 0
        %603 = vmatpush1.bf16.xpose.msra.mxu0 0
        %604 = vmatprep.subr.bf16.mxu0 0
        %605 = vmatpush1.bf16.xpose.msra.mxu0 0
        %606 = vmatprep.subr.bf16.mxu0 0
        %607 = vmatpush1.bf16.xpose.msra.mxu0 0
        %608 = vmatprep.subr.bf16.mxu0 0
        %609 = vmatpush1.bf16.xpose.msra.mxu0 0
        %610 = vmatprep.subr.bf16.mxu0 0
        %611 = vmatpush1.bf16.xpose.msra.mxu0 0
        %612 = vmatprep.subr.bf16.mxu0 0
        %613 = vmatpush1.bf16.xpose.msra.mxu0 0
        %614 = vmatprep.mubr.bf16.mxu0 0
        %615 = vmatmul.mubr.bf16.gmra.mrb[0].mxu0 %v577
        %v616 = vpop.f32.mrb[0].mxu0
        %v617 = vadd.f32 0.0, %v616
        %v618 = vpop.f32.mrb[0].mxu0
        %v619 = vpop.f32.mrb[0].mxu0
        %v620 = vpop.f32.mrb[0].mxu0
        %621 = vdwg.mxu0
        %v622 = vld [vmem:[#allocation2] sm:$0xff]
        %v623 = vld [vmem:[#allocation2 + $0x8] sm:$0xff]
        %v624 = vld [vmem:[#allocation2 + $0x10] sm:$0xff]
        %v625 = vld [vmem:[#allocation2 + $0x18] sm:$0xff]
        %v626 = vsel %vm437, %v479, -inf
        %627 = vmax.xlane.f32.xlu0 %v626
        %v628 = vpop.xlane.xlu0 %627
        %v629 = vsel %vm437, %v525, -inf
        %630 = vmax.xlane.f32.xlu0 %v629
        %v631 = vpop.xlane.xlu0 %630
        %v632 = vsel %vm437, %v571, -inf
        %633 = vmax.xlane.f32.xlu0 %v632
        %v634 = vpop.xlane.xlu0 %633
        %v635 = vsel %vm437, %v617, -inf
        %636 = vmax.xlane.f32.xlu0 %v635
        %v637 = vpop.xlane.xlu0 %636
        %v638 = vmax.f32 %v622, %v628
        %v639 = vmax.f32 %v623, %v631
        %v640 = vmax.f32 %v624, %v634
        %v641 = vmax.f32 %v625, %v637
        %v642 = vsub.f32 %v622, %v638
        %v643 = vsub.f32 %v623, %v639
        %v644 = vsub.f32 %v624, %v640
        %v645 = vsub.f32 %v625, %v641
        %v646 = vmul.f32 %v642, 1.442695
        %v647 = vpow.pop %v646
        %v648 = vmul.f32 %v643, 1.442695
        %v649 = vpow.pop %v648
        %v650 = vmul.f32 %v644, 1.442695
        %v651 = vpow.pop %v650
        %v652 = vmul.f32 %v645, 1.442695
        %v653 = vpow.pop %v652
        %655 = vset.pattern.permute.xlu0 0
        %656 = vperm.xlu0 %655, %v638
        %v657 = vpop.permute.xlu0 %656
        %660 = vset.pattern.permute.xlu0 0
        %661 = vperm.xlu0 %660, %v639
        %v662 = vpop.permute.xlu0 %661
        %665 = vset.pattern.permute.xlu0 0
        %666 = vperm.xlu0 %665, %v640
        %v667 = vpop.permute.xlu0 %666
        %670 = vset.pattern.permute.xlu0 0
        %671 = vperm.xlu0 %670, %v641
        %v672 = vpop.permute.xlu0 %671
        %v674 = vsub.f32 %v479, %v657
        %v675 = vsub.f32 %v525, %v662
        %v676 = vsub.f32 %v571, %v667
        %v677 = vsub.f32 %v617, %v672
        %v678 = vmul.f32 %v674, 1.442695
        %v679 = vpow.pop %v678
        %v680 = vmul.f32 %v675, 1.442695
        %v681 = vpow.pop %v680
        %v682 = vmul.f32 %v676, 1.442695
        %v683 = vpow.pop %v682
        %v684 = vmul.f32 %v677, 1.442695
        %v685 = vpow.pop %v684
        %v686 = vld [vmem:[#allocation3] sm:$0xff]
        %v687 = vld [vmem:[#allocation3 + $0x8] sm:$0xff]
        %v688 = vld [vmem:[#allocation3 + $0x10] sm:$0xff]
        %v689 = vld [vmem:[#allocation3 + $0x18] sm:$0xff]
        %v690 = vmul.f32 %v647, %v686
        %v691 = vmul.f32 %v649, %v687
        %v692 = vmul.f32 %v651, %v688
        %v693 = vmul.f32 %v653, %v689
        %v694 = vsel %vm437, %v679, 0.0
        %695 = vadd.xlane.f32.xlu0 %v694
        %v696 = vpop.xlane.xlu0 %695
        %v697 = vsel %vm437, %v681, 0.0
        %698 = vadd.xlane.f32.xlu0 %v697
        %v699 = vpop.xlane.xlu0 %698
        %v700 = vsel %vm437, %v683, 0.0
        %701 = vadd.xlane.f32.xlu0 %v700
        %v702 = vpop.xlane.xlu0 %701
        %v703 = vsel %vm437, %v685, 0.0
        %704 = vadd.xlane.f32.xlu0 %v703
        %v705 = vpop.xlane.xlu0 %704
        %v706 = vadd.f32 %v690, %v696
        %v707 = vadd.f32 %v691, %v699
        %v708 = vadd.f32 %v692, %v702
        %v709 = vadd.f32 %v693, %v705
        %vm710 = vcmask 7168
        %711 = vst.msk [vmem:[#allocation3] sm:$0xff] %vm710, %v706
        %712 = vst.msk [vmem:[#allocation3 + $0x8] sm:$0xff] %vm710, %v707
        %713 = vst.msk [vmem:[#allocation3 + $0x10] sm:$0xff] %vm710, %v708
        %714 = vst.msk [vmem:[#allocation3 + $0x18] sm:$0xff] %vm710, %v709
        %v715 = vld [vmem:[#allocation4] sm:$0xff]
        %v716 = vld [vmem:[#allocation4 + $0x8] sm:$0xff]
        %v717 = vld [vmem:[#allocation4 + $0x10] sm:$0xff]
        %v718 = vld [vmem:[#allocation4 + $0x18] sm:$0xff]
        %720 = vset.pattern.permute.xlu0 0
        %721 = vperm.xlu0 %720, %v647
        %v722 = vpop.permute.xlu0 %721
        %725 = vset.pattern.permute.xlu0 0
        %726 = vperm.xlu0 %725, %v649
        %v727 = vpop.permute.xlu0 %726
        %730 = vset.pattern.permute.xlu0 0
        %731 = vperm.xlu0 %730, %v651
        %v732 = vpop.permute.xlu0 %731
        %735 = vset.pattern.permute.xlu0 0
        %736 = vperm.xlu0 %735, %v653
        %v737 = vpop.permute.xlu0 %736
        %v739 = vmul.f32 %v722, %v715
        %v740 = vmul.f32 %v727, %v716
        %v741 = vmul.f32 %v732, %v717
        %v742 = vmul.f32 %v737, %v718
        %v743 = vpack.c.bf16 %v679, %v679
        %v744 = vpack.c.bf16 %v681, %v681
        %v745 = vpack.c.bf16 %v683, %v683
        %v746 = vpack.c.bf16 %v685, %v685
        %v747 = vld [vmem:[%s389] sm:$0xf]
        %v748 = vld [vmem:[%s389 + $0x4] sm:$0xf]
        %v749 = vld [vmem:[%s389 + $0x8] sm:$0xf]
        %v750 = vld [vmem:[%s389 + $0xc] sm:$0xf]
        %v752 = vsel %vm437, %v743, 0
        %vm754 = vcmask 1043456
        %v756 = vsel %vm754, %v747, 0
        %758 = vmatprep.subr.bf16.mxu0 0
        %759 = vmatpush1.bf16.msra.mxu0 %v756
        %760 = vmatprep.subr.bf16.mxu0 0
        %761 = vmatpush1.bf16.msra.mxu0 0
        %762 = vmatprep.subr.bf16.mxu0 0
        %763 = vmatpush1.bf16.msra.mxu0 0
        %764 = vmatprep.subr.bf16.mxu0 0
        %765 = vmatpush1.bf16.msra.mxu0 0
        %766 = vmatprep.subr.bf16.mxu0 0
        %767 = vmatpush1.bf16.msra.mxu0 0
        %768 = vmatprep.subr.bf16.mxu0 0
        %769 = vmatpush1.bf16.msra.mxu0 0
        %770 = vmatprep.subr.bf16.mxu0 0
        %771 = vmatpush1.bf16.msra.mxu0 0
        %772 = vmatprep.subr.bf16.mxu0 0
        %773 = vmatpush1.bf16.msra.mxu0 0
        %774 = vmatprep.subr.bf16.mxu0 0
        %775 = vmatpush1.bf16.msra.mxu0 0
        %776 = vmatprep.subr.bf16.mxu0 0
        %777 = vmatpush1.bf16.msra.mxu0 0
        %778 = vmatprep.subr.bf16.mxu0 0
        %779 = vmatpush1.bf16.msra.mxu0 0
        %780 = vmatprep.subr.bf16.mxu0 0
        %781 = vmatpush1.bf16.msra.mxu0 0
        %782 = vmatprep.subr.bf16.mxu0 0
        %783 = vmatpush1.bf16.msra.mxu0 0
        %784 = vmatprep.subr.bf16.mxu0 0
        %785 = vmatpush1.bf16.msra.mxu0 0
        %786 = vmatprep.subr.bf16.mxu0 0
        %787 = vmatpush1.bf16.msra.mxu0 0
        %788 = vmatprep.subr.bf16.mxu0 0
        %789 = vmatpush1.bf16.msra.mxu0 0
        %790 = vmatprep.mubr.bf16.mxu0 0
        %791 = vmatmul.mubr.bf16.gmra.mrb[0].mxu0 %v752
        %v792 = vpop.f32.mrb[0].mxu0
        %v793 = vadd.f32 0.0, %v792
        %v794 = vpop.f32.mrb[0].mxu0
        %v795 = vpop.f32.mrb[0].mxu0
        %v796 = vpop.f32.mrb[0].mxu0
        %797 = vdwg.mxu0
        %v799 = vsel %vm437, %v744, 0
        %v802 = vsel %vm754, %v748, 0
        %804 = vmatprep.subr.bf16.mxu0 0
        %805 = vmatpush1.bf16.msra.mxu0 %v802
        %806 = vmatprep.subr.bf16.mxu0 0
        %807 = vmatpush1.bf16.msra.mxu0 0
        %808 = vmatprep.subr.bf16.mxu0 0
        %809 = vmatpush1.bf16.msra.mxu0 0
        %810 = vmatprep.subr.bf16.mxu0 0
        %811 = vmatpush1.bf16.msra.mxu0 0
        %812 = vmatprep.subr.bf16.mxu0 0
        %813 = vmatpush1.bf16.msra.mxu0 0
        %814 = vmatprep.subr.bf16.mxu0 0
        %815 = vmatpush1.bf16.msra.mxu0 0
        %816 = vmatprep.subr.bf16.mxu0 0
        %817 = vmatpush1.bf16.msra.mxu0 0
        %818 = vmatprep.subr.bf16.mxu0 0
        %819 = vmatpush1.bf16.msra.mxu0 0
        %820 = vmatprep.subr.bf16.mxu0 0
        %821 = vmatpush1.bf16.msra.mxu0 0
        %822 = vmatprep.subr.bf16.mxu0 0
        %823 = vmatpush1.bf16.msra.mxu0 0
        %824 = vmatprep.subr.bf16.mxu0 0
        %825 = vmatpush1.bf16.msra.mxu0 0
        %826 = vmatprep.subr.bf16.mxu0 0
        %827 = vmatpush1.bf16.msra.mxu0 0
        %828 = vmatprep.subr.bf16.mxu0 0
        %829 = vmatpush1.bf16.msra.mxu0 0
        %830 = vmatprep.subr.bf16.mxu0 0
        %831 = vmatpush1.bf16.msra.mxu0 0
        %832 = vmatprep.subr.bf16.mxu0 0
        %833 = vmatpush1.bf16.msra.mxu0 0
        %834 = vmatprep.subr.bf16.mxu0 0
        %835 = vmatpush1.bf16.msra.mxu0 0
        %836 = vmatprep.mubr.bf16.mxu0 0
        %837 = vmatmul.mubr.bf16.gmra.mrb[0].mxu0 %v799
        %v838 = vpop.f32.mrb[0].mxu0
        %v839 = vadd.f32 0.0, %v838
        %v840 = vpop.f32.mrb[0].mxu0
        %v841 = vpop.f32.mrb[0].mxu0
        %v842 = vpop.f32.mrb[0].mxu0
        %843 = vdwg.mxu0
        %v845 = vsel %vm437, %v745, 0
        %v848 = vsel %vm754, %v749, 0
        %850 = vmatprep.subr.bf16.mxu0 0
        %851 = vmatpush1.bf16.msra.mxu0 %v848
        %852 = vmatprep.subr.bf16.mxu0 0
        %853 = vmatpush1.bf16.msra.mxu0 0
        %854 = vmatprep.subr.bf16.mxu0 0
        %855 = vmatpush1.bf16.msra.mxu0 0
        %856 = vmatprep.subr.bf16.mxu0 0
        %857 = vmatpush1.bf16.msra.mxu0 0
        %858 = vmatprep.subr.bf16.mxu0 0
        %859 = vmatpush1.bf16.msra.mxu0 0
        %860 = vmatprep.subr.bf16.mxu0 0
        %861 = vmatpush1.bf16.msra.mxu0 0
        %862 = vmatprep.subr.bf16.mxu0 0
        %863 = vmatpush1.bf16.msra.mxu0 0
        %864 = vmatprep.subr.bf16.mxu0 0
        %865 = vmatpush1.bf16.msra.mxu0 0
        %866 = vmatprep.subr.bf16.mxu0 0
        %867 = vmatpush1.bf16.msra.mxu0 0
        %868 = vmatprep.subr.bf16.mxu0 0
        %869 = vmatpush1.bf16.msra.mxu0 0
        %870 = vmatprep.subr.bf16.mxu0 0
        %871 = vmatpush1.bf16.msra.mxu0 0
        %872 = vmatprep.subr.bf16.mxu0 0
        %873 = vmatpush1.bf16.msra.mxu0 0
        %874 = vmatprep.subr.bf16.mxu0 0
        %875 = vmatpush1.bf16.msra.mxu0 0
        %876 = vmatprep.subr.bf16.mxu0 0
        %877 = vmatpush1.bf16.msra.mxu0 0
        %878 = vmatprep.subr.bf16.mxu0 0
        %879 = vmatpush1.bf16.msra.mxu0 0
        %880 = vmatprep.subr.bf16.mxu0 0
        %881 = vmatpush1.bf16.msra.mxu0 0
        %882 = vmatprep.mubr.bf16.mxu0 0
        %883 = vmatmul.mubr.bf16.gmra.mrb[0].mxu0 %v845
        %v884 = vpop.f32.mrb[0].mxu0
        %v885 = vadd.f32 0.0, %v884
        %v886 = vpop.f32.mrb[0].mxu0
        %v887 = vpop.f32.mrb[0].mxu0
        %v888 = vpop.f32.mrb[0].mxu0
        %889 = vdwg.mxu0
        %v891 = vsel %vm437, %v746, 0
        %v894 = vsel %vm754, %v750, 0
        %896 = vmatprep.subr.bf16.mxu0 0
        %897 = vmatpush1.bf16.msra.mxu0 %v894
        %898 = vmatprep.subr.bf16.mxu0 0
        %899 = vmatpush1.bf16.msra.mxu0 0
        %900 = vmatprep.subr.bf16.mxu0 0
        %901 = vmatpush1.bf16.msra.mxu0 0
        %902 = vmatprep.subr.bf16.mxu0 0
        %903 = vmatpush1.bf16.msra.mxu0 0
        %904 = vmatprep.subr.bf16.mxu0 0
        %905 = vmatpush1.bf16.msra.mxu0 0
        %906 = vmatprep.subr.bf16.mxu0 0
        %907 = vmatpush1.bf16.msra.mxu0 0
        %908 = vmatprep.subr.bf16.mxu0 0
        %909 = vmatpush1.bf16.msra.mxu0 0
        %910 = vmatprep.subr.bf16.mxu0 0
        %911 = vmatpush1.bf16.msra.mxu0 0
        %912 = vmatprep.subr.bf16.mxu0 0
        %913 = vmatpush1.bf16.msra.mxu0 0
        %914 = vmatprep.subr.bf16.mxu0 0
        %915 = vmatpush1.bf16.msra.mxu0 0
        %916 = vmatprep.subr.bf16.mxu0 0
        %917 = vmatpush1.bf16.msra.mxu0 0
        %918 = vmatprep.subr.bf16.mxu0 0
        %919 = vmatpush1.bf16.msra.mxu0 0
        %920 = vmatprep.subr.bf16.mxu0 0
        %921 = vmatpush1.bf16.msra.mxu0 0
        %922 = vmatprep.subr.bf16.mxu0 0
        %923 = vmatpush1.bf16.msra.mxu0 0
        %924 = vmatprep.subr.bf16.mxu0 0
        %925 = vmatpush1.bf16.msra.mxu0 0
        %926 = vmatprep.subr.bf16.mxu0 0
        %927 = vmatpush1.bf16.msra.mxu0 0
        %928 = vmatprep.mubr.bf16.mxu0 0
        %929 = vmatmul.mubr.bf16.gmra.mrb[0].mxu0 %v891
        %v930 = vpop.f32.mrb[0].mxu0
        %v931 = vadd.f32 0.0, %v930
        %v932 = vpop.f32.mrb[0].mxu0
        %v933 = vpop.f32.mrb[0].mxu0
        %v934 = vpop.f32.mrb[0].mxu0
        %935 = vdwg.mxu0
        %v936 = vadd.f32 %v739, %v793
        %v937 = vadd.f32 %v740, %v839
        %v938 = vadd.f32 %v741, %v885
        %v939 = vadd.f32 %v742, %v931
        %940 = vst.msk [vmem:[#allocation4] sm:$0xff] %vm437, %v936
        %941 = vst.msk [vmem:[#allocation4 + $0x8] sm:$0xff] %vm437, %v937
        %942 = vst.msk [vmem:[#allocation4 + $0x10] sm:$0xff] %vm437, %v938
        %943 = vst.msk [vmem:[#allocation4 + $0x18] sm:$0xff] %vm437, %v939
        %944 = vst.msk [vmem:[#allocation2] sm:$0xff] %vm710, %v638
        %945 = vst.msk [vmem:[#allocation2 + $0x8] sm:$0xff] %vm710, %v639
        %946 = vst.msk [vmem:[#allocation2 + $0x10] sm:$0xff] %vm710, %v640
        %947 = vst.msk [vmem:[#allocation2 + $0x18] sm:$0xff] %vm710, %v641
      $region52: #{global_latent_transformer.7} parent=43 // pred_fallthru
        _
      %p948 = scmp.eq.s32.totalorder %s24, %s23
      // Predicated region
      $region53: #{global_latent_transformer.7} parent=43 // pred_check
        %p949 = pneg %p948
      $region54: #{global_latent_transformer.7} parent=43 // pred_check_branch
        %951 = sbr.rel (%p949) target = $region56
      $region55: #{global_latent_transformer.7} parent=43 // pred_region
        %v952 = vlaneseq
        %v953 = vshrl.u32 %v952, 7
        %v954 = vlaneseq
        %v955 = vand.u32 %v954, 127
        %vm956 = vcmp.gt.s32.totalorder %v955, %v953
        %v957 = vld [vmem:[%s367] sm:$0xf]
        %v958 = vld [vmem:[%s367 + $0x4] sm:$0xf]
        %v959 = vld [vmem:[%s367 + $0x8] sm:$0xf]
        %v960 = vld [vmem:[%s367 + $0xc] sm:$0xf]
        %v961 = vld [vmem:[%s377] sm:$0xf]
        %v962 = vld [vmem:[%s377 + $0x4] sm:$0xf]
        %v963 = vld [vmem:[%s377 + $0x8] sm:$0xf]
        %v964 = vld [vmem:[%s377 + $0xc] sm:$0xf]
        %vm965 = vcmask 64512
        %v967 = vsel %vm965, %v957, 0
        %v970 = vsel %vm965, %v961, 0
        %972 = vmatprep.subr.bf16.mxu0 0
        %973 = vmatpush1.bf16.xpose.msra.mxu0 %v970
        %974 = vmatprep.subr.bf16.mxu0 0
        %975 = vmatpush1.bf16.xpose.msra.mxu0 0
        %976 = vmatprep.subr.bf16.mxu0 0
        %977 = vmatpush1.bf16.xpose.msra.mxu0 0
        %978 = vmatprep.subr.bf16.mxu0 0
        %979 = vmatpush1.bf16.xpose.msra.mxu0 0
        %980 = vmatprep.subr.bf16.mxu0 0
        %981 = vmatpush1.bf16.xpose.msra.mxu0 0
        %982 = vmatprep.subr.bf16.mxu0 0
        %983 = vmatpush1.bf16.xpose.msra.mxu0 0
        %984 = vmatprep.subr.bf16.mxu0 0
        %985 = vmatpush1.bf16.xpose.msra.mxu0 0
        %986 = vmatprep.subr.bf16.mxu0 0
        %987 = vmatpush1.bf16.xpose.msra.mxu0 0
        %988 = vmatprep.subr.bf16.mxu0 0
        %989 = vmatpush1.bf16.xpose.msra.mxu0 0
        %990 = vmatprep.subr.bf16.mxu0 0
        %991 = vmatpush1.bf16.xpose.msra.mxu0 0
        %992 = vmatprep.subr.bf16.mxu0 0
        %993 = vmatpush1.bf16.xpose.msra.mxu0 0
        %994 = vmatprep.subr.bf16.mxu0 0
        %995 = vmatpush1.bf16.xpose.msra.mxu0 0
        %996 = vmatprep.subr.bf16.mxu0 0
        %997 = vmatpush1.bf16.xpose.msra.mxu0 0
        %998 = vmatprep.subr.bf16.mxu0 0
        %999 = vmatpush1.bf16.xpose.msra.mxu0 0
        %1000 = vmatprep.subr.bf16.mxu0 0
        %1001 = vmatpush1.bf16.xpose.msra.mxu0 0
        %1002 = vmatprep.subr.bf16.mxu0 0
        %1003 = vmatpush1.bf16.xpose.msra.mxu0 0
        %1004 = vmatprep.mubr.bf16.mxu0 0
        %1005 = vmatmul.mubr.bf16.gmra.mrb[0].mxu0 %v967
        %v1006 = vpop.f32.mrb[0].mxu0
        %v1007 = vadd.f32 0.0, %v1006
        %v1008 = vpop.f32.mrb[0].mxu0
        %v1009 = vpop.f32.mrb[0].mxu0
        %v1010 = vpop.f32.mrb[0].mxu0
        %1011 = vdwg.mxu0
        %v1013 = vsel %vm965, %v958, 0
        %v1016 = vsel %vm965, %v962, 0
        %1018 = vmatprep.subr.bf16.mxu0 0
        %1019 = vmatpush1.bf16.xpose.msra.mxu0 %v1016
        %1020 = vmatprep.subr.bf16.mxu0 0
        %1021 = vmatpush1.bf16.xpose.msra.mxu0 0
        %1022 = vmatprep.subr.bf16.mxu0 0
        %1023 = vmatpush1.bf16.xpose.msra.mxu0 0
        %1024 = vmatprep.subr.bf16.mxu0 0
        %1025 = vmatpush1.bf16.xpose.msra.mxu0 0
        %1026 = vmatprep.subr.bf16.mxu0 0
        %1027 = vmatpush1.bf16.xpose.msra.mxu0 0
        %1028 = vmatprep.subr.bf16.mxu0 0
        %1029 = vmatpush1.bf16.xpose.msra.mxu0 0
        %1030 = vmatprep.subr.bf16.mxu0 0
        %1031 = vmatpush1.bf16.xpose.msra.mxu0 0
        %1032 = vmatprep.subr.bf16.mxu0 0
        %1033 = vmatpush1.bf16.xpose.msra.mxu0 0
        %1034 = vmatprep.subr.bf16.mxu0 0
        %1035 = vmatpush1.bf16.xpose.msra.mxu0 0
        %1036 = vmatprep.subr.bf16.mxu0 0
        %1037 = vmatpush1.bf16.xpose.msra.mxu0 0
        %1038 = vmatprep.subr.bf16.mxu0 0
        %1039 = vmatpush1.bf16.xpose.msra.mxu0 0
        %1040 = vmatprep.subr.bf16.mxu0 0
        %1041 = vmatpush1.bf16.xpose.msra.mxu0 0
        %1042 = vmatprep.subr.bf16.mxu0 0
        %1043 = vmatpush1.bf16.xpose.msra.mxu0 0
        %1044 = vmatprep.subr.bf16.mxu0 0
        %1045 = vmatpush1.bf16.xpose.msra.mxu0 0
        %1046 = vmatprep.subr.bf16.mxu0 0
        %1047 = vmatpush1.bf16.xpose.msra.mxu0 0
        %1048 = vmatprep.subr.bf16.mxu0 0
        %1049 = vmatpush1.bf16.xpose.msra.mxu0 0
        %1050 = vmatprep.mubr.bf16.mxu0 0
        %1051 = vmatmul.mubr.bf16.gmra.mrb[0].mxu0 %v1013
        %v1052 = vpop.f32.mrb[0].mxu0
        %v1053 = vadd.f32 0.0, %v1052
        %v1054 = vpop.f32.mrb[0].mxu0
        %v1055 = vpop.f32.mrb[0].mxu0
        %v1056 = vpop.f32.mrb[0].mxu0
        %1057 = vdwg.mxu0
        %v1059 = vsel %vm965, %v959, 0
        %v1062 = vsel %vm965, %v963, 0
        %1064 = vmatprep.subr.bf16.mxu0 0
        %1065 = vmatpush1.bf16.xpose.msra.mxu0 %v1062
        %1066 = vmatprep.subr.bf16.mxu0 0
        %1067 = vmatpush1.bf16.xpose.msra.mxu0 0
        %1068 = vmatprep.subr.bf16.mxu0 0
        %1069 = vmatpush1.bf16.xpose.msra.mxu0 0
        %1070 = vmatprep.subr.bf16.mxu0 0
        %1071 = vmatpush1.bf16.xpose.msra.mxu0 0
        %1072 = vmatprep.subr.bf16.mxu0 0
        %1073 = vmatpush1.bf16.xpose.msra.mxu0 0
        %1074 = vmatprep.subr.bf16.mxu0 0
        %1075 = vmatpush1.bf16.xpose.msra.mxu0 0
        %1076 = vmatprep.subr.bf16.mxu0 0
        %1077 = vmatpush1.bf16.xpose.msra.mxu0 0
        %1078 = vmatprep.subr.bf16.mxu0 0
        %1079 = vmatpush1.bf16.xpose.msra.mxu0 0
        %1080 = vmatprep.subr.bf16.mxu0 0
        %1081 = vmatpush1.bf16.xpose.msra.mxu0 0
        %1082 = vmatprep.subr.bf16.mxu0 0
        %1083 = vmatpush1.bf16.xpose.msra.mxu0 0
        %1084 = vmatprep.subr.bf16.mxu0 0
        %1085 = vmatpush1.bf16.xpose.msra.mxu0 0
        %1086 = vmatprep.subr.bf16.mxu0 0
        %1087 = vmatpush1.bf16.xpose.msra.mxu0 0
        %1088 = vmatprep.subr.bf16.mxu0 0
        %1089 = vmatpush1.bf16.xpose.msra.mxu0 0
        %1090 = vmatprep.subr.bf16.mxu0 0
        %1091 = vmatpush1.bf16.xpose.msra.mxu0 0
        %1092 = vmatprep.subr.bf16.mxu0 0
        %1093 = vmatpush1.bf16.xpose.msra.mxu0 0
        %1094 = vmatprep.subr.bf16.mxu0 0
        %1095 = vmatpush1.bf16.xpose.msra.mxu0 0
        %1096 = vmatprep.mubr.bf16.mxu0 0
        %1097 = vmatmul.mubr.bf16.gmra.mrb[0].mxu0 %v1059
        %v1098 = vpop.f32.mrb[0].mxu0
        %v1099 = vadd.f32 0.0, %v1098
        %v1100 = vpop.f32.mrb[0].mxu0
        %v1101 = vpop.f32.mrb[0].mxu0
        %v1102 = vpop.f32.mrb[0].mxu0
        %1103 = vdwg.mxu0
        %v1105 = vsel %vm965, %v960, 0
        %v1108 = vsel %vm965, %v964, 0
        %1110 = vmatprep.subr.bf16.mxu0 0
        %1111 = vmatpush1.bf16.xpose.msra.mxu0 %v1108
        %1112 = vmatprep.subr.bf16.mxu0 0
        %1113 = vmatpush1.bf16.xpose.msra.mxu0 0
        %1114 = vmatprep.subr.bf16.mxu0 0
        %1115 = vmatpush1.bf16.xpose.msra.mxu0 0
        %1116 = vmatprep.subr.bf16.mxu0 0
        %1117 = vmatpush1.bf16.xpose.msra.mxu0 0
        %1118 = vmatprep.subr.bf16.mxu0 0
        %1119 = vmatpush1.bf16.xpose.msra.mxu0 0
        %1120 = vmatprep.subr.bf16.mxu0 0
        %1121 = vmatpush1.bf16.xpose.msra.mxu0 0
        %1122 = vmatprep.subr.bf16.mxu0 0
        %1123 = vmatpush1.bf16.xpose.msra.mxu0 0
        %1124 = vmatprep.subr.bf16.mxu0 0
        %1125 = vmatpush1.bf16.xpose.msra.mxu0 0
        %1126 = vmatprep.subr.bf16.mxu0 0
        %1127 = vmatpush1.bf16.xpose.msra.mxu0 0
        %1128 = vmatprep.subr.bf16.mxu0 0
        %1129 = vmatpush1.bf16.xpose.msra.mxu0 0
        %1130 = vmatprep.subr.bf16.mxu0 0
        %1131 = vmatpush1.bf16.xpose.msra.mxu0 0
        %1132 = vmatprep.subr.bf16.mxu0 0
        %1133 = vmatpush1.bf16.xpose.msra.mxu0 0
        %1134 = vmatprep.subr.bf16.mxu0 0
        %1135 = vmatpush1.bf16.xpose.msra.mxu0 0
        %1136 = vmatprep.subr.bf16.mxu0 0
        %1137 = vmatpush1.bf16.xpose.msra.mxu0 0
        %1138 = vmatprep.subr.bf16.mxu0 0
        %1139 = vmatpush1.bf16.xpose.msra.mxu0 0
        %1140 = vmatprep.subr.bf16.mxu0 0
        %1141 = vmatpush1.bf16.xpose.msra.mxu0 0
        %1142 = vmatprep.mubr.bf16.mxu0 0
        %1143 = vmatmul.mubr.bf16.gmra.mrb[0].mxu0 %v1105
        %v1144 = vpop.f32.mrb[0].mxu0
        %v1145 = vadd.f32 0.0, %v1144
        %v1146 = vpop.f32.mrb[0].mxu0
        %v1147 = vpop.f32.mrb[0].mxu0
        %v1148 = vpop.f32.mrb[0].mxu0
        %1149 = vdwg.mxu0
        %v1150 = vsel %vm956, 1, 0
        %vm1151 = vcmp.eq.s32.totalorder %v1150, 1
        %v1152 = vsel %vm1151, -1e+30, %v1007
        %v1153 = vsel %vm1151, -1e+30, %v1053
        %v1154 = vsel %vm1151, -1e+30, %v1099
        %v1155 = vsel %vm1151, -1e+30, %v1145
        %v1156 = vld [vmem:[#allocation2] sm:$0xff]
        %v1157 = vld [vmem:[#allocation2 + $0x8] sm:$0xff]
        %v1158 = vld [vmem:[#allocation2 + $0x10] sm:$0xff]
        %v1159 = vld [vmem:[#allocation2 + $0x18] sm:$0xff]
        %v1160 = vsel %vm965, %v1152, -inf
        %1161 = vmax.xlane.f32.xlu0 %v1160
        %v1162 = vpop.xlane.xlu0 %1161
        %v1163 = vsel %vm965, %v1153, -inf
        %1164 = vmax.xlane.f32.xlu0 %v1163
        %v1165 = vpop.xlane.xlu0 %1164
        %v1166 = vsel %vm965, %v1154, -inf
        %1167 = vmax.xlane.f32.xlu0 %v1166
        %v1168 = vpop.xlane.xlu0 %1167
        %v1169 = vsel %vm965, %v1155, -inf
        %1170 = vmax.xlane.f32.xlu0 %v1169
        %v1171 = vpop.xlane.xlu0 %1170
        %v1172 = vmax.f32 %v1156, %v1162
        %v1173 = vmax.f32 %v1157, %v1165
        %v1174 = vmax.f32 %v1158, %v1168
        %v1175 = vmax.f32 %v1159, %v1171
        %v1176 = vsub.f32 %v1156, %v1172
        %v1177 = vsub.f32 %v1157, %v1173
        %v1178 = vsub.f32 %v1158, %v1174
        %v1179 = vsub.f32 %v1159, %v1175
        %v1180 = vmul.f32 %v1176, 1.442695
        %v1181 = vpow.pop %v1180
        %v1182 = vmul.f32 %v1177, 1.442695
        %v1183 = vpow.pop %v1182
        %v1184 = vmul.f32 %v1178, 1.442695
        %v1185 = vpow.pop %v1184
        %v1186 = vmul.f32 %v1179, 1.442695
        %v1187 = vpow.pop %v1186
        %1189 = vset.pattern.permute.xlu0 0
        %1190 = vperm.xlu0 %1189, %v1172
        %v1191 = vpop.permute.xlu0 %1190
        %1194 = vset.pattern.permute.xlu0 0
        %1195 = vperm.xlu0 %1194, %v1173
        %v1196 = vpop.permute.xlu0 %1195
        %1199 = vset.pattern.permute.xlu0 0
        %1200 = vperm.xlu0 %1199, %v1174
        %v1201 = vpop.permute.xlu0 %1200
        %1204 = vset.pattern.permute.xlu0 0
        %1205 = vperm.xlu0 %1204, %v1175
        %v1206 = vpop.permute.xlu0 %1205
        %v1208 = vsub.f32 %v1152, %v1191
        %v1209 = vsub.f32 %v1153, %v1196
        %v1210 = vsub.f32 %v1154, %v1201
        %v1211 = vsub.f32 %v1155, %v1206
        %v1212 = vmul.f32 %v1208, 1.442695
        %v1213 = vpow.pop %v1212
        %v1214 = vmul.f32 %v1209, 1.442695
        %v1215 = vpow.pop %v1214
        %v1216 = vmul.f32 %v1210, 1.442695
        %v1217 = vpow.pop %v1216
        %v1218 = vmul.f32 %v1211, 1.442695
        %v1219 = vpow.pop %v1218
        %v1220 = vld [vmem:[#allocation3] sm:$0xff]
        %v1221 = vld [vmem:[#allocation3 + $0x8] sm:$0xff]
        %v1222 = vld [vmem:[#allocation3 + $0x10] sm:$0xff]
        %v1223 = vld [vmem:[#allocation3 + $0x18] sm:$0xff]
        %v1224 = vmul.f32 %v1181, %v1220
        %v1225 = vmul.f32 %v1183, %v1221
        %v1226 = vmul.f32 %v1185, %v1222
        %v1227 = vmul.f32 %v1187, %v1223
        %v1228 = vsel %vm965, %v1213, 0.0
        %1229 = vadd.xlane.f32.xlu0 %v1228
        %v1230 = vpop.xlane.xlu0 %1229
        %v1231 = vsel %vm965, %v1215, 0.0
        %1232 = vadd.xlane.f32.xlu0 %v1231
        %v1233 = vpop.xlane.xlu0 %1232
        %v1234 = vsel %vm965, %v1217, 0.0
        %1235 = vadd.xlane.f32.xlu0 %v1234
        %v1236 = vpop.xlane.xlu0 %1235
        %v1237 = vsel %vm965, %v1219, 0.0
        %1238 = vadd.xlane.f32.xlu0 %v1237
        %v1239 = vpop.xlane.xlu0 %1238
        %v1240 = vadd.f32 %v1224, %v1230
        %v1241 = vadd.f32 %v1225, %v1233
        %v1242 = vadd.f32 %v1226, %v1236
        %v1243 = vadd.f32 %v1227, %v1239
        %vm1244 = vcmask 7168
        %1245 = vst.msk [vmem:[#allocation3] sm:$0xff] %vm1244, %v1240
        %1246 = vst.msk [vmem:[#allocation3 + $0x8] sm:$0xff] %vm1244, %v1241
        %1247 = vst.msk [vmem:[#allocation3 + $0x10] sm:$0xff] %vm1244, %v1242
        %1248 = vst.msk [vmem:[#allocation3 + $0x18] sm:$0xff] %vm1244, %v1243
        %v1249 = vld [vmem:[#allocation4] sm:$0xff]
        %v1250 = vld [vmem:[#allocation4 + $0x8] sm:$0xff]
        %v1251 = vld [vmem:[#allocation4 + $0x10] sm:$0xff]
        %v1252 = vld [vmem:[#allocation4 + $0x18] sm:$0xff]
        %1254 = vset.pattern.permute.xlu0 0
        %1255 = vperm.xlu0 %1254, %v1181
        %v1256 = vpop.permute.xlu0 %1255
        %1259 = vset.pattern.permute.xlu0 0
        %1260 = vperm.xlu0 %1259, %v1183
        %v1261 = vpop.permute.xlu0 %1260
        %1264 = vset.pattern.permute.xlu0 0
        %1265 = vperm.xlu0 %1264, %v1185
        %v1266 = vpop.permute.xlu0 %1265
        %1269 = vset.pattern.permute.xlu0 0
        %1270 = vperm.xlu0 %1269, %v1187
        %v1271 = vpop.permute.xlu0 %1270
        %v1273 = vmul.f32 %v1256, %v1249
        %v1274 = vmul.f32 %v1261, %v1250
        %v1275 = vmul.f32 %v1266, %v1251
        %v1276 = vmul.f32 %v1271, %v1252
        %v1277 = vpack.c.bf16 %v1213, %v1213
        %v1278 = vpack.c.bf16 %v1215, %v1215
        %v1279 = vpack.c.bf16 %v1217, %v1217
        %v1280 = vpack.c.bf16 %v1219, %v1219
        %v1281 = vld [vmem:[%s389] sm:$0xf]
        %v1282 = vld [vmem:[%s389 + $0x4] sm:$0xf]
        %v1283 = vld [vmem:[%s389 + $0x8] sm:$0xf]
        %v1284 = vld [vmem:[%s389 + $0xc] sm:$0xf]
        %v1286 = vsel %vm965, %v1277, 0
        %vm1288 = vcmask 1043456
        %v1290 = vsel %vm1288, %v1281, 0
        %1292 = vmatprep.subr.bf16.mxu0 0
        %1293 = vmatpush1.bf16.msra.mxu0 %v1290
        %1294 = vmatprep.subr.bf16.mxu0 0
        %1295 = vmatpush1.bf16.msra.mxu0 0
        %1296 = vmatprep.subr.bf16.mxu0 0
        %1297 = vmatpush1.bf16.msra.mxu0 0
        %1298 = vmatprep.subr.bf16.mxu0 0
        %1299 = vmatpush1.bf16.msra.mxu0 0
        %1300 = vmatprep.subr.bf16.mxu0 0
        %1301 = vmatpush1.bf16.msra.mxu0 0
        %1302 = vmatprep.subr.bf16.mxu0 0
        %1303 = vmatpush1.bf16.msra.mxu0 0
        %1304 = vmatprep.subr.bf16.mxu0 0
        %1305 = vmatpush1.bf16.msra.mxu0 0
        %1306 = vmatprep.subr.bf16.mxu0 0
        %1307 = vmatpush1.bf16.msra.mxu0 0
        %1308 = vmatprep.subr.bf16.mxu0 0
        %1309 = vmatpush1.bf16.msra.mxu0 0
        %1310 = vmatprep.subr.bf16.mxu0 0
        %1311 = vmatpush1.bf16.msra.mxu0 0
        %1312 = vmatprep.subr.bf16.mxu0 0
        %1313 = vmatpush1.bf16.msra.mxu0 0
        %1314 = vmatprep.subr.bf16.mxu0 0
        %1315 = vmatpush1.bf16.msra.mxu0 0
        %1316 = vmatprep.subr.bf16.mxu0 0
        %1317 = vmatpush1.bf16.msra.mxu0 0
        %1318 = vmatprep.subr.bf16.mxu0 0
        %1319 = vmatpush1.bf16.msra.mxu0 0
        %1320 = vmatprep.subr.bf16.mxu0 0
        %1321 = vmatpush1.bf16.msra.mxu0 0
        %1322 = vmatprep.subr.bf16.mxu0 0
        %1323 = vmatpush1.bf16.msra.mxu0 0
        %1324 = vmatprep.mubr.bf16.mxu0 0
        %1325 = vmatmul.mubr.bf16.gmra.mrb[0].mxu0 %v1286
        %v1326 = vpop.f32.mrb[0].mxu0
        %v1327 = vadd.f32 0.0, %v1326
        %v1328 = vpop.f32.mrb[0].mxu0
        %v1329 = vpop.f32.mrb[0].mxu0
        %v1330 = vpop.f32.mrb[0].mxu0
        %1331 = vdwg.mxu0
        %v1333 = vsel %vm965, %v1278, 0
        %v1336 = vsel %vm1288, %v1282, 0
        %1338 = vmatprep.subr.bf16.mxu0 0
        %1339 = vmatpush1.bf16.msra.mxu0 %v1336
        %1340 = vmatprep.subr.bf16.mxu0 0
        %1341 = vmatpush1.bf16.msra.mxu0 0
        %1342 = vmatprep.subr.bf16.mxu0 0
        %1343 = vmatpush1.bf16.msra.mxu0 0
        %1344 = vmatprep.subr.bf16.mxu0 0
        %1345 = vmatpush1.bf16.msra.mxu0 0
        %1346 = vmatprep.subr.bf16.mxu0 0
        %1347 = vmatpush1.bf16.msra.mxu0 0
        %1348 = vmatprep.subr.bf16.mxu0 0
        %1349 = vmatpush1.bf16.msra.mxu0 0
        %1350 = vmatprep.subr.bf16.mxu0 0
        %1351 = vmatpush1.bf16.msra.mxu0 0
        %1352 = vmatprep.subr.bf16.mxu0 0
        %1353 = vmatpush1.bf16.msra.mxu0 0
        %1354 = vmatprep.subr.bf16.mxu0 0
        %1355 = vmatpush1.bf16.msra.mxu0 0
        %1356 = vmatprep.subr.bf16.mxu0 0
        %1357 = vmatpush1.bf16.msra.mxu0 0
        %1358 = vmatprep.subr.bf16.mxu0 0
        %1359 = vmatpush1.bf16.msra.mxu0 0
        %1360 = vmatprep.subr.bf16.mxu0 0
        %1361 = vmatpush1.bf16.msra.mxu0 0
        %1362 = vmatprep.subr.bf16.mxu0 0
        %1363 = vmatpush1.bf16.msra.mxu0 0
        %1364 = vmatprep.subr.bf16.mxu0 0
        %1365 = vmatpush1.bf16.msra.mxu0 0
        %1366 = vmatprep.subr.bf16.mxu0 0
        %1367 = vmatpush1.bf16.msra.mxu0 0
        %1368 = vmatprep.subr.bf16.mxu0 0
        %1369 = vmatpush1.bf16.msra.mxu0 0
        %1370 = vmatprep.mubr.bf16.mxu0 0
        %1371 = vmatmul.mubr.bf16.gmra.mrb[0].mxu0 %v1333
        %v1372 = vpop.f32.mrb[0].mxu0
        %v1373 = vadd.f32 0.0, %v1372
        %v1374 = vpop.f32.mrb[0].mxu0
        %v1375 = vpop.f32.mrb[0].mxu0
        %v1376 = vpop.f32.mrb[0].mxu0
        %1377 = vdwg.mxu0
        %v1379 = vsel %vm965, %v1279, 0
        %v1382 = vsel %vm1288, %v1283, 0
        %1384 = vmatprep.subr.bf16.mxu0 0
        %1385 = vmatpush1.bf16.msra.mxu0 %v1382
        %1386 = vmatprep.subr.bf16.mxu0 0
        %1387 = vmatpush1.bf16.msra.mxu0 0
        %1388 = vmatprep.subr.bf16.mxu0 0
        %1389 = vmatpush1.bf16.msra.mxu0 0
        %1390 = vmatprep.subr.bf16.mxu0 0
        %1391 = vmatpush1.bf16.msra.mxu0 0
        %1392 = vmatprep.subr.bf16.mxu0 0
        %1393 = vmatpush1.bf16.msra.mxu0 0
        %1394 = vmatprep.subr.bf16.mxu0 0
        %1395 = vmatpush1.bf16.msra.mxu0 0
        %1396 = vmatprep.subr.bf16.mxu0 0
        %1397 = vmatpush1.bf16.msra.mxu0 0
        %1398 = vmatprep.subr.bf16.mxu0 0
        %1399 = vmatpush1.bf16.msra.mxu0 0
        %1400 = vmatprep.subr.bf16.mxu0 0
        %1401 = vmatpush1.bf16.msra.mxu0 0
        %1402 = vmatprep.subr.bf16.mxu0 0
        %1403 = vmatpush1.bf16.msra.mxu0 0
        %1404 = vmatprep.subr.bf16.mxu0 0
        %1405 = vmatpush1.bf16.msra.mxu0 0
        %1406 = vmatprep.subr.bf16.mxu0 0
        %1407 = vmatpush1.bf16.msra.mxu0 0
        %1408 = vmatprep.subr.bf16.mxu0 0
        %1409 = vmatpush1.bf16.msra.mxu0 0
        %1410 = vmatprep.subr.bf16.mxu0 0
        %1411 = vmatpush1.bf16.msra.mxu0 0
        %1412 = vmatprep.subr.bf16.mxu0 0
        %1413 = vmatpush1.bf16.msra.mxu0 0
        %1414 = vmatprep.subr.bf16.mxu0 0
        %1415 = vmatpush1.bf16.msra.mxu0 0
        %1416 = vmatprep.mubr.bf16.mxu0 0
        %1417 = vmatmul.mubr.bf16.gmra.mrb[0].mxu0 %v1379
        %v1418 = vpop.f32.mrb[0].mxu0
        %v1419 = vadd.f32 0.0, %v1418
        %v1420 = vpop.f32.mrb[0].mxu0
        %v1421 = vpop.f32.mrb[0].mxu0
        %v1422 = vpop.f32.mrb[0].mxu0
        %1423 = vdwg.mxu0
        %v1425 = vsel %vm965, %v1280, 0
        %v1428 = vsel %vm1288, %v1284, 0
        %1430 = vmatprep.subr.bf16.mxu0 0
        %1431 = vmatpush1.bf16.msra.mxu0 %v1428
        %1432 = vmatprep.subr.bf16.mxu0 0
        %1433 = vmatpush1.bf16.msra.mxu0 0
        %1434 = vmatprep.subr.bf16.mxu0 0
        %1435 = vmatpush1.bf16.msra.mxu0 0
        %1436 = vmatprep.subr.bf16.mxu0 0
        %1437 = vmatpush1.bf16.msra.mxu0 0
        %1438 = vmatprep.subr.bf16.mxu0 0
        %1439 = vmatpush1.bf16.msra.mxu0 0
        %1440 = vmatprep.subr.bf16.mxu0 0
        %1441 = vmatpush1.bf16.msra.mxu0 0
        %1442 = vmatprep.subr.bf16.mxu0 0
        %1443 = vmatpush1.bf16.msra.mxu0 0
        %1444 = vmatprep.subr.bf16.mxu0 0
        %1445 = vmatpush1.bf16.msra.mxu0 0
        %1446 = vmatprep.subr.bf16.mxu0 0
        %1447 = vmatpush1.bf16.msra.mxu0 0
        %1448 = vmatprep.subr.bf16.mxu0 0
        %1449 = vmatpush1.bf16.msra.mxu0 0
        %1450 = vmatprep.subr.bf16.mxu0 0
        %1451 = vmatpush1.bf16.msra.mxu0 0
        %1452 = vmatprep.subr.bf16.mxu0 0
        %1453 = vmatpush1.bf16.msra.mxu0 0
        %1454 = vmatprep.subr.bf16.mxu0 0
        %1455 = vmatpush1.bf16.msra.mxu0 0
        %1456 = vmatprep.subr.bf16.mxu0 0
        %1457 = vmatpush1.bf16.msra.mxu0 0
        %1458 = vmatprep.subr.bf16.mxu0 0
        %1459 = vmatpush1.bf16.msra.mxu0 0
        %1460 = vmatprep.subr.bf16.mxu0 0
        %1461 = vmatpush1.bf16.msra.mxu0 0
        %1462 = vmatprep.mubr.bf16.mxu0 0
        %1463 = vmatmul.mubr.bf16.gmra.mrb[0].mxu0 %v1425
        %v1464 = vpop.f32.mrb[0].mxu0
        %v1465 = vadd.f32 0.0, %v1464
        %v1466 = vpop.f32.mrb[0].mxu0
        %v1467 = vpop.f32.mrb[0].mxu0
        %v1468 = vpop.f32.mrb[0].mxu0
        %1469 = vdwg.mxu0
        %v1470 = vadd.f32 %v1273, %v1327
        %v1471 = vadd.f32 %v1274, %v1373
        %v1472 = vadd.f32 %v1275, %v1419
        %v1473 = vadd.f32 %v1276, %v1465
        %1474 = vst.msk [vmem:[#allocation4] sm:$0xff] %vm965, %v1470
        %1475 = vst.msk [vmem:[#allocation4 + $0x8] sm:$0xff] %vm965, %v1471
        %1476 = vst.msk [vmem:[#allocation4 + $0x10] sm:$0xff] %vm965, %v1472
        %1477 = vst.msk [vmem:[#allocation4 + $0x18] sm:$0xff] %vm965, %v1473
        %1478 = vst.msk [vmem:[#allocation2] sm:$0xff] %vm1244, %v1172
        %1479 = vst.msk [vmem:[#allocation2 + $0x8] sm:$0xff] %vm1244, %v1173
        %1480 = vst.msk [vmem:[#allocation2 + $0x10] sm:$0xff] %vm1244, %v1174
        %1481 = vst.msk [vmem:[#allocation2 + $0x18] sm:$0xff] %vm1244, %v1175
      $region56: #{global_latent_transformer.7} parent=43 // pred_fallthru
        _
      // Predicated region
      $region57: #{global_latent_transformer.7} parent=43 // pred_check
        %p1482 = pneg %p407
      $region58: #{global_latent_transformer.7} parent=43 // pred_check_branch
        %1484 = sbr.rel (%p1482) target = $region60
      $region59: #{global_latent_transformer.7} parent=43 // pred_region
        %v1485 = vld [vmem:[#allocation4] sm:$0xff]
        %v1486 = vld [vmem:[#allocation4 + $0x8] sm:$0xff]
        %v1487 = vld [vmem:[#allocation4 + $0x10] sm:$0xff]
        %v1488 = vld [vmem:[#allocation4 + $0x18] sm:$0xff]
        %v1489 = vld [vmem:[#allocation3] sm:$0xff]
        %v1490 = vld [vmem:[#allocation3 + $0x8] sm:$0xff]
        %v1491 = vld [vmem:[#allocation3 + $0x10] sm:$0xff]
        %v1492 = vld [vmem:[#allocation3 + $0x18] sm:$0xff]
        %v1493 = vrcp.pop %v1489
        %v1494 = vrcp.pop %v1490
        %v1495 = vrcp.pop %v1491
        %v1496 = vrcp.pop %v1492
        %1498 = vset.pattern.permute.xlu0 0
        %1499 = vperm.xlu0 %1498, %v1493
        %v1500 = vpop.permute.xlu0 %1499
        %1503 = vset.pattern.permute.xlu0 0
        %1504 = vperm.xlu0 %1503, %v1494
        %v1505 = vpop.permute.xlu0 %1504
        %1508 = vset.pattern.permute.xlu0 0
        %1509 = vperm.xlu0 %1508, %v1495
        %v1510 = vpop.permute.xlu0 %1509
        %1513 = vset.pattern.permute.xlu0 0
        %1514 = vperm.xlu0 %1513, %v1496
        %v1515 = vpop.permute.xlu0 %1514
        %v1517 = vmul.f32 %v1485, %v1500
        %v1518 = vmul.f32 %v1486, %v1505
        %v1519 = vmul.f32 %v1487, %v1510
        %v1520 = vmul.f32 %v1488, %v1515
        %v1521 = vld [vmem:[%s5] sm:$0x1]
        %v1522 = vpack.c.bf16 %v1517, %v1517
        %v1523 = vld [vmem:[%s4] sm:$0xf]
        %vm1524 = vcmask 64512
        %v1526 = vsel %vm1524, %v1522, 0
        %vm1528 = vcmask 1043456
        %v1530 = vsel %vm1528, %v1523, 0
        %1532 = vmatprep.subr.bf16.mxu0 0
        %1533 = vmatpush1.bf16.msra.mxu0 %v1530
        %1534 = vmatprep.subr.bf16.mxu0 0
        %1535 = vmatpush1.bf16.msra.mxu0 0
        %1536 = vmatprep.subr.bf16.mxu0 0
        %1537 = vmatpush1.bf16.msra.mxu0 0
        %1538 = vmatprep.subr.bf16.mxu0 0
        %1539 = vmatpush1.bf16.msra.mxu0 0
        %1540 = vmatprep.subr.bf16.mxu0 0
        %1541 = vmatpush1.bf16.msra.mxu0 0
        %1542 = vmatprep.subr.bf16.mxu0 0
        %1543 = vmatpush1.bf16.msra.mxu0 0
        %1544 = vmatprep.subr.bf16.mxu0 0
        %1545 = vmatpush1.bf16.msra.mxu0 0
        %1546 = vmatprep.subr.bf16.mxu0 0
        %1547 = vmatpush1.bf16.msra.mxu0 0
        %1548 = vmatprep.subr.bf16.mxu0 0
        %1549 = vmatpush1.bf16.msra.mxu0 0
        %1550 = vmatprep.subr.bf16.mxu0 0
        %1551 = vmatpush1.bf16.msra.mxu0 0
        %1552 = vmatprep.subr.bf16.mxu0 0
        %1553 = vmatpush1.bf16.msra.mxu0 0
        %1554 = vmatprep.subr.bf16.mxu0 0
        %1555 = vmatpush1.bf16.msra.mxu0 0
        %1556 = vmatprep.subr.bf16.mxu0 0
        %1557 = vmatpush1.bf16.msra.mxu0 0
        %1558 = vmatprep.subr.bf16.mxu0 0
        %1559 = vmatpush1.bf16.msra.mxu0 0
        %1560 = vmatprep.subr.bf16.mxu0 0
        %1561 = vmatpush1.bf16.msra.mxu0 0
        %1562 = vmatprep.subr.bf16.mxu0 0
        %1563 = vmatpush1.bf16.msra.mxu0 0
        %1564 = vmatprep.mubr.bf16.mxu0 0
        %1565 = vmatmul.mubr.bf16.gmra.mrb[0].mxu0 %v1526
        %v1566 = vpop.f32.mrb[0].mxu0
        %v1567 = vadd.f32 0.0, %v1566
        %v1568 = vpop.f32.mrb[0].mxu0
        %v1569 = vpop.f32.mrb[0].mxu0
        %v1570 = vpop.f32.mrb[0].mxu0
        %1571 = vdwg.mxu0
        %v1573 = vlaneseq
        %v1574 = vshrl.u32 %v1573, 7
        %v1575 = vsub.s32 0, %v1574
        %v1576 = vrot.slane %v1521, %v1575
        %v1578 = vadd.f32 %v1576, %v1567
        %v1579 = vpack.c.bf16 %v1518, %v1518
        %s1580 = scalar_lea.vmem %s4, 4
        %v1581 = vld [vmem:[%s1580] sm:$0xf]
        %v1583 = vsel %vm1524, %v1579, 0
        %v1586 = vsel %vm1528, %v1581, 0
        %1588 = vmatprep.subr.bf16.mxu0 0
        %1589 = vmatpush1.bf16.msra.mxu0 %v1586
        %1590 = vmatprep.subr.bf16.mxu0 0
        %1591 = vmatpush1.bf16.msra.mxu0 0
        %1592 = vmatprep.subr.bf16.mxu0 0
        %1593 = vmatpush1.bf16.msra.mxu0 0
        %1594 = vmatprep.subr.bf16.mxu0 0
        %1595 = vmatpush1.bf16.msra.mxu0 0
        %1596 = vmatprep.subr.bf16.mxu0 0
        %1597 = vmatpush1.bf16.msra.mxu0 0
        %1598 = vmatprep.subr.bf16.mxu0 0
        %1599 = vmatpush1.bf16.msra.mxu0 0
        %1600 = vmatprep.subr.bf16.mxu0 0
        %1601 = vmatpush1.bf16.msra.mxu0 0
        %1602 = vmatprep.subr.bf16.mxu0 0
        %1603 = vmatpush1.bf16.msra.mxu0 0
        %1604 = vmatprep.subr.bf16.mxu0 0
        %1605 = vmatpush1.bf16.msra.mxu0 0
        %1606 = vmatprep.subr.bf16.mxu0 0
        %1607 = vmatpush1.bf16.msra.mxu0 0
        %1608 = vmatprep.subr.bf16.mxu0 0
        %1609 = vmatpush1.bf16.msra.mxu0 0
        %1610 = vmatprep.subr.bf16.mxu0 0
        %1611 = vmatpush1.bf16.msra.mxu0 0
        %1612 = vmatprep.subr.bf16.mxu0 0
        %1613 = vmatpush1.bf16.msra.mxu0 0
        %1614 = vmatprep.subr.bf16.mxu0 0
        %1615 = vmatpush1.bf16.msra.mxu0 0
        %1616 = vmatprep.subr.bf16.mxu0 0
        %1617 = vmatpush1.bf16.msra.mxu0 0
        %1618 = vmatprep.subr.bf16.mxu0 0
        %1619 = vmatpush1.bf16.msra.mxu0 0
        %1620 = vmatprep.mubr.bf16.mxu0 0
        %1621 = vmatmul.mubr.bf16.gmra.mrb[0].mxu0 %v1583
        %v1622 = vpop.f32.mrb[0].mxu0
        %v1623 = vadd.f32 0.0, %v1622
        %v1624 = vpop.f32.mrb[0].mxu0
        %v1625 = vpop.f32.mrb[0].mxu0
        %v1626 = vpop.f32.mrb[0].mxu0
        %1627 = vdwg.mxu0
        %v1628 = vadd.f32 %v1578, %v1623
        %v1629 = vpack.c.bf16 %v1519, %v1519
        %s1630 = scalar_lea.vmem %s4, 8
        %v1631 = vld [vmem:[%s1630] sm:$0xf]
        %v1633 = vsel %vm1524, %v1629, 0
        %v1636 = vsel %vm1528, %v1631, 0
        %1638 = vmatprep.subr.bf16.mxu0 0
        %1639 = vmatpush1.bf16.msra.mxu0 %v1636
        %1640 = vmatprep.subr.bf16.mxu0 0
        %1641 = vmatpush1.bf16.msra.mxu0 0
        %1642 = vmatprep.subr.bf16.mxu0 0
        %1643 = vmatpush1.bf16.msra.mxu0 0
        %1644 = vmatprep.subr.bf16.mxu0 0
        %1645 = vmatpush1.bf16.msra.mxu0 0
        %1646 = vmatprep.subr.bf16.mxu0 0
        %1647 = vmatpush1.bf16.msra.mxu0 0
        %1648 = vmatprep.subr.bf16.mxu0 0
        %1649 = vmatpush1.bf16.msra.mxu0 0
        %1650 = vmatprep.subr.bf16.mxu0 0
        %1651 = vmatpush1.bf16.msra.mxu0 0
        %1652 = vmatprep.subr.bf16.mxu0 0
        %1653 = vmatpush1.bf16.msra.mxu0 0
        %1654 = vmatprep.subr.bf16.mxu0 0
        %1655 = vmatpush1.bf16.msra.mxu0 0
        %1656 = vmatprep.subr.bf16.mxu0 0
        %1657 = vmatpush1.bf16.msra.mxu0 0
        %1658 = vmatprep.subr.bf16.mxu0 0
        %1659 = vmatpush1.bf16.msra.mxu0 0
        %1660 = vmatprep.subr.bf16.mxu0 0
        %1661 = vmatpush1.bf16.msra.mxu0 0
        %1662 = vmatprep.subr.bf16.mxu0 0
        %1663 = vmatpush1.bf16.msra.mxu0 0
        %1664 = vmatprep.subr.bf16.mxu0 0
        %1665 = vmatpush1.bf16.msra.mxu0 0
        %1666 = vmatprep.subr.bf16.mxu0 0
        %1667 = vmatpush1.bf16.msra.mxu0 0
        %1668 = vmatprep.subr.bf16.mxu0 0
        %1669 = vmatpush1.bf16.msra.mxu0 0
        %1670 = vmatprep.mubr.bf16.mxu0 0
        %1671 = vmatmul.mubr.bf16.gmra.mrb[0].mxu0 %v1633
        %v1672 = vpop.f32.mrb[0].mxu0
        %v1673 = vadd.f32 0.0, %v1672
        %v1674 = vpop.f32.mrb[0].mxu0
        %v1675 = vpop.f32.mrb[0].mxu0
        %v1676 = vpop.f32.mrb[0].mxu0
        %1677 = vdwg.mxu0
        %v1678 = vadd.f32 %v1628, %v1673
        %v1679 = vpack.c.bf16 %v1520, %v1520
        %s1680 = scalar_lea.vmem %s4, 12
        %v1681 = vld [vmem:[%s1680] sm:$0xf]
        %v1683 = vsel %vm1524, %v1679, 0
        %v1686 = vsel %vm1528, %v1681, 0
        %1688 = vmatprep.subr.bf16.mxu0 0
        %1689 = vmatpush1.bf16.msra.mxu0 %v1686
        %1690 = vmatprep.subr.bf16.mxu0 0
        %1691 = vmatpush1.bf16.msra.mxu0 0
        %1692 = vmatprep.subr.bf16.mxu0 0
        %1693 = vmatpush1.bf16.msra.mxu0 0
        %1694 = vmatprep.subr.bf16.mxu0 0
        %1695 = vmatpush1.bf16.msra.mxu0 0
        %1696 = vmatprep.subr.bf16.mxu0 0
        %1697 = vmatpush1.bf16.msra.mxu0 0
        %1698 = vmatprep.subr.bf16.mxu0 0
        %1699 = vmatpush1.bf16.msra.mxu0 0
        %1700 = vmatprep.subr.bf16.mxu0 0
        %1701 = vmatpush1.bf16.msra.mxu0 0
        %1702 = vmatprep.subr.bf16.mxu0 0
        %1703 = vmatpush1.bf16.msra.mxu0 0
        %1704 = vmatprep.subr.bf16.mxu0 0
        %1705 = vmatpush1.bf16.msra.mxu0 0
        %1706 = vmatprep.subr.bf16.mxu0 0
        %1707 = vmatpush1.bf16.msra.mxu0 0
        %1708 = vmatprep.subr.bf16.mxu0 0
        %1709 = vmatpush1.bf16.msra.mxu0 0
        %1710 = vmatprep.subr.bf16.mxu0 0
        %1711 = vmatpush1.bf16.msra.mxu0 0
        %1712 = vmatprep.subr.bf16.mxu0 0
        %1713 = vmatpush1.bf16.msra.mxu0 0
        %1714 = vmatprep.subr.bf16.mxu0 0
        %1715 = vmatpush1.bf16.msra.mxu0 0
        %1716 = vmatprep.subr.bf16.mxu0 0
        %1717 = vmatpush1.bf16.msra.mxu0 0
        %1718 = vmatprep.subr.bf16.mxu0 0
        %1719 = vmatpush1.bf16.msra.mxu0 0
        %1720 = vmatprep.mubr.bf16.mxu0 0
        %1721 = vmatmul.mubr.bf16.gmra.mrb[0].mxu0 %v1683
        %v1722 = vpop.f32.mrb[0].mxu0
        %v1723 = vadd.f32 0.0, %v1722
        %v1724 = vpop.f32.mrb[0].mxu0
        %v1725 = vpop.f32.mrb[0].mxu0
        %v1726 = vpop.f32.mrb[0].mxu0
        %1727 = vdwg.mxu0
        %v1728 = vadd.f32 %v1678, %v1723
        %v1729 = vld [vmem:[%s398] sm:$0xff]
        %v1730 = vadd.f32 %v1729, %v1728
        %vm1731 = vcmask 261120
        %1732 = vst.msk [vmem:[%s405] sm:$0xff] %vm1731, %v1730
      $region60: #{global_latent_transformer.7} parent=43 // pred_fallthru
        _
      %p1733 = scmp.lt.s32.totalorder %s22, 1
      %s1734 = scalar_select %p1733, %s22, 1
      %p1735 = scmp.lt.s32.totalorder %s23, 0
      %s1736 = scalar_select %p1735, %s23, 0
      %s1737 = sadd.s32 %s1736, %s1734
      %s1738 = smul.addr %s1737, 8
      %s1739 = scalar_lea.vmem %s6, %s1738
      // Predicated region
      $region61: #{global_latent_transformer.7} parent=43 // pred_check
        %p1740 = pneg %p218
      $region62: #{global_latent_transformer.7} parent=43 // pred_check_branch
        %1742 = sbr.rel (%p1740) target = $region64
      $region63: #{global_latent_transformer.7} parent=43 // pred_region
        _
      $region64: #{global_latent_transformer.7} parent=43 // pred_fallthru
        _
    $region44: #{global_latent_transformer.7} parent=5 // pred_fallthru
      _
    %p1743 = scmp.le.s32.totalorder 2, %s12
    // Predicated region
    $region65: #{global_latent_transformer.7} parent=5 // pred_check
      %p1744 = pneg %p1743
    $region66: #{global_latent_transformer.7} parent=5 // pred_check_branch
      %1746 = sbr.rel (%p1744) target = $region68
    $region67: #{global_latent_transformer.7} parent=5 // pred_region
      %s1747 = ssub.s32 %s12, 2
      // Predicated region
      $region69: #{global_latent_transformer.7} parent=67 // pred_check
        %p1748 = pneg %p224
      $region70: #{global_latent_transformer.7} parent=67 // pred_check_branch
        %1750 = sbr.rel (%p1748) target = $region72
      $region71: #{global_latent_transformer.7} parent=67 // pred_region
        %p1751 = scmp.lt.s32.totalorder %s25, 1
        %s1752 = scalar_select %p1751, %s25, 1
        %p1753 = scmp.lt.s32.totalorder %s26, 0
        %s1754 = scalar_select %p1753, %s26, 0
        %s1755 = sadd.s32 %s1754, %s1752
        %s1756 = smul.addr %s1755, 8
        %s1757 = scalar_lea.vmem %s6, %s1756
      $region72: #{global_latent_transformer.7} parent=67 // pred_fallthru
        _
    $region68: #{global_latent_transformer.7} parent=5 // pred_fallthru
      _
  $region6: #{global_latent_transformer.7} parent=0 // loop_footer
    %s16 = sadd.s32 1, %s12
  $region7: #{global_latent_transformer.7} parent=0 // loop_footer_branch
    %11 = sbr.rel target = $region3
  $region8: #{global_latent_transformer.7} parent=0 // loop_exit
    _

</llo_original>
